<compile_context>
chip_gen: v5e
topology: v5e:2x2
jax: 0.10.0
libtpu: 0.0.40
codegen_flags: <defaults>
</compile_context>

<pallas_src>
import functools

import jax
import jax.numpy as jnp
import numpy as np
from jax.experimental import pallas as pl
from jax.experimental.pallas import tpu as pltpu


# ----------------------------------------------------------------------------
# Fused Resblock kernel (one grid step == Bt batch elements).
# ----------------------------------------------------------------------------
def _resblock_kernel(x_ref, mask_ref, w1_ref, s1_ref, b1_ref,
                     w2_ref, s2_ref, b2_ref, *rest, has_res_conv):
    if has_res_conv:
        wr_ref, sr_ref, br_ref, o_ref = rest
    else:
        (o_ref,) = rest

    bt, hgt, wid, cin = x_ref.shape
    hw = hgt * wid
    m_rows = bt * hw
    cout = w1_ref.shape[-1]

    def conv3x3(v32, v_bf, w_ref):
        # 3x3 SAME conv as 9 per-tap bf16 matmuls (K = C each) with a single
        # f32 accumulator.  Shifted taps come from pltpu.roll on the XLU
        # (rolls the flat (M, C) slab along rows by dh*W + dw) and are zeroed
        # at board edges / batch boundaries by precomputed 0/1 row masks on
        # the VPU -- the MXU only ever sees bf16 conv work.
        acc = jnp.dot(v_bf, w_ref[4], preferred_element_type=jnp.float32)
        for t in range(9):
            if t == 4:                                  # centre tap: no shift
                continue
            dh, dw = t // 3 - 1, t % 3 - 1
            off = dh * wid + dw                         # out[m] needs v[m+off]
            rolled = pltpu.roll(v32, (-off) % m_rows, 0)
            k = t if t < 4 else t - 1                   # mask row for this tap
            tap = (rolled * mask_ref[k]).astype(jnp.bfloat16)
            acc = acc + jnp.dot(tap, w_ref[t],
                                preferred_element_type=jnp.float32)
        return acc

    x32 = x_ref[...].reshape(m_rows, cin)      # f32 copy: rolls + identity skip
    x_bf = x32.astype(jnp.bfloat16)            # single bf16 cast, reused twice

    # conv1 -> folded BN1 -> ReLU   (intermediate never leaves VMEM/vregs)
    y = conv3x3(x32, x_bf, w1_ref)
    y = jnp.maximum(y * s1_ref[...] + b1_ref[...], 0.0)

    # conv2 -> folded BN2
    z = conv3x3(y, y.astype(jnp.bfloat16), w2_ref)
    z = z * s2_ref[...] + b2_ref[...]

    # residual branch
    if has_res_conv:                           # 1x1 conv + folded BN
        r = jnp.dot(x_bf, wr_ref[...], preferred_element_type=jnp.float32)
        r = r * sr_ref[...] + br_ref[...]
    else:                                      # identity skip (Cin == Cout)
        r = x32

    o_ref[...] = jnp.maximum(z + r, 0.0).reshape(bt, hw, cout).astype(o_ref.dtype)


# ----------------------------------------------------------------------------
# Host-side helpers: tap masks, BN folding, parameter packing, Bt policy.
# ----------------------------------------------------------------------------
def _tap_mask_array(bt, hgt, wid):
    """(8, Bt*H*W, 1) f32 0/1 validity masks for the 8 non-centre 3x3 taps.

    Row m of the flat (Bt*H*W, C) activation is pixel (h, w) = ((m % HW)//W,
    m % W); tap (dh, dw) is valid iff (h+dh, w+dw) is on the board.  Invalid
    rows (SAME zero padding -- and exactly the rows where pltpu.roll would
    wrap across batch elements) are zeroed.
    """
    hw = hgt * wid
    m = np.arange(bt * hw)
    h = (m % hw) // wid
    w = m % wid
    rows = []
    for t in range(9):
        if t == 4:
            continue
        dh, dw = t // 3 - 1, t % 3 - 1
        valid = ((h + dh >= 0) & (h + dh < hgt) &
                 (w + dw >= 0) & (w + dw < wid))
        rows.append(valid.astype(np.float32))
    return jnp.asarray(np.stack(rows)[:, :, None])


def _pick_block_batch(b, hw, target_m=256):
    """Fold batch so M = Bt*H*W approaches the MXU-friendly target, but keep
    >= 2 grid steps (when B allows) so v7x's two TensorCores both get work."""
    bt = max(1, min(b, -(-target_m // hw)))
    if b >= 2:
        bt = min(bt, max(1, b // 2))
    while b % bt:
        bt -= 1
    return bt


def _fold_bn(key, c, eps=1e-5):
    k1, k2, k3, k4 = jax.random.split(key, 4)
    gamma = 1.0 + 0.1 * jax.random.normal(k1, (c,), jnp.float32)
    beta = 0.1 * jax.random.normal(k2, (c,), jnp.float32)
    mean = 0.1 * jax.random.normal(k3, (c,), jnp.float32)
    var = 1.0 + 0.1 * jax.random.uniform(k4, (c,), jnp.float32)
    scale = gamma / jnp.sqrt(var + eps)
    bias = beta - mean * scale
    return scale[None, :], bias[None, :]


def init_resblock_params(key, in_dim, dim):
    keys = jax.random.split(key, 6)
    std1 = (9 * in_dim) ** -0.5
    std2 = (9 * dim) ** -0.5
    p = {
        "w1": std1 * jax.random.normal(keys[0], (3, 3, in_dim, dim), jnp.float32),
        "w2": std2 * jax.random.normal(keys[1], (3, 3, dim, dim), jnp.float32),
    }
    p["s1"], p["b1"] = _fold_bn(keys[2], dim)
    p["s2"], p["b2"] = _fold_bn(keys[3], dim)
    if dim != in_dim:                          # projection skip: 1x1 conv + BN
        p["wr"] = in_dim ** -0.5 * jax.random.normal(
            keys[4], (in_dim, dim), jnp.float32)
        p["sr"], p["br"] = _fold_bn(keys[5], dim)
    return p


def pack_resblock_params(params):
    """Offline packing: (9, Cin, Cout) bf16 per-tap weights, folded BN affines."""
    in_dim, dim = params["w1"].shape[2], params["w1"].shape[3]
    packed = {
        "w1": params["w1"].reshape(9, in_dim, dim).astype(jnp.bfloat16),
        "s1": params["s1"], "b1": params["b1"],
        "w2": params["w2"].reshape(9, dim, dim).astype(jnp.bfloat16),
        "s2": params["s2"], "b2": params["b2"],
    }
    if "wr" in params:
        packed["wr"] = params["wr"].astype(jnp.bfloat16)
        packed["sr"] = params["sr"]
        packed["br"] = params["br"]
    return packed


# ----------------------------------------------------------------------------
# Pallas wrapper.
# ----------------------------------------------------------------------------
def resblock_forward(packed, x, *, out_dtype=jnp.float32, block_batch=None):
    b, hgt, wid, cin = x.shape
    hw = hgt * wid
    dim = packed["w1"].shape[-1]
    has_res = "wr" in packed
    if not has_res:
        assert cin == dim, "identity residual requires in_dim == dim"

    bt = block_batch if block_batch is not None else _pick_block_batch(b, hw)
    assert b % bt == 0, "block_batch must divide the batch"
    grid = (b // bt,)

    masks = _tap_mask_array(bt, hgt, wid)      # compile-time constant, tiny

    def const_spec(shape):
        zeros = (0,) * len(shape)
        return pl.BlockSpec(shape, lambda i, _z=zeros: _z)

    args = [x, masks, packed["w1"], packed["s1"], packed["b1"],
            packed["w2"], packed["s2"], packed["b2"]]
    in_specs = [
        pl.BlockSpec((bt, hgt, wid, cin), lambda i: (i, 0, 0, 0)),
        const_spec((8, bt * hw, 1)),
        const_spec((9, cin, dim)), const_spec((1, dim)), const_spec((1, dim)),
        const_spec((9, dim, dim)), const_spec((1, dim)), const_spec((1, dim)),
    ]
    if has_res:
        args += [packed["wr"], packed["sr"], packed["br"]]
        in_specs += [const_spec((cin, dim)), const_spec((1, dim)),
                     const_spec((1, dim))]

    out = pl.pallas_call(
        functools.partial(_resblock_kernel, has_res_conv=has_res),
        grid=grid,
        in_specs=in_specs,
        out_specs=pl.BlockSpec((bt, hw, dim), lambda i: (i, 0, 0)),
        out_shape=jax.ShapeDtypeStruct((b, hw, dim), out_dtype),
        compiler_params=pltpu.CompilerParams(
            dimension_semantics=("parallel",)),
    )(*args)
    return out.reshape(b, hgt, wid, dim)


# ----------------------------------------------------------------------------
# Pure-JAX reference (f32, highest precision) for correctness checking.
# ----------------------------------------------------------------------------
def resblock_reference(params, x):
    def conv(v, w):
        return jax.lax.conv_general_dilated(
            v, w, window_strides=(1, 1), padding="SAME",
            dimension_numbers=("NHWC", "HWIO", "NHWC"),
            precision=jax.lax.Precision.HIGHEST)
    y = jnp.maximum(conv(x, params["w1"]) * params["s1"] + params["b1"], 0.0)
    z = conv(y, params["w2"]) * params["s2"] + params["b2"]
    if "wr" in params:
        r = jnp.einsum("bhwc,cd->bhwd", x, params["wr"],
                       precision=jax.lax.Precision.HIGHEST)
        r = r * params["sr"] + params["br"]
    else:
        r = x
    return jnp.maximum(z + r, 0.0)


if __name__ == "__main__":
    B, H, W = 4, 8, 8                          # Bt=2 -> M=128 rows, grid=(2,)
    key = jax.random.PRNGKey(0)
    k1, k2, k3, k4 = jax.random.split(key, 4)

    fwd = jax.jit(resblock_forward, static_argnames=("out_dtype", "block_batch"))

    # Case 1: identity residual (in_dim == dim == 128), f32 output.
    params1 = init_resblock_params(k1, in_dim=128, dim=128)
    x1 = jax.random.normal(k2, (B, H, W, 128), jnp.float32)
    out1 = fwd(pack_resblock_params(params1), x1)
    jax.block_until_ready(out1)
    ref1 = resblock_reference(params1, x1)
    assert out1.shape == (B, H, W, 128)
    assert out1.dtype == jnp.float32
    assert jnp.allclose(out1, ref1, atol=5e-2, rtol=5e-2)

    # Case 2: projection residual (128 -> 256, 1x1 res_conv + BN), bf16 output
    # (halves the HBM writeback stream for bf16-consuming downstream blocks).
    params2 = init_resblock_params(k3, in_dim=128, dim=256)
    x2 = jax.random.normal(k4, (B, H, W, 128), jnp.float32)
    out2 = fwd(pack_resblock_params(params2), x2, out_dtype=jnp.bfloat16)
    jax.block_until_ready(out2)
    ref2 = resblock_reference(params2, x2)
    assert out2.shape == (B, H, W, 256)
    assert out2.dtype == jnp.bfloat16
    assert jnp.allclose(out2.astype(jnp.float32), ref2, atol=6e-2, rtol=6e-2)

    print("KERNEL_OK")
</pallas_src>

<mosaic_0001>
module attributes {stable_mosaic.version = 11 : i64} {
  func.func @_resblock_kernel(%arg0: i32, %arg1: memref<2x8x8x128xf32, #tpu.memory_space<vmem>>, %arg2: memref<8x128x1xf32, #tpu.memory_space<vmem>>, %arg3: memref<9x128x128xbf16, #tpu.memory_space<vmem>>, %arg4: memref<1x128xf32, #tpu.memory_space<vmem>>, %arg5: memref<1x128xf32, #tpu.memory_space<vmem>>, %arg6: memref<9x128x128xbf16, #tpu.memory_space<vmem>>, %arg7: memref<1x128xf32, #tpu.memory_space<vmem>>, %arg8: memref<1x128xf32, #tpu.memory_space<vmem>>, %arg9: memref<2x64x128xf32, #tpu.memory_space<vmem>>) attributes {dimension_semantics = [#tpu.dimension_semantics<parallel>], iteration_bounds = array<i64: 2>, scalar_prefetch = 0 : i64, scratch_operands = 0 : i64, tpu.core_type = #tpu.core_type<tc>, window_params = [{transform_indices = @transform_0, window_bounds = array<i64: 2, 8, 8, 128>}, {pipeline_mode = #tpu.pipeline_mode<synchronous>, transform_indices = @transform_1, window_bounds = array<i64: 8, 128, 1>}, {pipeline_mode = #tpu.pipeline_mode<synchronous>, transform_indices = @transform_2, window_bounds = array<i64: 9, 128, 128>}, {pipeline_mode = #tpu.pipeline_mode<synchronous>, transform_indices = @transform_3, window_bounds = array<i64: 1, 128>}, {pipeline_mode = #tpu.pipeline_mode<synchronous>, transform_indices = @transform_4, window_bounds = array<i64: 1, 128>}, {pipeline_mode = #tpu.pipeline_mode<synchronous>, transform_indices = @transform_5, window_bounds = array<i64: 9, 128, 128>}, {pipeline_mode = #tpu.pipeline_mode<synchronous>, transform_indices = @transform_6, window_bounds = array<i64: 1, 128>}, {pipeline_mode = #tpu.pipeline_mode<synchronous>, transform_indices = @transform_7, window_bounds = array<i64: 1, 128>}, {transform_indices = @transform_8, window_bounds = array<i64: 2, 64, 128>}]} {
    %c0 = arith.constant 0 : index
    %c0_0 = arith.constant 0 : index
    %c0_1 = arith.constant 0 : index
    %c0_2 = arith.constant 0 : index
    %0 = vector.load %arg1[%c0, %c0_0, %c0_1, %c0_2] : memref<2x8x8x128xf32, #tpu.memory_space<vmem>>, vector<2x8x8x128xf32>
    %1 = vector.shape_cast %0 : vector<2x8x8x128xf32> to vector<128x128xf32>
    %2 = arith.truncf %1 : vector<128x128xf32> to vector<128x128xbf16>
    %c4 = arith.constant 4 : index
    %c0_3 = arith.constant 0 : index
    %c0_4 = arith.constant 0 : index
    %3 = vector.load %arg3[%c4, %c0_3, %c0_4] : memref<9x128x128xbf16, #tpu.memory_space<vmem>>, vector<1x128x128xbf16>
    %4 = vector.shape_cast %3 : vector<1x128x128xbf16> to vector<128x128xbf16>
    %cst = arith.constant dense<0.000000e+00> : vector<128x128xf32>
    %5 = tpu.matmul %2, %4, %cst {dimension_numbers = #tpu.dot_dimension_numbers<[1], [0], [0], [1], [0, 0, 1, 1], [], []>} : vector<128x128xbf16>, vector<128x128xbf16>, vector<128x128xf32> -> vector<128x128xf32>
    %c9_i32 = arith.constant 9 : i32
    %6 = tpu.dynamic_rotate %1 by %c9_i32 dim 0 : vector<128x128xf32>, i32 -> vector<128x128xf32>
    %c0_5 = arith.constant 0 : index
    %c0_6 = arith.constant 0 : index
    %c0_7 = arith.constant 0 : index
    %7 = vector.load %arg2[%c0_5, %c0_6, %c0_7] : memref<8x128x1xf32, #tpu.memory_space<vmem>>, vector<1x128x1xf32>
    %8 = vector.shape_cast %7 : vector<1x128x1xf32> to vector<128x1xf32>
    %9 = vector.broadcast %8 : vector<128x1xf32> to vector<128x128xf32>
    %10 = arith.mulf %6, %9 : vector<128x128xf32>
    %11 = arith.truncf %10 : vector<128x128xf32> to vector<128x128xbf16>
    %c0_8 = arith.constant 0 : index
    %c0_9 = arith.constant 0 : index
    %c0_10 = arith.constant 0 : index
    %12 = vector.load %arg3[%c0_8, %c0_9, %c0_10] : memref<9x128x128xbf16, #tpu.memory_space<vmem>>, vector<1x128x128xbf16>
    %13 = vector.shape_cast %12 : vector<1x128x128xbf16> to vector<128x128xbf16>
    %cst_11 = arith.constant dense<0.000000e+00> : vector<128x128xf32>
    %14 = tpu.matmul %11, %13, %cst_11 {dimension_numbers = #tpu.dot_dimension_numbers<[1], [0], [0], [1], [0, 0, 1, 1], [], []>} : vector<128x128xbf16>, vector<128x128xbf16>, vector<128x128xf32> -> vector<128x128xf32>
    %15 = arith.addf %5, %14 : vector<128x128xf32>
    %c8_i32 = arith.constant 8 : i32
    %16 = tpu.dynamic_rotate %1 by %c8_i32 dim 0 : vector<128x128xf32>, i32 -> vector<128x128xf32>
    %c1 = arith.constant 1 : index
    %c0_12 = arith.constant 0 : index
    %c0_13 = arith.constant 0 : index
    %17 = vector.load %arg2[%c1, %c0_12, %c0_13] : memref<8x128x1xf32, #tpu.memory_space<vmem>>, vector<1x128x1xf32>
    %18 = vector.shape_cast %17 : vector<1x128x1xf32> to vector<128x1xf32>
    %19 = vector.broadcast %18 : vector<128x1xf32> to vector<128x128xf32>
    %20 = arith.mulf %16, %19 : vector<128x128xf32>
    %21 = arith.truncf %20 : vector<128x128xf32> to vector<128x128xbf16>
    %c1_14 = arith.constant 1 : index
    %c0_15 = arith.constant 0 : index
    %c0_16 = arith.constant 0 : index
    %22 = vector.load %arg3[%c1_14, %c0_15, %c0_16] : memref<9x128x128xbf16, #tpu.memory_space<vmem>>, vector<1x128x128xbf16>
    %23 = vector.shape_cast %22 : vector<1x128x128xbf16> to vector<128x128xbf16>
    %cst_17 = arith.constant dense<0.000000e+00> : vector<128x128xf32>
    %24 = tpu.matmul %21, %23, %cst_17 {dimension_numbers = #tpu.dot_dimension_numbers<[1], [0], [0], [1], [0, 0, 1, 1], [], []>} : vector<128x128xbf16>, vector<128x128xbf16>, vector<128x128xf32> -> vector<128x128xf32>
    %25 = arith.addf %15, %24 : vector<128x128xf32>
    %c7_i32 = arith.constant 7 : i32
    %26 = tpu.dynamic_rotate %1 by %c7_i32 dim 0 : vector<128x128xf32>, i32 -> vector<128x128xf32>
    %c2 = arith.constant 2 : index
    %c0_18 = arith.constant 0 : index
    %c0_19 = arith.constant 0 : index
    %27 = vector.load %arg2[%c2, %c0_18, %c0_19] : memref<8x128x1xf32, #tpu.memory_space<vmem>>, vector<1x128x1xf32>
    %28 = vector.shape_cast %27 : vector<1x128x1xf32> to vector<128x1xf32>
    %29 = vector.broadcast %28 : vector<128x1xf32> to vector<128x128xf32>
    %30 = arith.mulf %26, %29 : vector<128x128xf32>
    %31 = arith.truncf %30 : vector<128x128xf32> to vector<128x128xbf16>
    %c2_20 = arith.constant 2 : index
    %c0_21 = arith.constant 0 : index
    %c0_22 = arith.constant 0 : index
    %32 = vector.load %arg3[%c2_20, %c0_21, %c0_22] : memref<9x128x128xbf16, #tpu.memory_space<vmem>>, vector<1x128x128xbf16>
    %33 = vector.shape_cast %32 : vector<1x128x128xbf16> to vector<128x128xbf16>
    %cst_23 = arith.constant dense<0.000000e+00> : vector<128x128xf32>
    %34 = tpu.matmul %31, %33, %cst_23 {dimension_numbers = #tpu.dot_dimension_numbers<[1], [0], [0], [1], [0, 0, 1, 1], [], []>} : vector<128x128xbf16>, vector<128x128xbf16>, vector<128x128xf32> -> vector<128x128xf32>
    %35 = arith.addf %25, %34 : vector<128x128xf32>
    %c1_i32 = arith.constant 1 : i32
    %36 = tpu.dynamic_rotate %1 by %c1_i32 dim 0 : vector<128x128xf32>, i32 -> vector<128x128xf32>
    %c3 = arith.constant 3 : index
    %c0_24 = arith.constant 0 : index
    %c0_25 = arith.constant 0 : index
    %37 = vector.load %arg2[%c3, %c0_24, %c0_25] : memref<8x128x1xf32, #tpu.memory_space<vmem>>, vector<1x128x1xf32>
    %38 = vector.shape_cast %37 : vector<1x128x1xf32> to vector<128x1xf32>
    %39 = vector.broadcast %38 : vector<128x1xf32> to vector<128x128xf32>
    %40 = arith.mulf %36, %39 : vector<128x128xf32>
    %41 = arith.truncf %40 : vector<128x128xf32> to vector<128x128xbf16>
    %c3_26 = arith.constant 3 : index
    %c0_27 = arith.constant 0 : index
    %c0_28 = arith.constant 0 : index
    %42 = vector.load %arg3[%c3_26, %c0_27, %c0_28] : memref<9x128x128xbf16, #tpu.memory_space<vmem>>, vector<1x128x128xbf16>
    %43 = vector.shape_cast %42 : vector<1x128x128xbf16> to vector<128x128xbf16>
    %cst_29 = arith.constant dense<0.000000e+00> : vector<128x128xf32>
    %44 = tpu.matmul %41, %43, %cst_29 {dimension_numbers = #tpu.dot_dimension_numbers<[1], [0], [0], [1], [0, 0, 1, 1], [], []>} : vector<128x128xbf16>, vector<128x128xbf16>, vector<128x128xf32> -> vector<128x128xf32>
    %45 = arith.addf %35, %44 : vector<128x128xf32>
    %c127_i32 = arith.constant 127 : i32
    %46 = tpu.dynamic_rotate %1 by %c127_i32 dim 0 : vector<128x128xf32>, i32 -> vector<128x128xf32>
    %c4_30 = arith.constant 4 : index
    %c0_31 = arith.constant 0 : index
    %c0_32 = arith.constant 0 : index
    %47 = vector.load %arg2[%c4_30, %c0_31, %c0_32] : memref<8x128x1xf32, #tpu.memory_space<vmem>>, vector<1x128x1xf32>
    %48 = vector.shape_cast %47 : vector<1x128x1xf32> to vector<128x1xf32>
    %49 = vector.broadcast %48 : vector<128x1xf32> to vector<128x128xf32>
    %50 = arith.mulf %46, %49 : vector<128x128xf32>
    %51 = arith.truncf %50 : vector<128x128xf32> to vector<128x128xbf16>
    %c5 = arith.constant 5 : index
    %c0_33 = arith.constant 0 : index
    %c0_34 = arith.constant 0 : index
    %52 = vector.load %arg3[%c5, %c0_33, %c0_34] : memref<9x128x128xbf16, #tpu.memory_space<vmem>>, vector<1x128x128xbf16>
    %53 = vector.shape_cast %52 : vector<1x128x128xbf16> to vector<128x128xbf16>
    %cst_35 = arith.constant dense<0.000000e+00> : vector<128x128xf32>
    %54 = tpu.matmul %51, %53, %cst_35 {dimension_numbers = #tpu.dot_dimension_numbers<[1], [0], [0], [1], [0, 0, 1, 1], [], []>} : vector<128x128xbf16>, vector<128x128xbf16>, vector<128x128xf32> -> vector<128x128xf32>
    %55 = arith.addf %45, %54 : vector<128x128xf32>
    %c121_i32 = arith.constant 121 : i32
    %56 = tpu.dynamic_rotate %1 by %c121_i32 dim 0 : vector<128x128xf32>, i32 -> vector<128x128xf32>
    %c5_36 = arith.constant 5 : index
    %c0_37 = arith.constant 0 : index
    %c0_38 = arith.constant 0 : index
    %57 = vector.load %arg2[%c5_36, %c0_37, %c0_38] : memref<8x128x1xf32, #tpu.memory_space<vmem>>, vector<1x128x1xf32>
    %58 = vector.shape_cast %57 : vector<1x128x1xf32> to vector<128x1xf32>
    %59 = vector.broadcast %58 : vector<128x1xf32> to vector<128x128xf32>
    %60 = arith.mulf %56, %59 : vector<128x128xf32>
    %61 = arith.truncf %60 : vector<128x128xf32> to vector<128x128xbf16>
    %c6 = arith.constant 6 : index
    %c0_39 = arith.constant 0 : index
    %c0_40 = arith.constant 0 : index
    %62 = vector.load %arg3[%c6, %c0_39, %c0_40] : memref<9x128x128xbf16, #tpu.memory_space<vmem>>, vector<1x128x128xbf16>
    %63 = vector.shape_cast %62 : vector<1x128x128xbf16> to vector<128x128xbf16>
    %cst_41 = arith.constant dense<0.000000e+00> : vector<128x128xf32>
    %64 = tpu.matmul %61, %63, %cst_41 {dimension_numbers = #tpu.dot_dimension_numbers<[1], [0], [0], [1], [0, 0, 1, 1], [], []>} : vector<128x128xbf16>, vector<128x128xbf16>, vector<128x128xf32> -> vector<128x128xf32>
    %65 = arith.addf %55, %64 : vector<128x128xf32>
    %c120_i32 = arith.constant 120 : i32
    %66 = tpu.dynamic_rotate %1 by %c120_i32 dim 0 : vector<128x128xf32>, i32 -> vector<128x128xf32>
    %c6_42 = arith.constant 6 : index
    %c0_43 = arith.constant 0 : index
    %c0_44 = arith.constant 0 : index
    %67 = vector.load %arg2[%c6_42, %c0_43, %c0_44] : memref<8x128x1xf32, #tpu.memory_space<vmem>>, vector<1x128x1xf32>
    %68 = vector.shape_cast %67 : vector<1x128x1xf32> to vector<128x1xf32>
    %69 = vector.broadcast %68 : vector<128x1xf32> to vector<128x128xf32>
    %70 = arith.mulf %66, %69 : vector<128x128xf32>
    %71 = arith.truncf %70 : vector<128x128xf32> to vector<128x128xbf16>
    %c7 = arith.constant 7 : index
    %c0_45 = arith.constant 0 : index
    %c0_46 = arith.constant 0 : index
    %72 = vector.load %arg3[%c7, %c0_45, %c0_46] : memref<9x128x128xbf16, #tpu.memory_space<vmem>>, vector<1x128x128xbf16>
    %73 = vector.shape_cast %72 : vector<1x128x128xbf16> to vector<128x128xbf16>
    %cst_47 = arith.constant dense<0.000000e+00> : vector<128x128xf32>
    %74 = tpu.matmul %71, %73, %cst_47 {dimension_numbers = #tpu.dot_dimension_numbers<[1], [0], [0], [1], [0, 0, 1, 1], [], []>} : vector<128x128xbf16>, vector<128x128xbf16>, vector<128x128xf32> -> vector<128x128xf32>
    %75 = arith.addf %65, %74 : vector<128x128xf32>
    %c119_i32 = arith.constant 119 : i32
    %76 = tpu.dynamic_rotate %1 by %c119_i32 dim 0 : vector<128x128xf32>, i32 -> vector<128x128xf32>
    %c7_48 = arith.constant 7 : index
    %c0_49 = arith.constant 0 : index
    %c0_50 = arith.constant 0 : index
    %77 = vector.load %arg2[%c7_48, %c0_49, %c0_50] : memref<8x128x1xf32, #tpu.memory_space<vmem>>, vector<1x128x1xf32>
    %78 = vector.shape_cast %77 : vector<1x128x1xf32> to vector<128x1xf32>
    %79 = vector.broadcast %78 : vector<128x1xf32> to vector<128x128xf32>
    %80 = arith.mulf %76, %79 : vector<128x128xf32>
    %81 = arith.truncf %80 : vector<128x128xf32> to vector<128x128xbf16>
    %c8 = arith.constant 8 : index
    %c0_51 = arith.constant 0 : index
    %c0_52 = arith.constant 0 : index
    %82 = vector.load %arg3[%c8, %c0_51, %c0_52] : memref<9x128x128xbf16, #tpu.memory_space<vmem>>, vector<1x128x128xbf16>
    %83 = vector.shape_cast %82 : vector<1x128x128xbf16> to vector<128x128xbf16>
    %cst_53 = arith.constant dense<0.000000e+00> : vector<128x128xf32>
    %84 = tpu.matmul %81, %83, %cst_53 {dimension_numbers = #tpu.dot_dimension_numbers<[1], [0], [0], [1], [0, 0, 1, 1], [], []>} : vector<128x128xbf16>, vector<128x128xbf16>, vector<128x128xf32> -> vector<128x128xf32>
    %85 = arith.addf %75, %84 : vector<128x128xf32>
    %c0_54 = arith.constant 0 : index
    %c0_55 = arith.constant 0 : index
    %86 = vector.load %arg4[%c0_54, %c0_55] : memref<1x128xf32, #tpu.memory_space<vmem>>, vector<1x128xf32>
    %87 = vector.broadcast %86 : vector<1x128xf32> to vector<128x128xf32>
    %88 = arith.mulf %85, %87 : vector<128x128xf32>
    %c0_56 = arith.constant 0 : index
    %c0_57 = arith.constant 0 : index
    %89 = vector.load %arg5[%c0_56, %c0_57] : memref<1x128xf32, #tpu.memory_space<vmem>>, vector<1x128xf32>
    %90 = vector.broadcast %89 : vector<1x128xf32> to vector<128x128xf32>
    %91 = arith.addf %88, %90 : vector<128x128xf32>
    %cst_58 = arith.constant 0.000000e+00 : f32
    %92 = vector.broadcast %cst_58 : f32 to vector<128x128xf32>
    %93 = arith.maximumf %91, %92 : vector<128x128xf32>
    %94 = arith.truncf %93 : vector<128x128xf32> to vector<128x128xbf16>
    %c4_59 = arith.constant 4 : index
    %c0_60 = arith.constant 0 : index
    %c0_61 = arith.constant 0 : index
    %95 = vector.load %arg6[%c4_59, %c0_60, %c0_61] : memref<9x128x128xbf16, #tpu.memory_space<vmem>>, vector<1x128x128xbf16>
    %96 = vector.shape_cast %95 : vector<1x128x128xbf16> to vector<128x128xbf16>
    %cst_62 = arith.constant dense<0.000000e+00> : vector<128x128xf32>
    %97 = tpu.matmul %94, %96, %cst_62 {dimension_numbers = #tpu.dot_dimension_numbers<[1], [0], [0], [1], [0, 0, 1, 1], [], []>} : vector<128x128xbf16>, vector<128x128xbf16>, vector<128x128xf32> -> vector<128x128xf32>
    %c9_i32_63 = arith.constant 9 : i32
    %98 = tpu.dynamic_rotate %93 by %c9_i32_63 dim 0 : vector<128x128xf32>, i32 -> vector<128x128xf32>
    %c0_64 = arith.constant 0 : index
    %c0_65 = arith.constant 0 : index
    %c0_66 = arith.constant 0 : index
    %99 = vector.load %arg2[%c0_64, %c0_65, %c0_66] : memref<8x128x1xf32, #tpu.memory_space<vmem>>, vector<1x128x1xf32>
    %100 = vector.shape_cast %99 : vector<1x128x1xf32> to vector<128x1xf32>
    %101 = vector.broadcast %100 : vector<128x1xf32> to vector<128x128xf32>
    %102 = arith.mulf %98, %101 : vector<128x128xf32>
    %103 = arith.truncf %102 : vector<128x128xf32> to vector<128x128xbf16>
    %c0_67 = arith.constant 0 : index
    %c0_68 = arith.constant 0 : index
    %c0_69 = arith.constant 0 : index
    %104 = vector.load %arg6[%c0_67, %c0_68, %c0_69] : memref<9x128x128xbf16, #tpu.memory_space<vmem>>, vector<1x128x128xbf16>
    %105 = vector.shape_cast %104 : vector<1x128x128xbf16> to vector<128x128xbf16>
    %cst_70 = arith.constant dense<0.000000e+00> : vector<128x128xf32>
    %106 = tpu.matmul %103, %105, %cst_70 {dimension_numbers = #tpu.dot_dimension_numbers<[1], [0], [0], [1], [0, 0, 1, 1], [], []>} : vector<128x128xbf16>, vector<128x128xbf16>, vector<128x128xf32> -> vector<128x128xf32>
    %107 = arith.addf %97, %106 : vector<128x128xf32>
    %c8_i32_71 = arith.constant 8 : i32
    %108 = tpu.dynamic_rotate %93 by %c8_i32_71 dim 0 : vector<128x128xf32>, i32 -> vector<128x128xf32>
    %c1_72 = arith.constant 1 : index
    %c0_73 = arith.constant 0 : index
    %c0_74 = arith.constant 0 : index
    %109 = vector.load %arg2[%c1_72, %c0_73, %c0_74] : memref<8x128x1xf32, #tpu.memory_space<vmem>>, vector<1x128x1xf32>
    %110 = vector.shape_cast %109 : vector<1x128x1xf32> to vector<128x1xf32>
    %111 = vector.broadcast %110 : vector<128x1xf32> to vector<128x128xf32>
    %112 = arith.mulf %108, %111 : vector<128x128xf32>
    %113 = arith.truncf %112 : vector<128x128xf32> to vector<128x128xbf16>
    %c1_75 = arith.constant 1 : index
    %c0_76 = arith.constant 0 : index
    %c0_77 = arith.constant 0 : index
    %114 = vector.load %arg6[%c1_75, %c0_76, %c0_77] : memref<9x128x128xbf16, #tpu.memory_space<vmem>>, vector<1x128x128xbf16>
    %115 = vector.shape_cast %114 : vector<1x128x128xbf16> to vector<128x128xbf16>
    %cst_78 = arith.constant dense<0.000000e+00> : vector<128x128xf32>
    %116 = tpu.matmul %113, %115, %cst_78 {dimension_numbers = #tpu.dot_dimension_numbers<[1], [0], [0], [1], [0, 0, 1, 1], [], []>} : vector<128x128xbf16>, vector<128x128xbf16>, vector<128x128xf32> -> vector<128x128xf32>
    %117 = arith.addf %107, %116 : vector<128x128xf32>
    %c7_i32_79 = arith.constant 7 : i32
    %118 = tpu.dynamic_rotate %93 by %c7_i32_79 dim 0 : vector<128x128xf32>, i32 -> vector<128x128xf32>
    %c2_80 = arith.constant 2 : index
    %c0_81 = arith.constant 0 : index
    %c0_82 = arith.constant 0 : index
    %119 = vector.load %arg2[%c2_80, %c0_81, %c0_82] : memref<8x128x1xf32, #tpu.memory_space<vmem>>, vector<1x128x1xf32>
    %120 = vector.shape_cast %119 : vector<1x128x1xf32> to vector<128x1xf32>
    %121 = vector.broadcast %120 : vector<128x1xf32> to vector<128x128xf32>
    %122 = arith.mulf %118, %121 : vector<128x128xf32>
    %123 = arith.truncf %122 : vector<128x128xf32> to vector<128x128xbf16>
    %c2_83 = arith.constant 2 : index
    %c0_84 = arith.constant 0 : index
    %c0_85 = arith.constant 0 : index
    %124 = vector.load %arg6[%c2_83, %c0_84, %c0_85] : memref<9x128x128xbf16, #tpu.memory_space<vmem>>, vector<1x128x128xbf16>
    %125 = vector.shape_cast %124 : vector<1x128x128xbf16> to vector<128x128xbf16>
    %cst_86 = arith.constant dense<0.000000e+00> : vector<128x128xf32>
    %126 = tpu.matmul %123, %125, %cst_86 {dimension_numbers = #tpu.dot_dimension_numbers<[1], [0], [0], [1], [0, 0, 1, 1], [], []>} : vector<128x128xbf16>, vector<128x128xbf16>, vector<128x128xf32> -> vector<128x128xf32>
    %127 = arith.addf %117, %126 : vector<128x128xf32>
    %c1_i32_87 = arith.constant 1 : i32
    %128 = tpu.dynamic_rotate %93 by %c1_i32_87 dim 0 : vector<128x128xf32>, i32 -> vector<128x128xf32>
    %c3_88 = arith.constant 3 : index
    %c0_89 = arith.constant 0 : index
    %c0_90 = arith.constant 0 : index
    %129 = vector.load %arg2[%c3_88, %c0_89, %c0_90] : memref<8x128x1xf32, #tpu.memory_space<vmem>>, vector<1x128x1xf32>
    %130 = vector.shape_cast %129 : vector<1x128x1xf32> to vector<128x1xf32>
    %131 = vector.broadcast %130 : vector<128x1xf32> to vector<128x128xf32>
    %132 = arith.mulf %128, %131 : vector<128x128xf32>
    %133 = arith.truncf %132 : vector<128x128xf32> to vector<128x128xbf16>
    %c3_91 = arith.constant 3 : index
    %c0_92 = arith.constant 0 : index
    %c0_93 = arith.constant 0 : index
    %134 = vector.load %arg6[%c3_91, %c0_92, %c0_93] : memref<9x128x128xbf16, #tpu.memory_space<vmem>>, vector<1x128x128xbf16>
    %135 = vector.shape_cast %134 : vector<1x128x128xbf16> to vector<128x128xbf16>
    %cst_94 = arith.constant dense<0.000000e+00> : vector<128x128xf32>
    %136 = tpu.matmul %133, %135, %cst_94 {dimension_numbers = #tpu.dot_dimension_numbers<[1], [0], [0], [1], [0, 0, 1, 1], [], []>} : vector<128x128xbf16>, vector<128x128xbf16>, vector<128x128xf32> -> vector<128x128xf32>
    %137 = arith.addf %127, %136 : vector<128x128xf32>
    %c127_i32_95 = arith.constant 127 : i32
    %138 = tpu.dynamic_rotate %93 by %c127_i32_95 dim 0 : vector<128x128xf32>, i32 -> vector<128x128xf32>
    %c4_96 = arith.constant 4 : index
    %c0_97 = arith.constant 0 : index
    %c0_98 = arith.constant 0 : index
    %139 = vector.load %arg2[%c4_96, %c0_97, %c0_98] : memref<8x128x1xf32, #tpu.memory_space<vmem>>, vector<1x128x1xf32>
    %140 = vector.shape_cast %139 : vector<1x128x1xf32> to vector<128x1xf32>
    %141 = vector.broadcast %140 : vector<128x1xf32> to vector<128x128xf32>
    %142 = arith.mulf %138, %141 : vector<128x128xf32>
    %143 = arith.truncf %142 : vector<128x128xf32> to vector<128x128xbf16>
    %c5_99 = arith.constant 5 : index
    %c0_100 = arith.constant 0 : index
    %c0_101 = arith.constant 0 : index
    %144 = vector.load %arg6[%c5_99, %c0_100, %c0_101] : memref<9x128x128xbf16, #tpu.memory_space<vmem>>, vector<1x128x128xbf16>
    %145 = vector.shape_cast %144 : vector<1x128x128xbf16> to vector<128x128xbf16>
    %cst_102 = arith.constant dense<0.000000e+00> : vector<128x128xf32>
    %146 = tpu.matmul %143, %145, %cst_102 {dimension_numbers = #tpu.dot_dimension_numbers<[1], [0], [0], [1], [0, 0, 1, 1], [], []>} : vector<128x128xbf16>, vector<128x128xbf16>, vector<128x128xf32> -> vector<128x128xf32>
    %147 = arith.addf %137, %146 : vector<128x128xf32>
    %c121_i32_103 = arith.constant 121 : i32
    %148 = tpu.dynamic_rotate %93 by %c121_i32_103 dim 0 : vector<128x128xf32>, i32 -> vector<128x128xf32>
    %c5_104 = arith.constant 5 : index
    %c0_105 = arith.constant 0 : index
    %c0_106 = arith.constant 0 : index
    %149 = vector.load %arg2[%c5_104, %c0_105, %c0_106] : memref<8x128x1xf32, #tpu.memory_space<vmem>>, vector<1x128x1xf32>
    %150 = vector.shape_cast %149 : vector<1x128x1xf32> to vector<128x1xf32>
    %151 = vector.broadcast %150 : vector<128x1xf32> to vector<128x128xf32>
    %152 = arith.mulf %148, %151 : vector<128x128xf32>
    %153 = arith.truncf %152 : vector<128x128xf32> to vector<128x128xbf16>
    %c6_107 = arith.constant 6 : index
    %c0_108 = arith.constant 0 : index
    %c0_109 = arith.constant 0 : index
    %154 = vector.load %arg6[%c6_107, %c0_108, %c0_109] : memref<9x128x128xbf16, #tpu.memory_space<vmem>>, vector<1x128x128xbf16>
    %155 = vector.shape_cast %154 : vector<1x128x128xbf16> to vector<128x128xbf16>
    %cst_110 = arith.constant dense<0.000000e+00> : vector<128x128xf32>
    %156 = tpu.matmul %153, %155, %cst_110 {dimension_numbers = #tpu.dot_dimension_numbers<[1], [0], [0], [1], [0, 0, 1, 1], [], []>} : vector<128x128xbf16>, vector<128x128xbf16>, vector<128x128xf32> -> vector<128x128xf32>
    %157 = arith.addf %147, %156 : vector<128x128xf32>
    %c120_i32_111 = arith.constant 120 : i32
    %158 = tpu.dynamic_rotate %93 by %c120_i32_111 dim 0 : vector<128x128xf32>, i32 -> vector<128x128xf32>
    %c6_112 = arith.constant 6 : index
    %c0_113 = arith.constant 0 : index
    %c0_114 = arith.constant 0 : index
    %159 = vector.load %arg2[%c6_112, %c0_113, %c0_114] : memref<8x128x1xf32, #tpu.memory_space<vmem>>, vector<1x128x1xf32>
    %160 = vector.shape_cast %159 : vector<1x128x1xf32> to vector<128x1xf32>
    %161 = vector.broadcast %160 : vector<128x1xf32> to vector<128x128xf32>
    %162 = arith.mulf %158, %161 : vector<128x128xf32>
    %163 = arith.truncf %162 : vector<128x128xf32> to vector<128x128xbf16>
    %c7_115 = arith.constant 7 : index
    %c0_116 = arith.constant 0 : index
    %c0_117 = arith.constant 0 : index
    %164 = vector.load %arg6[%c7_115, %c0_116, %c0_117] : memref<9x128x128xbf16, #tpu.memory_space<vmem>>, vector<1x128x128xbf16>
    %165 = vector.shape_cast %164 : vector<1x128x128xbf16> to vector<128x128xbf16>
    %cst_118 = arith.constant dense<0.000000e+00> : vector<128x128xf32>
    %166 = tpu.matmul %163, %165, %cst_118 {dimension_numbers = #tpu.dot_dimension_numbers<[1], [0], [0], [1], [0, 0, 1, 1], [], []>} : vector<128x128xbf16>, vector<128x128xbf16>, vector<128x128xf32> -> vector<128x128xf32>
    %167 = arith.addf %157, %166 : vector<128x128xf32>
    %c119_i32_119 = arith.constant 119 : i32
    %168 = tpu.dynamic_rotate %93 by %c119_i32_119 dim 0 : vector<128x128xf32>, i32 -> vector<128x128xf32>
    %c7_120 = arith.constant 7 : index
    %c0_121 = arith.constant 0 : index
    %c0_122 = arith.constant 0 : index
    %169 = vector.load %arg2[%c7_120, %c0_121, %c0_122] : memref<8x128x1xf32, #tpu.memory_space<vmem>>, vector<1x128x1xf32>
    %170 = vector.shape_cast %169 : vector<1x128x1xf32> to vector<128x1xf32>
    %171 = vector.broadcast %170 : vector<128x1xf32> to vector<128x128xf32>
    %172 = arith.mulf %168, %171 : vector<128x128xf32>
    %173 = arith.truncf %172 : vector<128x128xf32> to vector<128x128xbf16>
    %c8_123 = arith.constant 8 : index
    %c0_124 = arith.constant 0 : index
    %c0_125 = arith.constant 0 : index
    %174 = vector.load %arg6[%c8_123, %c0_124, %c0_125] : memref<9x128x128xbf16, #tpu.memory_space<vmem>>, vector<1x128x128xbf16>
    %175 = vector.shape_cast %174 : vector<1x128x128xbf16> to vector<128x128xbf16>
    %cst_126 = arith.constant dense<0.000000e+00> : vector<128x128xf32>
    %176 = tpu.matmul %173, %175, %cst_126 {dimension_numbers = #tpu.dot_dimension_numbers<[1], [0], [0], [1], [0, 0, 1, 1], [], []>} : vector<128x128xbf16>, vector<128x128xbf16>, vector<128x128xf32> -> vector<128x128xf32>
    %177 = arith.addf %167, %176 : vector<128x128xf32>
    %c0_127 = arith.constant 0 : index
    %c0_128 = arith.constant 0 : index
    %178 = vector.load %arg7[%c0_127, %c0_128] : memref<1x128xf32, #tpu.memory_space<vmem>>, vector<1x128xf32>
    %179 = vector.broadcast %178 : vector<1x128xf32> to vector<128x128xf32>
    %180 = arith.mulf %177, %179 : vector<128x128xf32>
    %c0_129 = arith.constant 0 : index
    %c0_130 = arith.constant 0 : index
    %181 = vector.load %arg8[%c0_129, %c0_130] : memref<1x128xf32, #tpu.memory_space<vmem>>, vector<1x128xf32>
    %182 = vector.broadcast %181 : vector<1x128xf32> to vector<128x128xf32>
    %183 = arith.addf %180, %182 : vector<128x128xf32>
    %184 = arith.addf %183, %1 : vector<128x128xf32>
    %cst_131 = arith.constant 0.000000e+00 : f32
    %185 = vector.broadcast %cst_131 : f32 to vector<128x128xf32>
    %186 = arith.maximumf %184, %185 : vector<128x128xf32>
    %187 = vector.shape_cast %186 : vector<128x128xf32> to vector<2x64x128xf32>
    %c0_132 = arith.constant 0 : index
    %c0_133 = arith.constant 0 : index
    %c0_134 = arith.constant 0 : index
    %188 = vector.load %arg9[%c0_132, %c0_133, %c0_134] : memref<2x64x128xf32, #tpu.memory_space<vmem>>, vector<2x64x128xf32>
    tpu.vector_store %arg9[%c0_132, %c0_133, %c0_134], %187 {strides = array<i32>} : memref<2x64x128xf32, #tpu.memory_space<vmem>>, vector<2x64x128xf32>,
    return
  }
  func.func @transform_0(%arg0: i32) -> (i32, i32, i32, i32) {
    %c0_i32 = arith.constant 0 : i32
    %c0_i32_0 = arith.constant 0 : i32
    %c0_i32_1 = arith.constant 0 : i32
    %c0_i32_2 = arith.constant 0 : i32
    return %arg0, %c0_i32, %c0_i32_0, %c0_i32_1 : i32, i32, i32, i32
  }
  func.func @transform_1(%arg0: i32) -> (i32, i32, i32) {
    %c0_i32 = arith.constant 0 : i32
    %c0_i32_0 = arith.constant 0 : i32
    %c0_i32_1 = arith.constant 0 : i32
    %c0_i32_2 = arith.constant 0 : i32
    return %c0_i32, %c0_i32_0, %c0_i32_1 : i32, i32, i32
  }
  func.func @transform_2(%arg0: i32) -> (i32, i32, i32) {
    %c0_i32 = arith.constant 0 : i32
    %c0_i32_0 = arith.constant 0 : i32
    %c0_i32_1 = arith.constant 0 : i32
    %c0_i32_2 = arith.constant 0 : i32
    return %c0_i32, %c0_i32_0, %c0_i32_1 : i32, i32, i32
  }
  func.func @transform_3(%arg0: i32) -> (i32, i32) {
    %c0_i32 = arith.constant 0 : i32
    %c0_i32_0 = arith.constant 0 : i32
    %c0_i32_1 = arith.constant 0 : i32
    return %c0_i32, %c0_i32_0 : i32, i32
  }
  func.func @transform_4(%arg0: i32) -> (i32, i32) {
    %c0_i32 = arith.constant 0 : i32
    %c0_i32_0 = arith.constant 0 : i32
    %c0_i32_1 = arith.constant 0 : i32
    return %c0_i32, %c0_i32_0 : i32, i32
  }
  func.func @transform_5(%arg0: i32) -> (i32, i32, i32) {
    %c0_i32 = arith.constant 0 : i32
    %c0_i32_0 = arith.constant 0 : i32
    %c0_i32_1 = arith.constant 0 : i32
    %c0_i32_2 = arith.constant 0 : i32
    return %c0_i32, %c0_i32_0, %c0_i32_1 : i32, i32, i32
  }
  func.func @transform_6(%arg0: i32) -> (i32, i32) {
    %c0_i32 = arith.constant 0 : i32
    %c0_i32_0 = arith.constant 0 : i32
    %c0_i32_1 = arith.constant 0 : i32
    return %c0_i32, %c0_i32_0 : i32, i32
  }
  func.func @transform_7(%arg0: i32) -> (i32, i32) {
    %c0_i32 = arith.constant 0 : i32
    %c0_i32_0 = arith.constant 0 : i32
    %c0_i32_1 = arith.constant 0 : i32
    return %c0_i32, %c0_i32_0 : i32, i32
  }
  func.func @transform_8(%arg0: i32) -> (i32, i32, i32) {
    %c0_i32 = arith.constant 0 : i32
    %c0_i32_0 = arith.constant 0 : i32
    %c0_i32_1 = arith.constant 0 : i32
    return %arg0, %c0_i32, %c0_i32_0 : i32, i32, i32
  }
}

</mosaic_0001>

<llo_original>
// kernel: resblock_forward.1
$region0: #{resblock_forward.1}
  #allocation0 [shape = 'u32[]', space=smem, size = 0x4, offset = 0x4, fixed_abs, tag = 'smem constant byte address 0x4 - core index']
  #allocation1 [shape = 'u32[72,128]{1,0:T(1,128)}', space=vmem, size = 0x9000, scoped, tag = 'internal scratch']
  %s0 = inlined_call_operand.hbm [shape: f32[4,8,8,128], index: 0, kind: input, shape index: {}]
  %s1 = inlined_call_operand.hbm [shape: f32[8,128,1], index: 1, kind: input, shape index: {}]
  %s2 = inlined_call_operand.hbm [shape: bf16[9,128,128], index: 2, kind: input, shape index: {}]
  %s3 = inlined_call_operand.vmem [shape: f32[1,128], index: 3, kind: input, shape index: {}]
  %s4 = inlined_call_operand.hbm [shape: f32[1,128], index: 4, kind: input, shape index: {}]
  %s5 = inlined_call_operand.hbm [shape: bf16[9,128,128], index: 5, kind: input, shape index: {}]
  %s6 = inlined_call_operand.vmem [shape: f32[1,128], index: 6, kind: input, shape index: {}]
  %s7 = inlined_call_operand.hbm [shape: f32[1,128], index: 7, kind: input, shape index: {}]
  %s8 = inlined_call_operand.hbm [shape: f32[4,64,128], index: 8, kind: output, shape index: {}]
  %s9 = sld [smem:[#allocation0]]
  $region89: #{resblock_forward.1} parent=0
    _
  %s11 = ssub.s32 1, %s9
  %s12 = scalar_select 0, %s11, %s9
  $region1: #{resblock_forward.1} parent=0
    #allocation2 [shape = 'u8[131072]{0}', space=vmem, size = 0x20000, scoped, tag = 'input window, operand 0']
    #allocation3 [shape = 's32[2]{0}', space=sflag, size = 0x8, scoped, tag = 'scoped memory for resblock_forward.1']
    #allocation4 [shape = 's32[2]{0}', space=sflag, size = 0x8, scoped, tag = 'scoped memory for resblock_forward.1']
    #allocation5 [shape = 'u8[524288]{0}', space=vmem, size = 0x80000, scoped, tag = 'input window, operand 1, single buffered']
    #allocation6 [shape = 's32[1]{0}', space=sflag, size = 0x4, scoped, tag = 'scoped memory for resblock_forward.1']
    #allocation7 [shape = 'u8[294912]{0}', space=vmem, size = 0x48000, scoped, tag = 'input window, operand 2, single buffered']
    #allocation8 [shape = 'u8[512]{0}', space=vmem, size = 0x400, scoped, tag = 'input window, operand 4, single buffered']
    #allocation9 [shape = 's32[1]{0}', space=sflag, size = 0x4, scoped, tag = 'scoped memory for resblock_forward.1']
    #allocation10 [shape = 'u8[294912]{0}', space=vmem, size = 0x48000, scoped, tag = 'input window, operand 5, single buffered']
    #allocation11 [shape = 'u8[512]{0}', space=vmem, size = 0x400, scoped, tag = 'input window, operand 7, single buffered']
    #allocation12 [shape = 's32[1]{0}', space=sflag, size = 0x4, scoped, tag = 'scoped memory for resblock_forward.1']
    #allocation13 [shape = 'u8[131072]{0}', space=vmem, size = 0x20000, scoped, tag = 'output window, operand 0']
    %13 = vsyncpa [#allocation3], 0
    %s14 = scalar_lea.sflag [#allocation3], 1
    %15 = vsyncpa %s14, 0
    %16 = vsyncpa [#allocation6], 0
    %17 = vsyncpa [#allocation9], 0
    %18 = vsyncpa [#allocation12], 0
    %19 = vsyncpa [#allocation4], 0
    %s20 = scalar_lea.sflag [#allocation4], 1
    %21 = vsyncpa %s20, 0
    loop: start=0, step=1, limit=4
    $region2: #{resblock_forward.1} parent=1 // loop_pre_header
      _
    $region3: #{resblock_forward.1} parent=1 // loop_header
      %s23 = sphi 0, %s27
      %p24 = scmp.ge.s32.totalorder %s23, 4
      %s33 = sphi 0, %s35
      %s36 = sphi 0, %s33
      %s37 = sphi 0, %s36
      %s53 = sphi 0, %s37
      %s57 = sphi 0, %s57
      %s59 = sphi 0, %s57
      %s60 = sphi 0, %s59
      %s74 = sphi 0, %s60
      %s78 = sphi 0, %s78
      %s80 = sphi 0, %s78
      %s81 = sphi 0, %s80
      %s95 = sphi 0, %s81
      %s99 = sphi 0, %s99
      %s101 = sphi 0, %s99
      %s102 = sphi 0, %s101
      %s116 = sphi 0, %s102
      %s120 = sphi 0, %s120
      %s122 = sphi 0, %s120
      %s123 = sphi 0, %s122
      %s137 = sphi 0, %s123
      %s141 = sphi 0, %s141
      %s143 = sphi 0, %s141
      %s144 = sphi 0, %s143
      %s158 = sphi 0, %s144
      %s162 = sphi 0, %s162
      %s164 = sphi 0, %s162
      %s165 = sphi 0, %s164
      %s179 = sphi 0, %s165
      %s183 = sphi 0, %s183
      %s185 = sphi 0, %s183
      %s186 = sphi 0, %s185
      %s200 = sphi 0, %s186
      %s206 = sphi 0, %s208
      %s209 = sphi 0, %s206
      %s210 = sphi 0, %s209
      %s226 = sphi 0, %s210
    $region4: #{resblock_forward.1} parent=1 // loop_header_branch
      %26 = sbr.rel (%p24) target = $region8
    $region5: #{resblock_forward.1} parent=1 // loop_body
      %s28 = ssub.s32 %s23, 1
      %s29 = ssub.s32 %s23, 2
      %s30 = sadd.s32 %s23, 1
      %s31 = ssub.s32 %s23, %s30
      %p32 = scmp.eq.s32.totalorder %s31, 0
      %s34 = sadd.s32 %s33, 1
      %s35 = scalar_select %p32, %s33, %s34
      %p38 = pneg %p32
      %p39 = scmp.eq.s32.totalorder %s23, 1
      %p40 = por %p38, %p39
      %p41 = scmp.ne.s32.totalorder %s33, %s36
      %p42 = scmp.eq.s32.totalorder %s23, 0
      %p43 = por %p41, %p42
      %p44 = scmp.ne.s32.totalorder %s33, %s36
      %p45 = scmp.eq.s32.totalorder %s28, 1
      %p46 = por %p44, %p45
      %p47 = scmp.ne.s32.totalorder %s36, %s37
      %p48 = scmp.eq.s32.totalorder %s28, 0
      %p49 = por %p47, %p48
      %p50 = scmp.ne.s32.totalorder %s36, %s37
      %p51 = scmp.eq.s32.totalorder %s29, 1
      %p52 = por %p50, %p51
      %p54 = scmp.ne.s32.totalorder %s37, %s53
      %p55 = scmp.eq.s32.totalorder %s29, 0
      %p56 = por %p54, %p55
      %s58 = sadd.s32 %s57, 1
      %p61 = scmp.eq.s32.totalorder %s23, 1
      %p62 = scmp.ne.s32.totalorder %s57, %s59
      %p63 = scmp.eq.s32.totalorder %s23, 0
      %p64 = por %p62, %p63
      %p65 = scmp.ne.s32.totalorder %s57, %s59
      %p66 = scmp.eq.s32.totalorder %s28, 1
      %p67 = por %p65, %p66
      %p68 = scmp.ne.s32.totalorder %s59, %s60
      %p69 = scmp.eq.s32.totalorder %s28, 0
      %p70 = por %p68, %p69
      %p71 = scmp.ne.s32.totalorder %s59, %s60
      %p72 = scmp.eq.s32.totalorder %s29, 1
      %p73 = por %p71, %p72
      %p75 = scmp.ne.s32.totalorder %s60, %s74
      %p76 = scmp.eq.s32.totalorder %s29, 0
      %p77 = por %p75, %p76
      %s79 = sadd.s32 %s78, 1
      %p82 = scmp.eq.s32.totalorder %s23, 1
      %p83 = scmp.ne.s32.totalorder %s78, %s80
      %p84 = scmp.eq.s32.totalorder %s23, 0
      %p85 = por %p83, %p84
      %p86 = scmp.ne.s32.totalorder %s78, %s80
      %p87 = scmp.eq.s32.totalorder %s28, 1
      %p88 = por %p86, %p87
      %p89 = scmp.ne.s32.totalorder %s80, %s81
      %p90 = scmp.eq.s32.totalorder %s28, 0
      %p91 = por %p89, %p90
      %p92 = scmp.ne.s32.totalorder %s80, %s81
      %p93 = scmp.eq.s32.totalorder %s29, 1
      %p94 = por %p92, %p93
      %p96 = scmp.ne.s32.totalorder %s81, %s95
      %p97 = scmp.eq.s32.totalorder %s29, 0
      %p98 = por %p96, %p97
      %s100 = sadd.s32 %s99, 1
      %p103 = scmp.eq.s32.totalorder %s23, 1
      %p104 = scmp.ne.s32.totalorder %s99, %s101
      %p105 = scmp.eq.s32.totalorder %s23, 0
      %p106 = por %p104, %p105
      %p107 = scmp.ne.s32.totalorder %s99, %s101
      %p108 = scmp.eq.s32.totalorder %s28, 1
      %p109 = por %p107, %p108
      %p110 = scmp.ne.s32.totalorder %s101, %s102
      %p111 = scmp.eq.s32.totalorder %s28, 0
      %p112 = por %p110, %p111
      %p113 = scmp.ne.s32.totalorder %s101, %s102
      %p114 = scmp.eq.s32.totalorder %s29, 1
      %p115 = por %p113, %p114
      %p117 = scmp.ne.s32.totalorder %s102, %s116
      %p118 = scmp.eq.s32.totalorder %s29, 0
      %p119 = por %p117, %p118
      %s121 = sadd.s32 %s120, 1
      %p124 = scmp.eq.s32.totalorder %s23, 1
      %p125 = scmp.ne.s32.totalorder %s120, %s122
      %p126 = scmp.eq.s32.totalorder %s23, 0
      %p127 = por %p125, %p126
      %p128 = scmp.ne.s32.totalorder %s120, %s122
      %p129 = scmp.eq.s32.totalorder %s28, 1
      %p130 = por %p128, %p129
      %p131 = scmp.ne.s32.totalorder %s122, %s123
      %p132 = scmp.eq.s32.totalorder %s28, 0
      %p133 = por %p131, %p132
      %p134 = scmp.ne.s32.totalorder %s122, %s123
      %p135 = scmp.eq.s32.totalorder %s29, 1
      %p136 = por %p134, %p135
      %p138 = scmp.ne.s32.totalorder %s123, %s137
      %p139 = scmp.eq.s32.totalorder %s29, 0
      %p140 = por %p138, %p139
      %s142 = sadd.s32 %s141, 1
      %p145 = scmp.eq.s32.totalorder %s23, 1
      %p146 = scmp.ne.s32.totalorder %s141, %s143
      %p147 = scmp.eq.s32.totalorder %s23, 0
      %p148 = por %p146, %p147
      %p149 = scmp.ne.s32.totalorder %s141, %s143
      %p150 = scmp.eq.s32.totalorder %s28, 1
      %p151 = por %p149, %p150
      %p152 = scmp.ne.s32.totalorder %s143, %s144
      %p153 = scmp.eq.s32.totalorder %s28, 0
      %p154 = por %p152, %p153
      %p155 = scmp.ne.s32.totalorder %s143, %s144
      %p156 = scmp.eq.s32.totalorder %s29, 1
      %p157 = por %p155, %p156
      %p159 = scmp.ne.s32.totalorder %s144, %s158
      %p160 = scmp.eq.s32.totalorder %s29, 0
      %p161 = por %p159, %p160
      %s163 = sadd.s32 %s162, 1
      %p166 = scmp.eq.s32.totalorder %s23, 1
      %p167 = scmp.ne.s32.totalorder %s162, %s164
      %p168 = scmp.eq.s32.totalorder %s23, 0
      %p169 = por %p167, %p168
      %p170 = scmp.ne.s32.totalorder %s162, %s164
      %p171 = scmp.eq.s32.totalorder %s28, 1
      %p172 = por %p170, %p171
      %p173 = scmp.ne.s32.totalorder %s164, %s165
      %p174 = scmp.eq.s32.totalorder %s28, 0
      %p175 = por %p173, %p174
      %p176 = scmp.ne.s32.totalorder %s164, %s165
      %p177 = scmp.eq.s32.totalorder %s29, 1
      %p178 = por %p176, %p177
      %p180 = scmp.ne.s32.totalorder %s165, %s179
      %p181 = scmp.eq.s32.totalorder %s29, 0
      %p182 = por %p180, %p181
      %s184 = sadd.s32 %s183, 1
      %p187 = scmp.eq.s32.totalorder %s23, 1
      %p188 = scmp.ne.s32.totalorder %s183, %s185
      %p189 = scmp.eq.s32.totalorder %s23, 0
      %p190 = por %p188, %p189
      %p191 = scmp.ne.s32.totalorder %s183, %s185
      %p192 = scmp.eq.s32.totalorder %s28, 1
      %p193 = por %p191, %p192
      %p194 = scmp.ne.s32.totalorder %s185, %s186
      %p195 = scmp.eq.s32.totalorder %s28, 0
      %p196 = por %p194, %p195
      %p197 = scmp.ne.s32.totalorder %s185, %s186
      %p198 = scmp.eq.s32.totalorder %s29, 1
      %p199 = por %p197, %p198
      %p201 = scmp.ne.s32.totalorder %s186, %s200
      %p202 = scmp.eq.s32.totalorder %s29, 0
      %p203 = por %p201, %p202
      %s204 = ssub.s32 %s23, %s30
      %p205 = scmp.eq.s32.totalorder %s204, 0
      %s207 = sadd.s32 %s206, 1
      %s208 = scalar_select %p205, %s206, %s207
      %p211 = pneg %p205
      %p212 = scmp.eq.s32.totalorder %s23, 1
      %p213 = por %p211, %p212
      %p214 = scmp.ne.s32.totalorder %s206, %s209
      %p215 = scmp.eq.s32.totalorder %s23, 0
      %p216 = por %p214, %p215
      %p217 = scmp.ne.s32.totalorder %s206, %s209
      %p218 = scmp.eq.s32.totalorder %s28, 1
      %p219 = por %p217, %p218
      %p220 = scmp.ne.s32.totalorder %s209, %s210
      %p221 = scmp.eq.s32.totalorder %s28, 0
      %p222 = por %p220, %p221
      %p223 = scmp.ne.s32.totalorder %s209, %s210
      %p224 = scmp.eq.s32.totalorder %s29, 1
      %p225 = por %p223, %p224
      %p227 = scmp.ne.s32.totalorder %s210, %s226
      %p228 = scmp.eq.s32.totalorder %s29, 0
      %p229 = por %p227, %p228
      %p230 = scmp.le.s32.totalorder 1, %s23
      %p231 = scmp.lt.s32.totalorder %s23, 3
      %p232 = pnand %p230, %p231
      %p233 = pneg %p232
      // Predicated region
      $region9: #{resblock_forward.1} parent=5 // pred_check
        _
      $region10: #{resblock_forward.1} parent=5 // pred_check_branch
        %235 = sbr.rel (%p232) target = $region12
      $region11: #{resblock_forward.1} parent=5 // pred_region
        %s236 = ssub.s32 %s23, 1
        // Predicated region
        $region13: #{resblock_forward.1} parent=11 // pred_check
          %p237 = pneg %p70
        $region14: #{resblock_forward.1} parent=11 // pred_check_branch
          %239 = sbr.rel (%p237) target = $region16
        $region15: #{resblock_forward.1} parent=11 // pred_region
          %241 = vsyncadd [#allocation6], 0
          %s242 = sshll.u32 %s1, 4
          %s243 = int_to_ptr.hbm [resolvable:$true] %s242
          %s244 = sshll.u32 [#allocation5], 4
          %s245 = int_to_ptr.vmem [resolvable:$true] %s244
          %250 = dma.hbm_to_vmem [thread:$0]  %s243, 16384, %s245, [#allocation6], 128, 128, 8
        $region16: #{resblock_forward.1} parent=11 // pred_fallthru
          _
        // Predicated region
        $region17: #{resblock_forward.1} parent=11 // pred_check
          %p251 = pneg %p91
        $region18: #{resblock_forward.1} parent=11 // pred_check_branch
          %253 = sbr.rel (%p251) target = $region20
        $region19: #{resblock_forward.1} parent=11 // pred_region
          %255 = vsyncadd [#allocation6], 0
          %s256 = sshll.u32 %s2, 4
          %s257 = int_to_ptr.hbm [resolvable:$true] %s256
          %s258 = sshll.u32 [#allocation7], 4
          %s259 = int_to_ptr.vmem [resolvable:$true] %s258
          %264 = dma.hbm_to_vmem [thread:$0]  %s257, 9216, %s259, [#allocation6], 64, 64, 4
        $region20: #{resblock_forward.1} parent=11 // pred_fallthru
          _
        // Predicated region
        $region21: #{resblock_forward.1} parent=11 // pred_check
          %p265 = pneg %p112
        $region22: #{resblock_forward.1} parent=11 // pred_check_branch
          %267 = sbr.rel (%p265) target = $region24
        $region23: #{resblock_forward.1} parent=11 // pred_region
          _
        $region24: #{resblock_forward.1} parent=11 // pred_fallthru
          _
        // Predicated region
        $region25: #{resblock_forward.1} parent=11 // pred_check
          %p268 = pneg %p133
        $region26: #{resblock_forward.1} parent=11 // pred_check_branch
          %270 = sbr.rel (%p268) target = $region28
        $region27: #{resblock_forward.1} parent=11 // pred_region
          %272 = vsyncadd [#allocation9], 0
          %s274 = sshll.u32 %s4, 4
          %s275 = int_to_ptr.hbm [resolvable:$true] %s274
          %s276 = sshll.u32 [#allocation8], 4
          %s277 = int_to_ptr.vmem [resolvable:$true] %s276
          %279 = dma.hbm_to_vmem [thread:$0]  %s275, 16, %s277, [#allocation9]
        $region28: #{resblock_forward.1} parent=11 // pred_fallthru
          _
        // Predicated region
        $region29: #{resblock_forward.1} parent=11 // pred_check
          %p280 = pneg %p154
        $region30: #{resblock_forward.1} parent=11 // pred_check_branch
          %282 = sbr.rel (%p280) target = $region32
        $region31: #{resblock_forward.1} parent=11 // pred_region
          %284 = vsyncadd [#allocation9], 0
          %s285 = sshll.u32 %s5, 4
          %s286 = int_to_ptr.hbm [resolvable:$true] %s285
          %s287 = sshll.u32 [#allocation10], 4
          %s288 = int_to_ptr.vmem [resolvable:$true] %s287
          %293 = dma.hbm_to_vmem [thread:$0]  %s286, 9216, %s288, [#allocation9], 64, 64, 4
        $region32: #{resblock_forward.1} parent=11 // pred_fallthru
          _
        // Predicated region
        $region33: #{resblock_forward.1} parent=11 // pred_check
          %p294 = pneg %p175
        $region34: #{resblock_forward.1} parent=11 // pred_check_branch
          %296 = sbr.rel (%p294) target = $region36
        $region35: #{resblock_forward.1} parent=11 // pred_region
          _
        $region36: #{resblock_forward.1} parent=11 // pred_fallthru
          _
        // Predicated region
        $region37: #{resblock_forward.1} parent=11 // pred_check
          %p297 = pneg %p196
        $region38: #{resblock_forward.1} parent=11 // pred_check_branch
          %299 = sbr.rel (%p297) target = $region40
        $region39: #{resblock_forward.1} parent=11 // pred_region
          %301 = vsyncadd [#allocation12], 0
          %s303 = sshll.u32 %s7, 4
          %s304 = int_to_ptr.hbm [resolvable:$true] %s303
          %s305 = sshll.u32 [#allocation11], 4
          %s306 = int_to_ptr.vmem [resolvable:$true] %s305
          %308 = dma.hbm_to_vmem [thread:$0]  %s304, 16, %s306, [#allocation12]
        $region40: #{resblock_forward.1} parent=11 // pred_fallthru
          _
      $region12: #{resblock_forward.1} parent=5 // pred_fallthru
        _
      %p309 = scmp.lt.s32.totalorder %s23, 2
      // Predicated region
      $region41: #{resblock_forward.1} parent=5 // pred_check
        %p310 = pneg %p309
      $region42: #{resblock_forward.1} parent=5 // pred_check_branch
        %312 = sbr.rel (%p310) target = $region44
      $region43: #{resblock_forward.1} parent=5 // pred_region
        // Predicated region
        $region45: #{resblock_forward.1} parent=43 // pred_check
          %p313 = pneg %p43
        $region46: #{resblock_forward.1} parent=43 // pred_check_branch
          %315 = sbr.rel (%p313) target = $region48
        $region47: #{resblock_forward.1} parent=43 // pred_region
          %s316 = sand.u32 %s33, 1
          %s317 = scalar_lea.sflag [#allocation3], %s316
          %s318 = sand.u32 %s33, 1
          %s319 = smul.addr %s318, 128
          %s320 = scalar_lea.vmem [#allocation2], %s319
          %s321 = smul.u32 2, %s23
          %323 = vsyncadd %s317, 0
          %s324 = smul.addr %s321, 8
          %s325 = smul.addr %s324, 8
          %s326 = scalar_lea.hbm %s0, %s325
          %s327 = sshll.u32 %s326, 4
          %s328 = int_to_ptr.hbm [resolvable:$true] %s327
          %s329 = sshll.u32 %s320, 4
          %s330 = int_to_ptr.vmem [resolvable:$true] %s329
          %335 = dma.hbm_to_vmem [thread:$0]  %s328, 2048, %s330, %s317, 128, 128, 8
        $region48: #{resblock_forward.1} parent=43 // pred_fallthru
          _
      $region44: #{resblock_forward.1} parent=5 // pred_fallthru
        _
      %p336 = scmp.le.s32.totalorder 1, %s23
      %p337 = scmp.lt.s32.totalorder %s23, 3
      %p338 = pnand %p336, %p337
      %p339 = pneg %p338
      // Predicated region
      $region49: #{resblock_forward.1} parent=5 // pred_check
        _
      $region50: #{resblock_forward.1} parent=5 // pred_check_branch
        %341 = sbr.rel (%p338) target = $region52
      $region51: #{resblock_forward.1} parent=5 // pred_region
        %s342 = ssub.s32 %s23, 1
        %s343 = sand.u32 %s36, 1
        %s344 = scalar_lea.sflag [#allocation3], %s343
        %s345 = sand.u32 %s36, 1
        %s346 = smul.addr %s345, 128
        %s347 = scalar_lea.vmem [#allocation2], %s346
        // Predicated region
        $region53: #{resblock_forward.1} parent=51 // pred_check
          %p348 = pneg %p49
        $region54: #{resblock_forward.1} parent=51 // pred_check_branch
          %350 = sbr.rel (%p348) target = $region56
        $region55: #{resblock_forward.1} parent=51 // pred_region
          %352 = dma.done %s344, 2048
        $region56: #{resblock_forward.1} parent=51 // pred_fallthru
          _
        // Predicated region
        $region57: #{resblock_forward.1} parent=51 // pred_check
          %p353 = pneg %p70
        $region58: #{resblock_forward.1} parent=51 // pred_check_branch
          %355 = sbr.rel (%p353) target = $region60
        $region59: #{resblock_forward.1} parent=51 // pred_region
          %357 = dma.done [#allocation6], 16384
        $region60: #{resblock_forward.1} parent=51 // pred_fallthru
          _
        // Predicated region
        $region61: #{resblock_forward.1} parent=51 // pred_check
          %p358 = pneg %p91
        $region62: #{resblock_forward.1} parent=51 // pred_check_branch
          %360 = sbr.rel (%p358) target = $region64
        $region63: #{resblock_forward.1} parent=51 // pred_region
          %362 = dma.done [#allocation6], 9216
        $region64: #{resblock_forward.1} parent=51 // pred_fallthru
          _
        // Predicated region
        $region65: #{resblock_forward.1} parent=51 // pred_check
          %p363 = pneg %p133
        $region66: #{resblock_forward.1} parent=51 // pred_check_branch
          %365 = sbr.rel (%p363) target = $region68
        $region67: #{resblock_forward.1} parent=51 // pred_region
          %367 = dma.done [#allocation9], 16
        $region68: #{resblock_forward.1} parent=51 // pred_fallthru
          _
        // Predicated region
        $region69: #{resblock_forward.1} parent=51 // pred_check
          %p368 = pneg %p154
        $region70: #{resblock_forward.1} parent=51 // pred_check_branch
          %370 = sbr.rel (%p368) target = $region72
        $region71: #{resblock_forward.1} parent=51 // pred_region
          %372 = dma.done [#allocation9], 9216
        $region72: #{resblock_forward.1} parent=51 // pred_fallthru
          _
        // Predicated region
        $region73: #{resblock_forward.1} parent=51 // pred_check
          %p373 = pneg %p196
        $region74: #{resblock_forward.1} parent=51 // pred_check_branch
          %375 = sbr.rel (%p373) target = $region76
        $region75: #{resblock_forward.1} parent=51 // pred_region
          %377 = dma.done [#allocation12], 16
        $region76: #{resblock_forward.1} parent=51 // pred_fallthru
          _
        %s378 = sand.u32 %s36, 1
        %s379 = scalar_lea.sflag [#allocation3], %s378
        %s380 = sand.u32 %s36, 1
        %s381 = smul.addr %s380, 128
        %s382 = scalar_lea.vmem [#allocation2], %s381
        %p383 = pneg %p49
        %p384 = pneg %p46
        %p385 = pneg %p70
        %p386 = pneg %p67
        %p387 = pneg %p91
        %p388 = pneg %p88
        %p389 = pneg %p112
        %p390 = pneg %p109
        %p391 = pneg %p133
        %p392 = pneg %p130
        %p393 = pneg %p154
        %p394 = pneg %p151
        %p395 = pneg %p175
        %p396 = pneg %p172
        %p397 = pneg %p196
        %p398 = pneg %p193
        %p399 = pneg %p222
        %p400 = pneg %p219
        %s401 = sand.u32 %s209, 1
        %s402 = scalar_lea.sflag [#allocation4], %s401
        %s403 = sand.u32 %s209, 1
        %s404 = smul.addr %s403, 128
        %s405 = scalar_lea.vmem [#allocation13], %s404
        %s406 = smul.u32 2, %s28
        %s407 = smul.u32 2, %s28
        %v408 = vld [vmem:[%s347] sm:$0xff]
        %v409 = vld [vmem:[%s347 + $0x8] sm:$0xff]
        %v410 = vld [vmem:[%s347 + $0x10] sm:$0xff]
        %v411 = vld [vmem:[%s347 + $0x18] sm:$0xff]
        %v412 = vld [vmem:[%s347 + $0x20] sm:$0xff]
        %v413 = vld [vmem:[%s347 + $0x28] sm:$0xff]
        %v414 = vld [vmem:[%s347 + $0x30] sm:$0xff]
        %v415 = vld [vmem:[%s347 + $0x38] sm:$0xff]
        %v416 = vld [vmem:[%s347 + $0x40] sm:$0xff]
        %v417 = vld [vmem:[%s347 + $0x48] sm:$0xff]
        %v418 = vld [vmem:[%s347 + $0x50] sm:$0xff]
        %v419 = vld [vmem:[%s347 + $0x58] sm:$0xff]
        %v420 = vld [vmem:[%s347 + $0x60] sm:$0xff]
        %v421 = vld [vmem:[%s347 + $0x68] sm:$0xff]
        %v422 = vld [vmem:[%s347 + $0x70] sm:$0xff]
        %v423 = vld [vmem:[%s347 + $0x78] sm:$0xff]
        %v424 = vpack.c.bf16 %v409, %v408
        %v425 = vpack.c.bf16 %v411, %v410
        %v426 = vpack.c.bf16 %v413, %v412
        %v427 = vpack.c.bf16 %v415, %v414
        %v428 = vpack.c.bf16 %v417, %v416
        %v429 = vpack.c.bf16 %v419, %v418
        %v430 = vpack.c.bf16 %v421, %v420
        %v431 = vpack.c.bf16 %v423, %v422
        %s432 = scalar_lea.vmem [#allocation7], 256
        %v433 = vld [vmem:[%s432] sm:$0xf]
        %v434 = vld [vmem:[%s432 + $0x4] sm:$0xf]
        %v435 = vld [vmem:[%s432 + $0x8] sm:$0xf]
        %v436 = vld [vmem:[%s432 + $0xc] sm:$0xf]
        %v437 = vld [vmem:[%s432 + $0x10] sm:$0xf]
        %v438 = vld [vmem:[%s432 + $0x14] sm:$0xf]
        %v439 = vld [vmem:[%s432 + $0x18] sm:$0xf]
        %v440 = vld [vmem:[%s432 + $0x1c] sm:$0xf]
        %v441 = vld [vmem:[%s432 + $0x20] sm:$0xf]
        %v442 = vld [vmem:[%s432 + $0x24] sm:$0xf]
        %v443 = vld [vmem:[%s432 + $0x28] sm:$0xf]
        %v444 = vld [vmem:[%s432 + $0x2c] sm:$0xf]
        %v445 = vld [vmem:[%s432 + $0x30] sm:$0xf]
        %v446 = vld [vmem:[%s432 + $0x34] sm:$0xf]
        %v447 = vld [vmem:[%s432 + $0x38] sm:$0xf]
        %v448 = vld [vmem:[%s432 + $0x3c] sm:$0xf]
        %v449 = vrot.slane %v408, 7
        %v450 = vrot.slane %v409, 7
        %v451 = vrot.slane %v410, 7
        %v452 = vrot.slane %v411, 7
        %v453 = vrot.slane %v412, 7
        %v454 = vrot.slane %v413, 7
        %v455 = vrot.slane %v414, 7
        %v456 = vrot.slane %v415, 7
        %v457 = vrot.slane %v416, 7
        %v458 = vrot.slane %v417, 7
        %v459 = vrot.slane %v418, 7
        %v460 = vrot.slane %v419, 7
        %v461 = vrot.slane %v420, 7
        %v462 = vrot.slane %v421, 7
        %v463 = vrot.slane %v422, 7
        %v464 = vrot.slane %v423, 7
        %v465 = vlaneseq
        %v466 = vshrl.u32 %v465, 7
        %vm467 = vcmp.lt.s32.totalorder %v466, 1
        %v468 = vsel %vm467, %v463, %v464
        %v469 = vsel %vm467, %v462, %v463
        %v470 = vsel %vm467, %v461, %v462
        %v471 = vsel %vm467, %v460, %v461
        %v472 = vsel %vm467, %v459, %v460
        %v473 = vsel %vm467, %v458, %v459
        %v474 = vsel %vm467, %v457, %v458
        %v475 = vsel %vm467, %v456, %v457
        %v476 = vsel %vm467, %v455, %v456
        %v477 = vsel %vm467, %v454, %v455
        %v478 = vsel %vm467, %v453, %v454
        %v479 = vsel %vm467, %v452, %v453
        %v480 = vsel %vm467, %v451, %v452
        %v481 = vsel %vm467, %v450, %v451
        %v482 = vsel %vm467, %v449, %v450
        %v483 = vsel %vm467, %v464, %v449
        %v484 = vld [vmem:[#allocation5] sm:$0xff]
        %v485 = vld [vmem:[#allocation5 + $0x8] sm:$0xff]
        %v486 = vld [vmem:[#allocation5 + $0x10] sm:$0xff]
        %v487 = vld [vmem:[#allocation5 + $0x18] sm:$0xff]
        %v488 = vld [vmem:[#allocation5 + $0x20] sm:$0xff]
        %v489 = vld [vmem:[#allocation5 + $0x28] sm:$0xff]
        %v490 = vld [vmem:[#allocation5 + $0x30] sm:$0xff]
        %v491 = vld [vmem:[#allocation5 + $0x38] sm:$0xff]
        %v492 = vld [vmem:[#allocation5 + $0x40] sm:$0xff]
        %v493 = vld [vmem:[#allocation5 + $0x48] sm:$0xff]
        %v494 = vld [vmem:[#allocation5 + $0x50] sm:$0xff]
        %v495 = vld [vmem:[#allocation5 + $0x58] sm:$0xff]
        %v496 = vld [vmem:[#allocation5 + $0x60] sm:$0xff]
        %v497 = vld [vmem:[#allocation5 + $0x68] sm:$0xff]
        %v498 = vld [vmem:[#allocation5 + $0x70] sm:$0xff]
        %v499 = vld [vmem:[#allocation5 + $0x78] sm:$0xff]
        %501 = vset.pattern.permute.xlu0 0
        %502 = vperm.xlu0 %501, %v484
        %v503 = vpop.permute.xlu0 %502
        %506 = vset.pattern.permute.xlu0 0
        %507 = vperm.xlu0 %506, %v485
        %v508 = vpop.permute.xlu0 %507
        %511 = vset.pattern.permute.xlu0 0
        %512 = vperm.xlu0 %511, %v486
        %v513 = vpop.permute.xlu0 %512
        %516 = vset.pattern.permute.xlu0 0
        %517 = vperm.xlu0 %516, %v487
        %v518 = vpop.permute.xlu0 %517
        %521 = vset.pattern.permute.xlu0 0
        %522 = vperm.xlu0 %521, %v488
        %v523 = vpop.permute.xlu0 %522
        %526 = vset.pattern.permute.xlu0 0
        %527 = vperm.xlu0 %526, %v489
        %v528 = vpop.permute.xlu0 %527
        %531 = vset.pattern.permute.xlu0 0
        %532 = vperm.xlu0 %531, %v490
        %v533 = vpop.permute.xlu0 %532
        %536 = vset.pattern.permute.xlu0 0
        %537 = vperm.xlu0 %536, %v491
        %v538 = vpop.permute.xlu0 %537
        %541 = vset.pattern.permute.xlu0 0
        %542 = vperm.xlu0 %541, %v492
        %v543 = vpop.permute.xlu0 %542
        %546 = vset.pattern.permute.xlu0 0
        %547 = vperm.xlu0 %546, %v493
        %v548 = vpop.permute.xlu0 %547
        %551 = vset.pattern.permute.xlu0 0
        %552 = vperm.xlu0 %551, %v494
        %v553 = vpop.permute.xlu0 %552
        %556 = vset.pattern.permute.xlu0 0
        %557 = vperm.xlu0 %556, %v495
        %v558 = vpop.permute.xlu0 %557
        %561 = vset.pattern.permute.xlu0 0
        %562 = vperm.xlu0 %561, %v496
        %v563 = vpop.permute.xlu0 %562
        %566 = vset.pattern.permute.xlu0 0
        %567 = vperm.xlu0 %566, %v497
        %v568 = vpop.permute.xlu0 %567
        %571 = vset.pattern.permute.xlu0 0
        %572 = vperm.xlu0 %571, %v498
        %v573 = vpop.permute.xlu0 %572
        %576 = vset.pattern.permute.xlu0 0
        %577 = vperm.xlu0 %576, %v499
        %v578 = vpop.permute.xlu0 %577
        %v580 = vmul.f32 %v468, %v503
        %v581 = vmul.f32 %v483, %v508
        %v582 = vmul.f32 %v482, %v513
        %v583 = vmul.f32 %v481, %v518
        %v584 = vmul.f32 %v480, %v523
        %v585 = vmul.f32 %v479, %v528
        %v586 = vmul.f32 %v478, %v533
        %v587 = vmul.f32 %v477, %v538
        %v588 = vmul.f32 %v476, %v543
        %v589 = vmul.f32 %v475, %v548
        %v590 = vmul.f32 %v474, %v553
        %v591 = vmul.f32 %v473, %v558
        %v592 = vmul.f32 %v472, %v563
        %v593 = vmul.f32 %v471, %v568
        %v594 = vmul.f32 %v470, %v573
        %v595 = vmul.f32 %v469, %v578
        %v596 = vpack.c.bf16 %v581, %v580
        %v597 = vpack.c.bf16 %v583, %v582
        %v598 = vpack.c.bf16 %v585, %v584
        %v599 = vpack.c.bf16 %v587, %v586
        %v600 = vpack.c.bf16 %v589, %v588
        %v601 = vpack.c.bf16 %v591, %v590
        %v602 = vpack.c.bf16 %v593, %v592
        %v603 = vpack.c.bf16 %v595, %v594
        %v604 = vld [vmem:[#allocation7] sm:$0xf]
        %v605 = vld [vmem:[#allocation7 + $0x4] sm:$0xf]
        %v606 = vld [vmem:[#allocation7 + $0x8] sm:$0xf]
        %v607 = vld [vmem:[#allocation7 + $0xc] sm:$0xf]
        %v608 = vld [vmem:[#allocation7 + $0x10] sm:$0xf]
        %v609 = vld [vmem:[#allocation7 + $0x14] sm:$0xf]
        %v610 = vld [vmem:[#allocation7 + $0x18] sm:$0xf]
        %v611 = vld [vmem:[#allocation7 + $0x1c] sm:$0xf]
        %v612 = vld [vmem:[#allocation7 + $0x20] sm:$0xf]
        %v613 = vld [vmem:[#allocation7 + $0x24] sm:$0xf]
        %v614 = vld [vmem:[#allocation7 + $0x28] sm:$0xf]
        %v615 = vld [vmem:[#allocation7 + $0x2c] sm:$0xf]
        %v616 = vld [vmem:[#allocation7 + $0x30] sm:$0xf]
        %v617 = vld [vmem:[#allocation7 + $0x34] sm:$0xf]
        %v618 = vld [vmem:[#allocation7 + $0x38] sm:$0xf]
        %v619 = vld [vmem:[#allocation7 + $0x3c] sm:$0xf]
        %v636 = vunpack.c.l.b16 %v604
        %v637 = vunpack.c.l.b16 %v605
        %v638 = vunpack.c.l.b16 %v606
        %v639 = vunpack.c.l.b16 %v607
        %v640 = vunpack.c.l.b16 %v608
        %v641 = vunpack.c.l.b16 %v609
        %v642 = vunpack.c.l.b16 %v610
        %v643 = vunpack.c.l.b16 %v611
        %v644 = vunpack.c.l.b16 %v612
        %v645 = vunpack.c.l.b16 %v613
        %v646 = vunpack.c.l.b16 %v614
        %v647 = vunpack.c.l.b16 %v615
        %v648 = vunpack.c.l.b16 %v616
        %v649 = vunpack.c.l.b16 %v617
        %v650 = vunpack.c.l.b16 %v618
        %v651 = vunpack.c.l.b16 %v619
        %v652 = vpack.c.b16 %v637, %v636
        %v653 = vpack.c.b16 %v639, %v638
        %v654 = vpack.c.b16 %v641, %v640
        %v655 = vpack.c.b16 %v643, %v642
        %v656 = vpack.c.b16 %v645, %v644
        %v657 = vpack.c.b16 %v647, %v646
        %v658 = vpack.c.b16 %v649, %v648
        %v659 = vpack.c.b16 %v651, %v650
        %668 = vmatpush.bf16.msra.mxu0 %v659
        %669 = vmatpush.bf16.msra.mxu0 %v658
        %670 = vmatpush.bf16.msra.mxu0 %v657
        %671 = vmatpush.bf16.msra.mxu0 %v656
        %672 = vmatpush.bf16.msra.mxu0 %v655
        %673 = vmatpush.bf16.msra.mxu0 %v654
        %674 = vmatpush.bf16.msra.mxu0 %v653
        %675 = vmatpush.bf16.msra.mxu0 %v652
        %676 = vmatmul.bf16.gmra.mxu0 %v596
        %v677 = vpop.f32.mrf.mxu0
        %v678 = vadd.f32 0.0, %v677
        %v679 = vpop.f32.mrf.mxu0
        %v680 = vadd.f32 0.0, %v679
        %681 = vmatmul.bf16.gmra.mxu0 %v597
        %v682 = vpop.f32.mrf.mxu0
        %v683 = vadd.f32 0.0, %v682
        %v684 = vpop.f32.mrf.mxu0
        %v685 = vadd.f32 0.0, %v684
        %686 = vmatmul.bf16.gmra.mxu0 %v598
        %v687 = vpop.f32.mrf.mxu0
        %v688 = vadd.f32 0.0, %v687
        %v689 = vpop.f32.mrf.mxu0
        %v690 = vadd.f32 0.0, %v689
        %691 = vmatmul.bf16.gmra.mxu0 %v599
        %v692 = vpop.f32.mrf.mxu0
        %v693 = vadd.f32 0.0, %v692
        %v694 = vpop.f32.mrf.mxu0
        %v695 = vadd.f32 0.0, %v694
        %696 = vmatmul.bf16.gmra.mxu0 %v600
        %v697 = vpop.f32.mrf.mxu0
        %v698 = vadd.f32 0.0, %v697
        %v699 = vpop.f32.mrf.mxu0
        %v700 = vadd.f32 0.0, %v699
        %701 = vmatmul.bf16.gmra.mxu0 %v601
        %v702 = vpop.f32.mrf.mxu0
        %v703 = vadd.f32 0.0, %v702
        %v704 = vpop.f32.mrf.mxu0
        %v705 = vadd.f32 0.0, %v704
        %706 = vmatmul.bf16.gmra.mxu0 %v602
        %v707 = vpop.f32.mrf.mxu0
        %v708 = vadd.f32 0.0, %v707
        %v709 = vpop.f32.mrf.mxu0
        %v710 = vadd.f32 0.0, %v709
        %711 = vmatmul.bf16.gmra.mxu0 %v603
        %v712 = vpop.f32.mrf.mxu0
        %v713 = vadd.f32 0.0, %v712
        %v714 = vpop.f32.mrf.mxu0
        %v715 = vadd.f32 0.0, %v714
        %716 = vdwg.mxu0
        %v733 = vunpack.c.l.b16 %v433
        %v734 = vunpack.c.l.b16 %v434
        %v735 = vunpack.c.l.b16 %v435
        %v736 = vunpack.c.l.b16 %v436
        %v737 = vunpack.c.l.b16 %v437
        %v738 = vunpack.c.l.b16 %v438
        %v739 = vunpack.c.l.b16 %v439
        %v740 = vunpack.c.l.b16 %v440
        %v741 = vunpack.c.l.b16 %v441
        %v742 = vunpack.c.l.b16 %v442
        %v743 = vunpack.c.l.b16 %v443
        %v744 = vunpack.c.l.b16 %v444
        %v745 = vunpack.c.l.b16 %v445
        %v746 = vunpack.c.l.b16 %v446
        %v747 = vunpack.c.l.b16 %v447
        %v748 = vunpack.c.l.b16 %v448
        %v749 = vpack.c.b16 %v734, %v733
        %v750 = vpack.c.b16 %v736, %v735
        %v751 = vpack.c.b16 %v738, %v737
        %v752 = vpack.c.b16 %v740, %v739
        %v753 = vpack.c.b16 %v742, %v741
        %v754 = vpack.c.b16 %v744, %v743
        %v755 = vpack.c.b16 %v746, %v745
        %v756 = vpack.c.b16 %v748, %v747
        %765 = vmatpush.bf16.msra.mxu0 %v756
        %766 = vmatpush.bf16.msra.mxu0 %v755
        %767 = vmatpush.bf16.msra.mxu0 %v754
        %768 = vmatpush.bf16.msra.mxu0 %v753
        %769 = vmatpush.bf16.msra.mxu0 %v752
        %770 = vmatpush.bf16.msra.mxu0 %v751
        %771 = vmatpush.bf16.msra.mxu0 %v750
        %772 = vmatpush.bf16.msra.mxu0 %v749
        %773 = vmatmul.bf16.gmra.mxu0 %v424
        %v774 = vpop.f32.mrf.mxu0
        %v775 = vadd.f32 %v678, %v774
        %v776 = vpop.f32.mrf.mxu0
        %v777 = vadd.f32 %v680, %v776
        %778 = vmatmul.bf16.gmra.mxu0 %v425
        %v779 = vpop.f32.mrf.mxu0
        %v780 = vadd.f32 %v683, %v779
        %v781 = vpop.f32.mrf.mxu0
        %v782 = vadd.f32 %v685, %v781
        %783 = vmatmul.bf16.gmra.mxu0 %v426
        %v784 = vpop.f32.mrf.mxu0
        %v785 = vadd.f32 %v688, %v784
        %v786 = vpop.f32.mrf.mxu0
        %v787 = vadd.f32 %v690, %v786
        %788 = vmatmul.bf16.gmra.mxu0 %v427
        %v789 = vpop.f32.mrf.mxu0
        %v790 = vadd.f32 %v693, %v789
        %v791 = vpop.f32.mrf.mxu0
        %v792 = vadd.f32 %v695, %v791
        %793 = vmatmul.bf16.gmra.mxu0 %v428
        %v794 = vpop.f32.mrf.mxu0
        %v795 = vadd.f32 %v698, %v794
        %v796 = vpop.f32.mrf.mxu0
        %v797 = vadd.f32 %v700, %v796
        %798 = vmatmul.bf16.gmra.mxu0 %v429
        %v799 = vpop.f32.mrf.mxu0
        %v800 = vadd.f32 %v703, %v799
        %v801 = vpop.f32.mrf.mxu0
        %v802 = vadd.f32 %v705, %v801
        %803 = vmatmul.bf16.gmra.mxu0 %v430
        %v804 = vpop.f32.mrf.mxu0
        %v805 = vadd.f32 %v708, %v804
        %v806 = vpop.f32.mrf.mxu0
        %v807 = vadd.f32 %v710, %v806
        %808 = vmatmul.bf16.gmra.mxu0 %v431
        %v809 = vpop.f32.mrf.mxu0
        %v810 = vadd.f32 %v713, %v809
        %v811 = vpop.f32.mrf.mxu0
        %v812 = vadd.f32 %v715, %v811
        %813 = vdwg.mxu0
        %s814 = scalar_lea.vmem [#allocation5], 128
        %v815 = vld [vmem:[%s814] sm:$0xff]
        %v816 = vld [vmem:[%s814 + $0x8] sm:$0xff]
        %v817 = vld [vmem:[%s814 + $0x10] sm:$0xff]
        %v818 = vld [vmem:[%s814 + $0x18] sm:$0xff]
        %v819 = vld [vmem:[%s814 + $0x20] sm:$0xff]
        %v820 = vld [vmem:[%s814 + $0x28] sm:$0xff]
        %v821 = vld [vmem:[%s814 + $0x30] sm:$0xff]
        %v822 = vld [vmem:[%s814 + $0x38] sm:$0xff]
        %v823 = vld [vmem:[%s814 + $0x40] sm:$0xff]
        %v824 = vld [vmem:[%s814 + $0x48] sm:$0xff]
        %v825 = vld [vmem:[%s814 + $0x50] sm:$0xff]
        %v826 = vld [vmem:[%s814 + $0x58] sm:$0xff]
        %v827 = vld [vmem:[%s814 + $0x60] sm:$0xff]
        %v828 = vld [vmem:[%s814 + $0x68] sm:$0xff]
        %v829 = vld [vmem:[%s814 + $0x70] sm:$0xff]
        %v830 = vld [vmem:[%s814 + $0x78] sm:$0xff]
        %832 = vset.pattern.permute.xlu0 0
        %833 = vperm.xlu0 %832, %v815
        %v834 = vpop.permute.xlu0 %833
        %837 = vset.pattern.permute.xlu0 0
        %838 = vperm.xlu0 %837, %v816
        %v839 = vpop.permute.xlu0 %838
        %842 = vset.pattern.permute.xlu0 0
        %843 = vperm.xlu0 %842, %v817
        %v844 = vpop.permute.xlu0 %843
        %847 = vset.pattern.permute.xlu0 0
        %848 = vperm.xlu0 %847, %v818
        %v849 = vpop.permute.xlu0 %848
        %852 = vset.pattern.permute.xlu0 0
        %853 = vperm.xlu0 %852, %v819
        %v854 = vpop.permute.xlu0 %853
        %857 = vset.pattern.permute.xlu0 0
        %858 = vperm.xlu0 %857, %v820
        %v859 = vpop.permute.xlu0 %858
        %862 = vset.pattern.permute.xlu0 0
        %863 = vperm.xlu0 %862, %v821
        %v864 = vpop.permute.xlu0 %863
        %867 = vset.pattern.permute.xlu0 0
        %868 = vperm.xlu0 %867, %v822
        %v869 = vpop.permute.xlu0 %868
        %872 = vset.pattern.permute.xlu0 0
        %873 = vperm.xlu0 %872, %v823
        %v874 = vpop.permute.xlu0 %873
        %877 = vset.pattern.permute.xlu0 0
        %878 = vperm.xlu0 %877, %v824
        %v879 = vpop.permute.xlu0 %878
        %882 = vset.pattern.permute.xlu0 0
        %883 = vperm.xlu0 %882, %v825
        %v884 = vpop.permute.xlu0 %883
        %887 = vset.pattern.permute.xlu0 0
        %888 = vperm.xlu0 %887, %v826
        %v889 = vpop.permute.xlu0 %888
        %892 = vset.pattern.permute.xlu0 0
        %893 = vperm.xlu0 %892, %v827
        %v894 = vpop.permute.xlu0 %893
        %897 = vset.pattern.permute.xlu0 0
        %898 = vperm.xlu0 %897, %v828
        %v899 = vpop.permute.xlu0 %898
        %902 = vset.pattern.permute.xlu0 0
        %903 = vperm.xlu0 %902, %v829
        %v904 = vpop.permute.xlu0 %903
        %907 = vset.pattern.permute.xlu0 0
        %908 = vperm.xlu0 %907, %v830
        %v909 = vpop.permute.xlu0 %908
        %v911 = vmul.f32 %v423, %v834
        %v912 = vmul.f32 %v408, %v839
        %v913 = vmul.f32 %v409, %v844
        %v914 = vmul.f32 %v410, %v849
        %v915 = vmul.f32 %v411, %v854
        %v916 = vmul.f32 %v412, %v859
        %v917 = vmul.f32 %v413, %v864
        %v918 = vmul.f32 %v414, %v869
        %v919 = vmul.f32 %v415, %v874
        %v920 = vmul.f32 %v416, %v879
        %v921 = vmul.f32 %v417, %v884
        %v922 = vmul.f32 %v418, %v889
        %v923 = vmul.f32 %v419, %v894
        %v924 = vmul.f32 %v420, %v899
        %v925 = vmul.f32 %v421, %v904
        %v926 = vmul.f32 %v422, %v909
        %v927 = vpack.c.bf16 %v912, %v911
        %v928 = vpack.c.bf16 %v914, %v913
        %v929 = vpack.c.bf16 %v916, %v915
        %v930 = vpack.c.bf16 %v918, %v917
        %v931 = vpack.c.bf16 %v920, %v919
        %v932 = vpack.c.bf16 %v922, %v921
        %v933 = vpack.c.bf16 %v924, %v923
        %v934 = vpack.c.bf16 %v926, %v925
        %s935 = scalar_lea.vmem [#allocation7], 64
        %v936 = vld [vmem:[%s935] sm:$0xf]
        %v937 = vld [vmem:[%s935 + $0x4] sm:$0xf]
        %v938 = vld [vmem:[%s935 + $0x8] sm:$0xf]
        %v939 = vld [vmem:[%s935 + $0xc] sm:$0xf]
        %v940 = vld [vmem:[%s935 + $0x10] sm:$0xf]
        %v941 = vld [vmem:[%s935 + $0x14] sm:$0xf]
        %v942 = vld [vmem:[%s935 + $0x18] sm:$0xf]
        %v943 = vld [vmem:[%s935 + $0x1c] sm:$0xf]
        %v944 = vld [vmem:[%s935 + $0x20] sm:$0xf]
        %v945 = vld [vmem:[%s935 + $0x24] sm:$0xf]
        %v946 = vld [vmem:[%s935 + $0x28] sm:$0xf]
        %v947 = vld [vmem:[%s935 + $0x2c] sm:$0xf]
        %v948 = vld [vmem:[%s935 + $0x30] sm:$0xf]
        %v949 = vld [vmem:[%s935 + $0x34] sm:$0xf]
        %v950 = vld [vmem:[%s935 + $0x38] sm:$0xf]
        %v951 = vld [vmem:[%s935 + $0x3c] sm:$0xf]
        %v968 = vunpack.c.l.b16 %v936
        %v969 = vunpack.c.l.b16 %v937
        %v970 = vunpack.c.l.b16 %v938
        %v971 = vunpack.c.l.b16 %v939
        %v972 = vunpack.c.l.b16 %v940
        %v973 = vunpack.c.l.b16 %v941
        %v974 = vunpack.c.l.b16 %v942
        %v975 = vunpack.c.l.b16 %v943
        %v976 = vunpack.c.l.b16 %v944
        %v977 = vunpack.c.l.b16 %v945
        %v978 = vunpack.c.l.b16 %v946
        %v979 = vunpack.c.l.b16 %v947
        %v980 = vunpack.c.l.b16 %v948
        %v981 = vunpack.c.l.b16 %v949
        %v982 = vunpack.c.l.b16 %v950
        %v983 = vunpack.c.l.b16 %v951
        %v984 = vpack.c.b16 %v969, %v968
        %v985 = vpack.c.b16 %v971, %v970
        %v986 = vpack.c.b16 %v973, %v972
        %v987 = vpack.c.b16 %v975, %v974
        %v988 = vpack.c.b16 %v977, %v976
        %v989 = vpack.c.b16 %v979, %v978
        %v990 = vpack.c.b16 %v981, %v980
        %v991 = vpack.c.b16 %v983, %v982
        %1000 = vmatpush.bf16.msra.mxu0 %v991
        %1001 = vmatpush.bf16.msra.mxu0 %v990
        %1002 = vmatpush.bf16.msra.mxu0 %v989
        %1003 = vmatpush.bf16.msra.mxu0 %v988
        %1004 = vmatpush.bf16.msra.mxu0 %v987
        %1005 = vmatpush.bf16.msra.mxu0 %v986
        %1006 = vmatpush.bf16.msra.mxu0 %v985
        %1007 = vmatpush.bf16.msra.mxu0 %v984
        %1008 = vmatmul.bf16.gmra.mxu0 %v927
        %v1009 = vpop.f32.mrf.mxu0
        %v1010 = vadd.f32 0.0, %v1009
        %v1011 = vpop.f32.mrf.mxu0
        %v1012 = vadd.f32 0.0, %v1011
        %1013 = vmatmul.bf16.gmra.mxu0 %v928
        %v1014 = vpop.f32.mrf.mxu0
        %v1015 = vadd.f32 0.0, %v1014
        %v1016 = vpop.f32.mrf.mxu0
        %v1017 = vadd.f32 0.0, %v1016
        %1018 = vmatmul.bf16.gmra.mxu0 %v929
        %v1019 = vpop.f32.mrf.mxu0
        %v1020 = vadd.f32 0.0, %v1019
        %v1021 = vpop.f32.mrf.mxu0
        %v1022 = vadd.f32 0.0, %v1021
        %1023 = vmatmul.bf16.gmra.mxu0 %v930
        %v1024 = vpop.f32.mrf.mxu0
        %v1025 = vadd.f32 0.0, %v1024
        %v1026 = vpop.f32.mrf.mxu0
        %v1027 = vadd.f32 0.0, %v1026
        %1028 = vmatmul.bf16.gmra.mxu0 %v931
        %v1029 = vpop.f32.mrf.mxu0
        %v1030 = vadd.f32 0.0, %v1029
        %v1031 = vpop.f32.mrf.mxu0
        %v1032 = vadd.f32 0.0, %v1031
        %1033 = vmatmul.bf16.gmra.mxu0 %v932
        %v1034 = vpop.f32.mrf.mxu0
        %v1035 = vadd.f32 0.0, %v1034
        %v1036 = vpop.f32.mrf.mxu0
        %v1037 = vadd.f32 0.0, %v1036
        %1038 = vmatmul.bf16.gmra.mxu0 %v933
        %v1039 = vpop.f32.mrf.mxu0
        %v1040 = vadd.f32 0.0, %v1039
        %v1041 = vpop.f32.mrf.mxu0
        %v1042 = vadd.f32 0.0, %v1041
        %1043 = vmatmul.bf16.gmra.mxu0 %v934
        %v1044 = vpop.f32.mrf.mxu0
        %v1045 = vadd.f32 0.0, %v1044
        %v1046 = vpop.f32.mrf.mxu0
        %v1047 = vadd.f32 0.0, %v1046
        %1048 = vdwg.mxu0
        %v1049 = vadd.f32 %v775, %v1010
        %v1050 = vadd.f32 %v777, %v1012
        %v1051 = vadd.f32 %v780, %v1015
        %v1052 = vadd.f32 %v782, %v1017
        %v1053 = vadd.f32 %v785, %v1020
        %v1054 = vadd.f32 %v787, %v1022
        %v1055 = vadd.f32 %v790, %v1025
        %v1056 = vadd.f32 %v792, %v1027
        %v1057 = vadd.f32 %v795, %v1030
        %v1058 = vadd.f32 %v797, %v1032
        %v1059 = vadd.f32 %v800, %v1035
        %v1060 = vadd.f32 %v802, %v1037
        %v1061 = vadd.f32 %v805, %v1040
        %v1062 = vadd.f32 %v807, %v1042
        %v1063 = vadd.f32 %v810, %v1045
        %v1064 = vadd.f32 %v812, %v1047
        %v1065 = vrot.slane %v408, 1
        %v1066 = vrot.slane %v409, 1
        %v1067 = vrot.slane %v410, 1
        %v1068 = vrot.slane %v411, 1
        %v1069 = vrot.slane %v412, 1
        %v1070 = vrot.slane %v413, 1
        %v1071 = vrot.slane %v414, 1
        %v1072 = vrot.slane %v415, 1
        %v1073 = vrot.slane %v416, 1
        %v1074 = vrot.slane %v417, 1
        %v1075 = vrot.slane %v418, 1
        %v1076 = vrot.slane %v419, 1
        %v1077 = vrot.slane %v420, 1
        %v1078 = vrot.slane %v421, 1
        %v1079 = vrot.slane %v422, 1
        %v1080 = vrot.slane %v423, 1
        %vm1081 = vcmp.lt.s32.totalorder %v466, 7
        %v1082 = vsel %vm1081, %v1079, %v1080
        %v1083 = vsel %vm1081, %v1078, %v1079
        %v1084 = vsel %vm1081, %v1077, %v1078
        %v1085 = vsel %vm1081, %v1076, %v1077
        %v1086 = vsel %vm1081, %v1075, %v1076
        %v1087 = vsel %vm1081, %v1074, %v1075
        %v1088 = vsel %vm1081, %v1073, %v1074
        %v1089 = vsel %vm1081, %v1072, %v1073
        %v1090 = vsel %vm1081, %v1071, %v1072
        %v1091 = vsel %vm1081, %v1070, %v1071
        %v1092 = vsel %vm1081, %v1069, %v1070
        %v1093 = vsel %vm1081, %v1068, %v1069
        %v1094 = vsel %vm1081, %v1067, %v1068
        %v1095 = vsel %vm1081, %v1066, %v1067
        %v1096 = vsel %vm1081, %v1065, %v1066
        %v1097 = vsel %vm1081, %v1080, %v1065
        %s1098 = scalar_lea.vmem [#allocation5], 256
        %v1099 = vld [vmem:[%s1098] sm:$0xff]
        %v1100 = vld [vmem:[%s1098 + $0x8] sm:$0xff]
        %v1101 = vld [vmem:[%s1098 + $0x10] sm:$0xff]
        %v1102 = vld [vmem:[%s1098 + $0x18] sm:$0xff]
        %v1103 = vld [vmem:[%s1098 + $0x20] sm:$0xff]
        %v1104 = vld [vmem:[%s1098 + $0x28] sm:$0xff]
        %v1105 = vld [vmem:[%s1098 + $0x30] sm:$0xff]
        %v1106 = vld [vmem:[%s1098 + $0x38] sm:$0xff]
        %v1107 = vld [vmem:[%s1098 + $0x40] sm:$0xff]
        %v1108 = vld [vmem:[%s1098 + $0x48] sm:$0xff]
        %v1109 = vld [vmem:[%s1098 + $0x50] sm:$0xff]
        %v1110 = vld [vmem:[%s1098 + $0x58] sm:$0xff]
        %v1111 = vld [vmem:[%s1098 + $0x60] sm:$0xff]
        %v1112 = vld [vmem:[%s1098 + $0x68] sm:$0xff]
        %v1113 = vld [vmem:[%s1098 + $0x70] sm:$0xff]
        %v1114 = vld [vmem:[%s1098 + $0x78] sm:$0xff]
        %1116 = vset.pattern.permute.xlu0 0
        %1117 = vperm.xlu0 %1116, %v1099
        %v1118 = vpop.permute.xlu0 %1117
        %1121 = vset.pattern.permute.xlu0 0
        %1122 = vperm.xlu0 %1121, %v1100
        %v1123 = vpop.permute.xlu0 %1122
        %1126 = vset.pattern.permute.xlu0 0
        %1127 = vperm.xlu0 %1126, %v1101
        %v1128 = vpop.permute.xlu0 %1127
        %1131 = vset.pattern.permute.xlu0 0
        %1132 = vperm.xlu0 %1131, %v1102
        %v1133 = vpop.permute.xlu0 %1132
        %1136 = vset.pattern.permute.xlu0 0
        %1137 = vperm.xlu0 %1136, %v1103
        %v1138 = vpop.permute.xlu0 %1137
        %1141 = vset.pattern.permute.xlu0 0
        %1142 = vperm.xlu0 %1141, %v1104
        %v1143 = vpop.permute.xlu0 %1142
        %1146 = vset.pattern.permute.xlu0 0
        %1147 = vperm.xlu0 %1146, %v1105
        %v1148 = vpop.permute.xlu0 %1147
        %1151 = vset.pattern.permute.xlu0 0
        %1152 = vperm.xlu0 %1151, %v1106
        %v1153 = vpop.permute.xlu0 %1152
        %1156 = vset.pattern.permute.xlu0 0
        %1157 = vperm.xlu0 %1156, %v1107
        %v1158 = vpop.permute.xlu0 %1157
        %1161 = vset.pattern.permute.xlu0 0
        %1162 = vperm.xlu0 %1161, %v1108
        %v1163 = vpop.permute.xlu0 %1162
        %1166 = vset.pattern.permute.xlu0 0
        %1167 = vperm.xlu0 %1166, %v1109
        %v1168 = vpop.permute.xlu0 %1167
        %1171 = vset.pattern.permute.xlu0 0
        %1172 = vperm.xlu0 %1171, %v1110
        %v1173 = vpop.permute.xlu0 %1172
        %1176 = vset.pattern.permute.xlu0 0
        %1177 = vperm.xlu0 %1176, %v1111
        %v1178 = vpop.permute.xlu0 %1177
        %1181 = vset.pattern.permute.xlu0 0
        %1182 = vperm.xlu0 %1181, %v1112
        %v1183 = vpop.permute.xlu0 %1182
        %1186 = vset.pattern.permute.xlu0 0
        %1187 = vperm.xlu0 %1186, %v1113
        %v1188 = vpop.permute.xlu0 %1187
        %1191 = vset.pattern.permute.xlu0 0
        %1192 = vperm.xlu0 %1191, %v1114
        %v1193 = vpop.permute.xlu0 %1192
        %v1195 = vmul.f32 %v1097, %v1118
        %v1196 = vmul.f32 %v1096, %v1123
        %v1197 = vmul.f32 %v1095, %v1128
        %v1198 = vmul.f32 %v1094, %v1133
        %v1199 = vmul.f32 %v1093, %v1138
        %v1200 = vmul.f32 %v1092, %v1143
        %v1201 = vmul.f32 %v1091, %v1148
        %v1202 = vmul.f32 %v1090, %v1153
        %v1203 = vmul.f32 %v1089, %v1158
        %v1204 = vmul.f32 %v1088, %v1163
        %v1205 = vmul.f32 %v1087, %v1168
        %v1206 = vmul.f32 %v1086, %v1173
        %v1207 = vmul.f32 %v1085, %v1178
        %v1208 = vmul.f32 %v1084, %v1183
        %v1209 = vmul.f32 %v1083, %v1188
        %v1210 = vmul.f32 %v1082, %v1193
        %v1211 = vpack.c.bf16 %v1196, %v1195
        %v1212 = vpack.c.bf16 %v1198, %v1197
        %v1213 = vpack.c.bf16 %v1200, %v1199
        %v1214 = vpack.c.bf16 %v1202, %v1201
        %v1215 = vpack.c.bf16 %v1204, %v1203
        %v1216 = vpack.c.bf16 %v1206, %v1205
        %v1217 = vpack.c.bf16 %v1208, %v1207
        %v1218 = vpack.c.bf16 %v1210, %v1209
        %s1219 = scalar_lea.vmem [#allocation7], 128
        %v1220 = vld [vmem:[%s1219] sm:$0xf]
        %v1221 = vld [vmem:[%s1219 + $0x4] sm:$0xf]
        %v1222 = vld [vmem:[%s1219 + $0x8] sm:$0xf]
        %v1223 = vld [vmem:[%s1219 + $0xc] sm:$0xf]
        %v1224 = vld [vmem:[%s1219 + $0x10] sm:$0xf]
        %v1225 = vld [vmem:[%s1219 + $0x14] sm:$0xf]
        %v1226 = vld [vmem:[%s1219 + $0x18] sm:$0xf]
        %v1227 = vld [vmem:[%s1219 + $0x1c] sm:$0xf]
        %v1228 = vld [vmem:[%s1219 + $0x20] sm:$0xf]
        %v1229 = vld [vmem:[%s1219 + $0x24] sm:$0xf]
        %v1230 = vld [vmem:[%s1219 + $0x28] sm:$0xf]
        %v1231 = vld [vmem:[%s1219 + $0x2c] sm:$0xf]
        %v1232 = vld [vmem:[%s1219 + $0x30] sm:$0xf]
        %v1233 = vld [vmem:[%s1219 + $0x34] sm:$0xf]
        %v1234 = vld [vmem:[%s1219 + $0x38] sm:$0xf]
        %v1235 = vld [vmem:[%s1219 + $0x3c] sm:$0xf]
        %v1252 = vunpack.c.l.b16 %v1220
        %v1253 = vunpack.c.l.b16 %v1221
        %v1254 = vunpack.c.l.b16 %v1222
        %v1255 = vunpack.c.l.b16 %v1223
        %v1256 = vunpack.c.l.b16 %v1224
        %v1257 = vunpack.c.l.b16 %v1225
        %v1258 = vunpack.c.l.b16 %v1226
        %v1259 = vunpack.c.l.b16 %v1227
        %v1260 = vunpack.c.l.b16 %v1228
        %v1261 = vunpack.c.l.b16 %v1229
        %v1262 = vunpack.c.l.b16 %v1230
        %v1263 = vunpack.c.l.b16 %v1231
        %v1264 = vunpack.c.l.b16 %v1232
        %v1265 = vunpack.c.l.b16 %v1233
        %v1266 = vunpack.c.l.b16 %v1234
        %v1267 = vunpack.c.l.b16 %v1235
        %v1268 = vpack.c.b16 %v1253, %v1252
        %v1269 = vpack.c.b16 %v1255, %v1254
        %v1270 = vpack.c.b16 %v1257, %v1256
        %v1271 = vpack.c.b16 %v1259, %v1258
        %v1272 = vpack.c.b16 %v1261, %v1260
        %v1273 = vpack.c.b16 %v1263, %v1262
        %v1274 = vpack.c.b16 %v1265, %v1264
        %v1275 = vpack.c.b16 %v1267, %v1266
        %1284 = vmatpush.bf16.msra.mxu0 %v1275
        %1285 = vmatpush.bf16.msra.mxu0 %v1274
        %1286 = vmatpush.bf16.msra.mxu0 %v1273
        %1287 = vmatpush.bf16.msra.mxu0 %v1272
        %1288 = vmatpush.bf16.msra.mxu0 %v1271
        %1289 = vmatpush.bf16.msra.mxu0 %v1270
        %1290 = vmatpush.bf16.msra.mxu0 %v1269
        %1291 = vmatpush.bf16.msra.mxu0 %v1268
        %1292 = vmatmul.bf16.gmra.mxu0 %v1211
        %v1293 = vpop.f32.mrf.mxu0
        %v1294 = vadd.f32 0.0, %v1293
        %v1295 = vpop.f32.mrf.mxu0
        %v1296 = vadd.f32 0.0, %v1295
        %1297 = vmatmul.bf16.gmra.mxu0 %v1212
        %v1298 = vpop.f32.mrf.mxu0
        %v1299 = vadd.f32 0.0, %v1298
        %v1300 = vpop.f32.mrf.mxu0
        %v1301 = vadd.f32 0.0, %v1300
        %1302 = vmatmul.bf16.gmra.mxu0 %v1213
        %v1303 = vpop.f32.mrf.mxu0
        %v1304 = vadd.f32 0.0, %v1303
        %v1305 = vpop.f32.mrf.mxu0
        %v1306 = vadd.f32 0.0, %v1305
        %1307 = vmatmul.bf16.gmra.mxu0 %v1214
        %v1308 = vpop.f32.mrf.mxu0
        %v1309 = vadd.f32 0.0, %v1308
        %v1310 = vpop.f32.mrf.mxu0
        %v1311 = vadd.f32 0.0, %v1310
        %1312 = vmatmul.bf16.gmra.mxu0 %v1215
        %v1313 = vpop.f32.mrf.mxu0
        %v1314 = vadd.f32 0.0, %v1313
        %v1315 = vpop.f32.mrf.mxu0
        %v1316 = vadd.f32 0.0, %v1315
        %1317 = vmatmul.bf16.gmra.mxu0 %v1216
        %v1318 = vpop.f32.mrf.mxu0
        %v1319 = vadd.f32 0.0, %v1318
        %v1320 = vpop.f32.mrf.mxu0
        %v1321 = vadd.f32 0.0, %v1320
        %1322 = vmatmul.bf16.gmra.mxu0 %v1217
        %v1323 = vpop.f32.mrf.mxu0
        %v1324 = vadd.f32 0.0, %v1323
        %v1325 = vpop.f32.mrf.mxu0
        %v1326 = vadd.f32 0.0, %v1325
        %1327 = vmatmul.bf16.gmra.mxu0 %v1218
        %v1328 = vpop.f32.mrf.mxu0
        %v1329 = vadd.f32 0.0, %v1328
        %v1330 = vpop.f32.mrf.mxu0
        %v1331 = vadd.f32 0.0, %v1330
        %1332 = vdwg.mxu0
        %v1333 = vadd.f32 %v1049, %v1294
        %v1334 = vadd.f32 %v1050, %v1296
        %v1335 = vadd.f32 %v1051, %v1299
        %v1336 = vadd.f32 %v1052, %v1301
        %v1337 = vadd.f32 %v1053, %v1304
        %v1338 = vadd.f32 %v1054, %v1306
        %v1339 = vadd.f32 %v1055, %v1309
        %v1340 = vadd.f32 %v1056, %v1311
        %v1341 = vadd.f32 %v1057, %v1314
        %v1342 = vadd.f32 %v1058, %v1316
        %v1343 = vadd.f32 %v1059, %v1319
        %v1344 = vadd.f32 %v1060, %v1321
        %v1345 = vadd.f32 %v1061, %v1324
        %v1346 = vadd.f32 %v1062, %v1326
        %v1347 = vadd.f32 %v1063, %v1329
        %v1348 = vadd.f32 %v1064, %v1331
        %s1349 = scalar_lea.vmem [#allocation5], 384
        %v1350 = vld [vmem:[%s1349] sm:$0xff]
        %v1351 = vld [vmem:[%s1349 + $0x8] sm:$0xff]
        %v1352 = vld [vmem:[%s1349 + $0x10] sm:$0xff]
        %v1353 = vld [vmem:[%s1349 + $0x18] sm:$0xff]
        %v1354 = vld [vmem:[%s1349 + $0x20] sm:$0xff]
        %v1355 = vld [vmem:[%s1349 + $0x28] sm:$0xff]
        %v1356 = vld [vmem:[%s1349 + $0x30] sm:$0xff]
        %v1357 = vld [vmem:[%s1349 + $0x38] sm:$0xff]
        %v1358 = vld [vmem:[%s1349 + $0x40] sm:$0xff]
        %v1359 = vld [vmem:[%s1349 + $0x48] sm:$0xff]
        %v1360 = vld [vmem:[%s1349 + $0x50] sm:$0xff]
        %v1361 = vld [vmem:[%s1349 + $0x58] sm:$0xff]
        %v1362 = vld [vmem:[%s1349 + $0x60] sm:$0xff]
        %v1363 = vld [vmem:[%s1349 + $0x68] sm:$0xff]
        %v1364 = vld [vmem:[%s1349 + $0x70] sm:$0xff]
        %v1365 = vld [vmem:[%s1349 + $0x78] sm:$0xff]
        %1367 = vset.pattern.permute.xlu0 0
        %1368 = vperm.xlu0 %1367, %v1350
        %v1369 = vpop.permute.xlu0 %1368
        %1372 = vset.pattern.permute.xlu0 0
        %1373 = vperm.xlu0 %1372, %v1351
        %v1374 = vpop.permute.xlu0 %1373
        %1377 = vset.pattern.permute.xlu0 0
        %1378 = vperm.xlu0 %1377, %v1352
        %v1379 = vpop.permute.xlu0 %1378
        %1382 = vset.pattern.permute.xlu0 0
        %1383 = vperm.xlu0 %1382, %v1353
        %v1384 = vpop.permute.xlu0 %1383
        %1387 = vset.pattern.permute.xlu0 0
        %1388 = vperm.xlu0 %1387, %v1354
        %v1389 = vpop.permute.xlu0 %1388
        %1392 = vset.pattern.permute.xlu0 0
        %1393 = vperm.xlu0 %1392, %v1355
        %v1394 = vpop.permute.xlu0 %1393
        %1397 = vset.pattern.permute.xlu0 0
        %1398 = vperm.xlu0 %1397, %v1356
        %v1399 = vpop.permute.xlu0 %1398
        %1402 = vset.pattern.permute.xlu0 0
        %1403 = vperm.xlu0 %1402, %v1357
        %v1404 = vpop.permute.xlu0 %1403
        %1407 = vset.pattern.permute.xlu0 0
        %1408 = vperm.xlu0 %1407, %v1358
        %v1409 = vpop.permute.xlu0 %1408
        %1412 = vset.pattern.permute.xlu0 0
        %1413 = vperm.xlu0 %1412, %v1359
        %v1414 = vpop.permute.xlu0 %1413
        %1417 = vset.pattern.permute.xlu0 0
        %1418 = vperm.xlu0 %1417, %v1360
        %v1419 = vpop.permute.xlu0 %1418
        %1422 = vset.pattern.permute.xlu0 0
        %1423 = vperm.xlu0 %1422, %v1361
        %v1424 = vpop.permute.xlu0 %1423
        %1427 = vset.pattern.permute.xlu0 0
        %1428 = vperm.xlu0 %1427, %v1362
        %v1429 = vpop.permute.xlu0 %1428
        %1432 = vset.pattern.permute.xlu0 0
        %1433 = vperm.xlu0 %1432, %v1363
        %v1434 = vpop.permute.xlu0 %1433
        %1437 = vset.pattern.permute.xlu0 0
        %1438 = vperm.xlu0 %1437, %v1364
        %v1439 = vpop.permute.xlu0 %1438
        %1442 = vset.pattern.permute.xlu0 0
        %1443 = vperm.xlu0 %1442, %v1365
        %v1444 = vpop.permute.xlu0 %1443
        %v1446 = vmul.f32 %v483, %v1369
        %v1447 = vmul.f32 %v482, %v1374
        %v1448 = vmul.f32 %v481, %v1379
        %v1449 = vmul.f32 %v480, %v1384
        %v1450 = vmul.f32 %v479, %v1389
        %v1451 = vmul.f32 %v478, %v1394
        %v1452 = vmul.f32 %v477, %v1399
        %v1453 = vmul.f32 %v476, %v1404
        %v1454 = vmul.f32 %v475, %v1409
        %v1455 = vmul.f32 %v474, %v1414
        %v1456 = vmul.f32 %v473, %v1419
        %v1457 = vmul.f32 %v472, %v1424
        %v1458 = vmul.f32 %v471, %v1429
        %v1459 = vmul.f32 %v470, %v1434
        %v1460 = vmul.f32 %v469, %v1439
        %v1461 = vmul.f32 %v468, %v1444
        %v1462 = vpack.c.bf16 %v1447, %v1446
        %v1463 = vpack.c.bf16 %v1449, %v1448
        %v1464 = vpack.c.bf16 %v1451, %v1450
        %v1465 = vpack.c.bf16 %v1453, %v1452
        %v1466 = vpack.c.bf16 %v1455, %v1454
        %v1467 = vpack.c.bf16 %v1457, %v1456
        %v1468 = vpack.c.bf16 %v1459, %v1458
        %v1469 = vpack.c.bf16 %v1461, %v1460
        %s1470 = scalar_lea.vmem [#allocation7], 192
        %v1471 = vld [vmem:[%s1470] sm:$0xf]
        %v1472 = vld [vmem:[%s1470 + $0x4] sm:$0xf]
        %v1473 = vld [vmem:[%s1470 + $0x8] sm:$0xf]
        %v1474 = vld [vmem:[%s1470 + $0xc] sm:$0xf]
        %v1475 = vld [vmem:[%s1470 + $0x10] sm:$0xf]
        %v1476 = vld [vmem:[%s1470 + $0x14] sm:$0xf]
        %v1477 = vld [vmem:[%s1470 + $0x18] sm:$0xf]
        %v1478 = vld [vmem:[%s1470 + $0x1c] sm:$0xf]
        %v1479 = vld [vmem:[%s1470 + $0x20] sm:$0xf]
        %v1480 = vld [vmem:[%s1470 + $0x24] sm:$0xf]
        %v1481 = vld [vmem:[%s1470 + $0x28] sm:$0xf]
        %v1482 = vld [vmem:[%s1470 + $0x2c] sm:$0xf]
        %v1483 = vld [vmem:[%s1470 + $0x30] sm:$0xf]
        %v1484 = vld [vmem:[%s1470 + $0x34] sm:$0xf]
        %v1485 = vld [vmem:[%s1470 + $0x38] sm:$0xf]
        %v1486 = vld [vmem:[%s1470 + $0x3c] sm:$0xf]
        %v1503 = vunpack.c.l.b16 %v1471
        %v1504 = vunpack.c.l.b16 %v1472
        %v1505 = vunpack.c.l.b16 %v1473
        %v1506 = vunpack.c.l.b16 %v1474
        %v1507 = vunpack.c.l.b16 %v1475
        %v1508 = vunpack.c.l.b16 %v1476
        %v1509 = vunpack.c.l.b16 %v1477
        %v1510 = vunpack.c.l.b16 %v1478
        %v1511 = vunpack.c.l.b16 %v1479
        %v1512 = vunpack.c.l.b16 %v1480
        %v1513 = vunpack.c.l.b16 %v1481
        %v1514 = vunpack.c.l.b16 %v1482
        %v1515 = vunpack.c.l.b16 %v1483
        %v1516 = vunpack.c.l.b16 %v1484
        %v1517 = vunpack.c.l.b16 %v1485
        %v1518 = vunpack.c.l.b16 %v1486
        %v1519 = vpack.c.b16 %v1504, %v1503
        %v1520 = vpack.c.b16 %v1506, %v1505
        %v1521 = vpack.c.b16 %v1508, %v1507
        %v1522 = vpack.c.b16 %v1510, %v1509
        %v1523 = vpack.c.b16 %v1512, %v1511
        %v1524 = vpack.c.b16 %v1514, %v1513
        %v1525 = vpack.c.b16 %v1516, %v1515
        %v1526 = vpack.c.b16 %v1518, %v1517
        %1535 = vmatpush.bf16.msra.mxu0 %v1526
        %1536 = vmatpush.bf16.msra.mxu0 %v1525
        %1537 = vmatpush.bf16.msra.mxu0 %v1524
        %1538 = vmatpush.bf16.msra.mxu0 %v1523
        %1539 = vmatpush.bf16.msra.mxu0 %v1522
        %1540 = vmatpush.bf16.msra.mxu0 %v1521
        %1541 = vmatpush.bf16.msra.mxu0 %v1520
        %1542 = vmatpush.bf16.msra.mxu0 %v1519
        %1543 = vmatmul.bf16.gmra.mxu0 %v1462
        %v1544 = vpop.f32.mrf.mxu0
        %v1545 = vadd.f32 0.0, %v1544
        %v1546 = vpop.f32.mrf.mxu0
        %v1547 = vadd.f32 0.0, %v1546
        %1548 = vmatmul.bf16.gmra.mxu0 %v1463
        %v1549 = vpop.f32.mrf.mxu0
        %v1550 = vadd.f32 0.0, %v1549
        %v1551 = vpop.f32.mrf.mxu0
        %v1552 = vadd.f32 0.0, %v1551
        %1553 = vmatmul.bf16.gmra.mxu0 %v1464
        %v1554 = vpop.f32.mrf.mxu0
        %v1555 = vadd.f32 0.0, %v1554
        %v1556 = vpop.f32.mrf.mxu0
        %v1557 = vadd.f32 0.0, %v1556
        %1558 = vmatmul.bf16.gmra.mxu0 %v1465
        %v1559 = vpop.f32.mrf.mxu0
        %v1560 = vadd.f32 0.0, %v1559
        %v1561 = vpop.f32.mrf.mxu0
        %v1562 = vadd.f32 0.0, %v1561
        %1563 = vmatmul.bf16.gmra.mxu0 %v1466
        %v1564 = vpop.f32.mrf.mxu0
        %v1565 = vadd.f32 0.0, %v1564
        %v1566 = vpop.f32.mrf.mxu0
        %v1567 = vadd.f32 0.0, %v1566
        %1568 = vmatmul.bf16.gmra.mxu0 %v1467
        %v1569 = vpop.f32.mrf.mxu0
        %v1570 = vadd.f32 0.0, %v1569
        %v1571 = vpop.f32.mrf.mxu0
        %v1572 = vadd.f32 0.0, %v1571
        %1573 = vmatmul.bf16.gmra.mxu0 %v1468
        %v1574 = vpop.f32.mrf.mxu0
        %v1575 = vadd.f32 0.0, %v1574
        %v1576 = vpop.f32.mrf.mxu0
        %v1577 = vadd.f32 0.0, %v1576
        %1578 = vmatmul.bf16.gmra.mxu0 %v1469
        %v1579 = vpop.f32.mrf.mxu0
        %v1580 = vadd.f32 0.0, %v1579
        %v1581 = vpop.f32.mrf.mxu0
        %v1582 = vadd.f32 0.0, %v1581
        %1583 = vdwg.mxu0
        %v1584 = vadd.f32 %v1333, %v1545
        %v1585 = vadd.f32 %v1334, %v1547
        %v1586 = vadd.f32 %v1335, %v1550
        %v1587 = vadd.f32 %v1336, %v1552
        %v1588 = vadd.f32 %v1337, %v1555
        %v1589 = vadd.f32 %v1338, %v1557
        %v1590 = vadd.f32 %v1339, %v1560
        %v1591 = vadd.f32 %v1340, %v1562
        %v1592 = vadd.f32 %v1341, %v1565
        %v1593 = vadd.f32 %v1342, %v1567
        %v1594 = vadd.f32 %v1343, %v1570
        %v1595 = vadd.f32 %v1344, %v1572
        %v1596 = vadd.f32 %v1345, %v1575
        %v1597 = vadd.f32 %v1346, %v1577
        %v1598 = vadd.f32 %v1347, %v1580
        %v1599 = vadd.f32 %v1348, %v1582
        %s1600 = scalar_lea.vmem [#allocation5], 512
        %v1601 = vld [vmem:[%s1600] sm:$0xff]
        %v1602 = vld [vmem:[%s1600 + $0x8] sm:$0xff]
        %v1603 = vld [vmem:[%s1600 + $0x10] sm:$0xff]
        %v1604 = vld [vmem:[%s1600 + $0x18] sm:$0xff]
        %v1605 = vld [vmem:[%s1600 + $0x20] sm:$0xff]
        %v1606 = vld [vmem:[%s1600 + $0x28] sm:$0xff]
        %v1607 = vld [vmem:[%s1600 + $0x30] sm:$0xff]
        %v1608 = vld [vmem:[%s1600 + $0x38] sm:$0xff]
        %v1609 = vld [vmem:[%s1600 + $0x40] sm:$0xff]
        %v1610 = vld [vmem:[%s1600 + $0x48] sm:$0xff]
        %v1611 = vld [vmem:[%s1600 + $0x50] sm:$0xff]
        %v1612 = vld [vmem:[%s1600 + $0x58] sm:$0xff]
        %v1613 = vld [vmem:[%s1600 + $0x60] sm:$0xff]
        %v1614 = vld [vmem:[%s1600 + $0x68] sm:$0xff]
        %v1615 = vld [vmem:[%s1600 + $0x70] sm:$0xff]
        %v1616 = vld [vmem:[%s1600 + $0x78] sm:$0xff]
        %1618 = vset.pattern.permute.xlu0 0
        %1619 = vperm.xlu0 %1618, %v1601
        %v1620 = vpop.permute.xlu0 %1619
        %1623 = vset.pattern.permute.xlu0 0
        %1624 = vperm.xlu0 %1623, %v1602
        %v1625 = vpop.permute.xlu0 %1624
        %1628 = vset.pattern.permute.xlu0 0
        %1629 = vperm.xlu0 %1628, %v1603
        %v1630 = vpop.permute.xlu0 %1629
        %1633 = vset.pattern.permute.xlu0 0
        %1634 = vperm.xlu0 %1633, %v1604
        %v1635 = vpop.permute.xlu0 %1634
        %1638 = vset.pattern.permute.xlu0 0
        %1639 = vperm.xlu0 %1638, %v1605
        %v1640 = vpop.permute.xlu0 %1639
        %1643 = vset.pattern.permute.xlu0 0
        %1644 = vperm.xlu0 %1643, %v1606
        %v1645 = vpop.permute.xlu0 %1644
        %1648 = vset.pattern.permute.xlu0 0
        %1649 = vperm.xlu0 %1648, %v1607
        %v1650 = vpop.permute.xlu0 %1649
        %1653 = vset.pattern.permute.xlu0 0
        %1654 = vperm.xlu0 %1653, %v1608
        %v1655 = vpop.permute.xlu0 %1654
        %1658 = vset.pattern.permute.xlu0 0
        %1659 = vperm.xlu0 %1658, %v1609
        %v1660 = vpop.permute.xlu0 %1659
        %1663 = vset.pattern.permute.xlu0 0
        %1664 = vperm.xlu0 %1663, %v1610
        %v1665 = vpop.permute.xlu0 %1664
        %1668 = vset.pattern.permute.xlu0 0
        %1669 = vperm.xlu0 %1668, %v1611
        %v1670 = vpop.permute.xlu0 %1669
        %1673 = vset.pattern.permute.xlu0 0
        %1674 = vperm.xlu0 %1673, %v1612
        %v1675 = vpop.permute.xlu0 %1674
        %1678 = vset.pattern.permute.xlu0 0
        %1679 = vperm.xlu0 %1678, %v1613
        %v1680 = vpop.permute.xlu0 %1679
        %1683 = vset.pattern.permute.xlu0 0
        %1684 = vperm.xlu0 %1683, %v1614
        %v1685 = vpop.permute.xlu0 %1684
        %1688 = vset.pattern.permute.xlu0 0
        %1689 = vperm.xlu0 %1688, %v1615
        %v1690 = vpop.permute.xlu0 %1689
        %1693 = vset.pattern.permute.xlu0 0
        %1694 = vperm.xlu0 %1693, %v1616
        %v1695 = vpop.permute.xlu0 %1694
        %v1697 = vmul.f32 %v1096, %v1620
        %v1698 = vmul.f32 %v1095, %v1625
        %v1699 = vmul.f32 %v1094, %v1630
        %v1700 = vmul.f32 %v1093, %v1635
        %v1701 = vmul.f32 %v1092, %v1640
        %v1702 = vmul.f32 %v1091, %v1645
        %v1703 = vmul.f32 %v1090, %v1650
        %v1704 = vmul.f32 %v1089, %v1655
        %v1705 = vmul.f32 %v1088, %v1660
        %v1706 = vmul.f32 %v1087, %v1665
        %v1707 = vmul.f32 %v1086, %v1670
        %v1708 = vmul.f32 %v1085, %v1675
        %v1709 = vmul.f32 %v1084, %v1680
        %v1710 = vmul.f32 %v1083, %v1685
        %v1711 = vmul.f32 %v1082, %v1690
        %v1712 = vmul.f32 %v1097, %v1695
        %v1713 = vpack.c.bf16 %v1698, %v1697
        %v1714 = vpack.c.bf16 %v1700, %v1699
        %v1715 = vpack.c.bf16 %v1702, %v1701
        %v1716 = vpack.c.bf16 %v1704, %v1703
        %v1717 = vpack.c.bf16 %v1706, %v1705
        %v1718 = vpack.c.bf16 %v1708, %v1707
        %v1719 = vpack.c.bf16 %v1710, %v1709
        %v1720 = vpack.c.bf16 %v1712, %v1711
        %s1721 = scalar_lea.vmem [#allocation7], 320
        %v1722 = vld [vmem:[%s1721] sm:$0xf]
        %v1723 = vld [vmem:[%s1721 + $0x4] sm:$0xf]
        %v1724 = vld [vmem:[%s1721 + $0x8] sm:$0xf]
        %v1725 = vld [vmem:[%s1721 + $0xc] sm:$0xf]
        %v1726 = vld [vmem:[%s1721 + $0x10] sm:$0xf]
        %v1727 = vld [vmem:[%s1721 + $0x14] sm:$0xf]
        %v1728 = vld [vmem:[%s1721 + $0x18] sm:$0xf]
        %v1729 = vld [vmem:[%s1721 + $0x1c] sm:$0xf]
        %v1730 = vld [vmem:[%s1721 + $0x20] sm:$0xf]
        %v1731 = vld [vmem:[%s1721 + $0x24] sm:$0xf]
        %v1732 = vld [vmem:[%s1721 + $0x28] sm:$0xf]
        %v1733 = vld [vmem:[%s1721 + $0x2c] sm:$0xf]
        %v1734 = vld [vmem:[%s1721 + $0x30] sm:$0xf]
        %v1735 = vld [vmem:[%s1721 + $0x34] sm:$0xf]
        %v1736 = vld [vmem:[%s1721 + $0x38] sm:$0xf]
        %v1737 = vld [vmem:[%s1721 + $0x3c] sm:$0xf]
        %v1754 = vunpack.c.l.b16 %v1722
        %v1755 = vunpack.c.l.b16 %v1723
        %v1756 = vunpack.c.l.b16 %v1724
        %v1757 = vunpack.c.l.b16 %v1725
        %v1758 = vunpack.c.l.b16 %v1726
        %v1759 = vunpack.c.l.b16 %v1727
        %v1760 = vunpack.c.l.b16 %v1728
        %v1761 = vunpack.c.l.b16 %v1729
        %v1762 = vunpack.c.l.b16 %v1730
        %v1763 = vunpack.c.l.b16 %v1731
        %v1764 = vunpack.c.l.b16 %v1732
        %v1765 = vunpack.c.l.b16 %v1733
        %v1766 = vunpack.c.l.b16 %v1734
        %v1767 = vunpack.c.l.b16 %v1735
        %v1768 = vunpack.c.l.b16 %v1736
        %v1769 = vunpack.c.l.b16 %v1737
        %v1770 = vpack.c.b16 %v1755, %v1754
        %v1771 = vpack.c.b16 %v1757, %v1756
        %v1772 = vpack.c.b16 %v1759, %v1758
        %v1773 = vpack.c.b16 %v1761, %v1760
        %v1774 = vpack.c.b16 %v1763, %v1762
        %v1775 = vpack.c.b16 %v1765, %v1764
        %v1776 = vpack.c.b16 %v1767, %v1766
        %v1777 = vpack.c.b16 %v1769, %v1768
        %1786 = vmatpush.bf16.msra.mxu0 %v1777
        %1787 = vmatpush.bf16.msra.mxu0 %v1776
        %1788 = vmatpush.bf16.msra.mxu0 %v1775
        %1789 = vmatpush.bf16.msra.mxu0 %v1774
        %1790 = vmatpush.bf16.msra.mxu0 %v1773
        %1791 = vmatpush.bf16.msra.mxu0 %v1772
        %1792 = vmatpush.bf16.msra.mxu0 %v1771
        %1793 = vmatpush.bf16.msra.mxu0 %v1770
        %1794 = vmatmul.bf16.gmra.mxu0 %v1713
        %v1795 = vpop.f32.mrf.mxu0
        %v1796 = vadd.f32 0.0, %v1795
        %v1797 = vpop.f32.mrf.mxu0
        %v1798 = vadd.f32 0.0, %v1797
        %1799 = vmatmul.bf16.gmra.mxu0 %v1714
        %v1800 = vpop.f32.mrf.mxu0
        %v1801 = vadd.f32 0.0, %v1800
        %v1802 = vpop.f32.mrf.mxu0
        %v1803 = vadd.f32 0.0, %v1802
        %1804 = vmatmul.bf16.gmra.mxu0 %v1715
        %v1805 = vpop.f32.mrf.mxu0
        %v1806 = vadd.f32 0.0, %v1805
        %v1807 = vpop.f32.mrf.mxu0
        %v1808 = vadd.f32 0.0, %v1807
        %1809 = vmatmul.bf16.gmra.mxu0 %v1716
        %v1810 = vpop.f32.mrf.mxu0
        %v1811 = vadd.f32 0.0, %v1810
        %v1812 = vpop.f32.mrf.mxu0
        %v1813 = vadd.f32 0.0, %v1812
        %1814 = vmatmul.bf16.gmra.mxu0 %v1717
        %v1815 = vpop.f32.mrf.mxu0
        %v1816 = vadd.f32 0.0, %v1815
        %v1817 = vpop.f32.mrf.mxu0
        %v1818 = vadd.f32 0.0, %v1817
        %1819 = vmatmul.bf16.gmra.mxu0 %v1718
        %v1820 = vpop.f32.mrf.mxu0
        %v1821 = vadd.f32 0.0, %v1820
        %v1822 = vpop.f32.mrf.mxu0
        %v1823 = vadd.f32 0.0, %v1822
        %1824 = vmatmul.bf16.gmra.mxu0 %v1719
        %v1825 = vpop.f32.mrf.mxu0
        %v1826 = vadd.f32 0.0, %v1825
        %v1827 = vpop.f32.mrf.mxu0
        %v1828 = vadd.f32 0.0, %v1827
        %1829 = vmatmul.bf16.gmra.mxu0 %v1720
        %v1830 = vpop.f32.mrf.mxu0
        %v1831 = vadd.f32 0.0, %v1830
        %v1832 = vpop.f32.mrf.mxu0
        %v1833 = vadd.f32 0.0, %v1832
        %1834 = vdwg.mxu0
        %v1835 = vadd.f32 %v1584, %v1796
        %v1836 = vadd.f32 %v1585, %v1798
        %v1837 = vadd.f32 %v1586, %v1801
        %v1838 = vadd.f32 %v1587, %v1803
        %v1839 = vadd.f32 %v1588, %v1806
        %v1840 = vadd.f32 %v1589, %v1808
        %v1841 = vadd.f32 %v1590, %v1811
        %v1842 = vadd.f32 %v1591, %v1813
        %v1843 = vadd.f32 %v1592, %v1816
        %v1844 = vadd.f32 %v1593, %v1818
        %v1845 = vadd.f32 %v1594, %v1821
        %v1846 = vadd.f32 %v1595, %v1823
        %v1847 = vadd.f32 %v1596, %v1826
        %v1848 = vadd.f32 %v1597, %v1828
        %v1849 = vadd.f32 %v1598, %v1831
        %v1850 = vadd.f32 %v1599, %v1833
        %s1851 = scalar_lea.vmem [#allocation5], 640
        %v1852 = vld [vmem:[%s1851] sm:$0xff]
        %v1853 = vld [vmem:[%s1851 + $0x8] sm:$0xff]
        %v1854 = vld [vmem:[%s1851 + $0x10] sm:$0xff]
        %v1855 = vld [vmem:[%s1851 + $0x18] sm:$0xff]
        %v1856 = vld [vmem:[%s1851 + $0x20] sm:$0xff]
        %v1857 = vld [vmem:[%s1851 + $0x28] sm:$0xff]
        %v1858 = vld [vmem:[%s1851 + $0x30] sm:$0xff]
        %v1859 = vld [vmem:[%s1851 + $0x38] sm:$0xff]
        %v1860 = vld [vmem:[%s1851 + $0x40] sm:$0xff]
        %v1861 = vld [vmem:[%s1851 + $0x48] sm:$0xff]
        %v1862 = vld [vmem:[%s1851 + $0x50] sm:$0xff]
        %v1863 = vld [vmem:[%s1851 + $0x58] sm:$0xff]
        %v1864 = vld [vmem:[%s1851 + $0x60] sm:$0xff]
        %v1865 = vld [vmem:[%s1851 + $0x68] sm:$0xff]
        %v1866 = vld [vmem:[%s1851 + $0x70] sm:$0xff]
        %v1867 = vld [vmem:[%s1851 + $0x78] sm:$0xff]
        %1869 = vset.pattern.permute.xlu0 0
        %1870 = vperm.xlu0 %1869, %v1852
        %v1871 = vpop.permute.xlu0 %1870
        %1874 = vset.pattern.permute.xlu0 0
        %1875 = vperm.xlu0 %1874, %v1853
        %v1876 = vpop.permute.xlu0 %1875
        %1879 = vset.pattern.permute.xlu0 0
        %1880 = vperm.xlu0 %1879, %v1854
        %v1881 = vpop.permute.xlu0 %1880
        %1884 = vset.pattern.permute.xlu0 0
        %1885 = vperm.xlu0 %1884, %v1855
        %v1886 = vpop.permute.xlu0 %1885
        %1889 = vset.pattern.permute.xlu0 0
        %1890 = vperm.xlu0 %1889, %v1856
        %v1891 = vpop.permute.xlu0 %1890
        %1894 = vset.pattern.permute.xlu0 0
        %1895 = vperm.xlu0 %1894, %v1857
        %v1896 = vpop.permute.xlu0 %1895
        %1899 = vset.pattern.permute.xlu0 0
        %1900 = vperm.xlu0 %1899, %v1858
        %v1901 = vpop.permute.xlu0 %1900
        %1904 = vset.pattern.permute.xlu0 0
        %1905 = vperm.xlu0 %1904, %v1859
        %v1906 = vpop.permute.xlu0 %1905
        %1909 = vset.pattern.permute.xlu0 0
        %1910 = vperm.xlu0 %1909, %v1860
        %v1911 = vpop.permute.xlu0 %1910
        %1914 = vset.pattern.permute.xlu0 0
        %1915 = vperm.xlu0 %1914, %v1861
        %v1916 = vpop.permute.xlu0 %1915
        %1919 = vset.pattern.permute.xlu0 0
        %1920 = vperm.xlu0 %1919, %v1862
        %v1921 = vpop.permute.xlu0 %1920
        %1924 = vset.pattern.permute.xlu0 0
        %1925 = vperm.xlu0 %1924, %v1863
        %v1926 = vpop.permute.xlu0 %1925
        %1929 = vset.pattern.permute.xlu0 0
        %1930 = vperm.xlu0 %1929, %v1864
        %v1931 = vpop.permute.xlu0 %1930
        %1934 = vset.pattern.permute.xlu0 0
        %1935 = vperm.xlu0 %1934, %v1865
        %v1936 = vpop.permute.xlu0 %1935
        %1939 = vset.pattern.permute.xlu0 0
        %1940 = vperm.xlu0 %1939, %v1866
        %v1941 = vpop.permute.xlu0 %1940
        %1944 = vset.pattern.permute.xlu0 0
        %1945 = vperm.xlu0 %1944, %v1867
        %v1946 = vpop.permute.xlu0 %1945
        %v1948 = vmul.f32 %v482, %v1871
        %v1949 = vmul.f32 %v481, %v1876
        %v1950 = vmul.f32 %v480, %v1881
        %v1951 = vmul.f32 %v479, %v1886
        %v1952 = vmul.f32 %v478, %v1891
        %v1953 = vmul.f32 %v477, %v1896
        %v1954 = vmul.f32 %v476, %v1901
        %v1955 = vmul.f32 %v475, %v1906
        %v1956 = vmul.f32 %v474, %v1911
        %v1957 = vmul.f32 %v473, %v1916
        %v1958 = vmul.f32 %v472, %v1921
        %v1959 = vmul.f32 %v471, %v1926
        %v1960 = vmul.f32 %v470, %v1931
        %v1961 = vmul.f32 %v469, %v1936
        %v1962 = vmul.f32 %v468, %v1941
        %v1963 = vmul.f32 %v483, %v1946
        %v1964 = vpack.c.bf16 %v1949, %v1948
        %v1965 = vpack.c.bf16 %v1951, %v1950
        %v1966 = vpack.c.bf16 %v1953, %v1952
        %v1967 = vpack.c.bf16 %v1955, %v1954
        %v1968 = vpack.c.bf16 %v1957, %v1956
        %v1969 = vpack.c.bf16 %v1959, %v1958
        %v1970 = vpack.c.bf16 %v1961, %v1960
        %v1971 = vpack.c.bf16 %v1963, %v1962
        %s1972 = scalar_lea.vmem [#allocation7], 384
        %v1973 = vld [vmem:[%s1972] sm:$0xf]
        %v1974 = vld [vmem:[%s1972 + $0x4] sm:$0xf]
        %v1975 = vld [vmem:[%s1972 + $0x8] sm:$0xf]
        %v1976 = vld [vmem:[%s1972 + $0xc] sm:$0xf]
        %v1977 = vld [vmem:[%s1972 + $0x10] sm:$0xf]
        %v1978 = vld [vmem:[%s1972 + $0x14] sm:$0xf]
        %v1979 = vld [vmem:[%s1972 + $0x18] sm:$0xf]
        %v1980 = vld [vmem:[%s1972 + $0x1c] sm:$0xf]
        %v1981 = vld [vmem:[%s1972 + $0x20] sm:$0xf]
        %v1982 = vld [vmem:[%s1972 + $0x24] sm:$0xf]
        %v1983 = vld [vmem:[%s1972 + $0x28] sm:$0xf]
        %v1984 = vld [vmem:[%s1972 + $0x2c] sm:$0xf]
        %v1985 = vld [vmem:[%s1972 + $0x30] sm:$0xf]
        %v1986 = vld [vmem:[%s1972 + $0x34] sm:$0xf]
        %v1987 = vld [vmem:[%s1972 + $0x38] sm:$0xf]
        %v1988 = vld [vmem:[%s1972 + $0x3c] sm:$0xf]
        %v2005 = vunpack.c.l.b16 %v1973
        %v2006 = vunpack.c.l.b16 %v1974
        %v2007 = vunpack.c.l.b16 %v1975
        %v2008 = vunpack.c.l.b16 %v1976
        %v2009 = vunpack.c.l.b16 %v1977
        %v2010 = vunpack.c.l.b16 %v1978
        %v2011 = vunpack.c.l.b16 %v1979
        %v2012 = vunpack.c.l.b16 %v1980
        %v2013 = vunpack.c.l.b16 %v1981
        %v2014 = vunpack.c.l.b16 %v1982
        %v2015 = vunpack.c.l.b16 %v1983
        %v2016 = vunpack.c.l.b16 %v1984
        %v2017 = vunpack.c.l.b16 %v1985
        %v2018 = vunpack.c.l.b16 %v1986
        %v2019 = vunpack.c.l.b16 %v1987
        %v2020 = vunpack.c.l.b16 %v1988
        %v2021 = vpack.c.b16 %v2006, %v2005
        %v2022 = vpack.c.b16 %v2008, %v2007
        %v2023 = vpack.c.b16 %v2010, %v2009
        %v2024 = vpack.c.b16 %v2012, %v2011
        %v2025 = vpack.c.b16 %v2014, %v2013
        %v2026 = vpack.c.b16 %v2016, %v2015
        %v2027 = vpack.c.b16 %v2018, %v2017
        %v2028 = vpack.c.b16 %v2020, %v2019
        %2037 = vmatpush.bf16.msra.mxu0 %v2028
        %2038 = vmatpush.bf16.msra.mxu0 %v2027
        %2039 = vmatpush.bf16.msra.mxu0 %v2026
        %2040 = vmatpush.bf16.msra.mxu0 %v2025
        %2041 = vmatpush.bf16.msra.mxu0 %v2024
        %2042 = vmatpush.bf16.msra.mxu0 %v2023
        %2043 = vmatpush.bf16.msra.mxu0 %v2022
        %2044 = vmatpush.bf16.msra.mxu0 %v2021
        %2045 = vmatmul.bf16.gmra.mxu0 %v1964
        %v2046 = vpop.f32.mrf.mxu0
        %v2047 = vadd.f32 0.0, %v2046
        %v2048 = vpop.f32.mrf.mxu0
        %v2049 = vadd.f32 0.0, %v2048
        %2050 = vmatmul.bf16.gmra.mxu0 %v1965
        %v2051 = vpop.f32.mrf.mxu0
        %v2052 = vadd.f32 0.0, %v2051
        %v2053 = vpop.f32.mrf.mxu0
        %v2054 = vadd.f32 0.0, %v2053
        %2055 = vmatmul.bf16.gmra.mxu0 %v1966
        %v2056 = vpop.f32.mrf.mxu0
        %v2057 = vadd.f32 0.0, %v2056
        %v2058 = vpop.f32.mrf.mxu0
        %v2059 = vadd.f32 0.0, %v2058
        %2060 = vmatmul.bf16.gmra.mxu0 %v1967
        %v2061 = vpop.f32.mrf.mxu0
        %v2062 = vadd.f32 0.0, %v2061
        %v2063 = vpop.f32.mrf.mxu0
        %v2064 = vadd.f32 0.0, %v2063
        %2065 = vmatmul.bf16.gmra.mxu0 %v1968
        %v2066 = vpop.f32.mrf.mxu0
        %v2067 = vadd.f32 0.0, %v2066
        %v2068 = vpop.f32.mrf.mxu0
        %v2069 = vadd.f32 0.0, %v2068
        %2070 = vmatmul.bf16.gmra.mxu0 %v1969
        %v2071 = vpop.f32.mrf.mxu0
        %v2072 = vadd.f32 0.0, %v2071
        %v2073 = vpop.f32.mrf.mxu0
        %v2074 = vadd.f32 0.0, %v2073
        %2075 = vmatmul.bf16.gmra.mxu0 %v1970
        %v2076 = vpop.f32.mrf.mxu0
        %v2077 = vadd.f32 0.0, %v2076
        %v2078 = vpop.f32.mrf.mxu0
        %v2079 = vadd.f32 0.0, %v2078
        %2080 = vmatmul.bf16.gmra.mxu0 %v1971
        %v2081 = vpop.f32.mrf.mxu0
        %v2082 = vadd.f32 0.0, %v2081
        %v2083 = vpop.f32.mrf.mxu0
        %v2084 = vadd.f32 0.0, %v2083
        %2085 = vdwg.mxu0
        %v2086 = vadd.f32 %v1835, %v2047
        %v2087 = vadd.f32 %v1836, %v2049
        %v2088 = vadd.f32 %v1837, %v2052
        %v2089 = vadd.f32 %v1838, %v2054
        %v2090 = vadd.f32 %v1839, %v2057
        %v2091 = vadd.f32 %v1840, %v2059
        %v2092 = vadd.f32 %v1841, %v2062
        %v2093 = vadd.f32 %v1842, %v2064
        %v2094 = vadd.f32 %v1843, %v2067
        %v2095 = vadd.f32 %v1844, %v2069
        %v2096 = vadd.f32 %v1845, %v2072
        %v2097 = vadd.f32 %v1846, %v2074
        %v2098 = vadd.f32 %v1847, %v2077
        %v2099 = vadd.f32 %v1848, %v2079
        %v2100 = vadd.f32 %v1849, %v2082
        %v2101 = vadd.f32 %v1850, %v2084
        %s2102 = scalar_lea.vmem [#allocation5], 768
        %v2103 = vld [vmem:[%s2102] sm:$0xff]
        %v2104 = vld [vmem:[%s2102 + $0x8] sm:$0xff]
        %v2105 = vld [vmem:[%s2102 + $0x10] sm:$0xff]
        %v2106 = vld [vmem:[%s2102 + $0x18] sm:$0xff]
        %v2107 = vld [vmem:[%s2102 + $0x20] sm:$0xff]
        %v2108 = vld [vmem:[%s2102 + $0x28] sm:$0xff]
        %v2109 = vld [vmem:[%s2102 + $0x30] sm:$0xff]
        %v2110 = vld [vmem:[%s2102 + $0x38] sm:$0xff]
        %v2111 = vld [vmem:[%s2102 + $0x40] sm:$0xff]
        %v2112 = vld [vmem:[%s2102 + $0x48] sm:$0xff]
        %v2113 = vld [vmem:[%s2102 + $0x50] sm:$0xff]
        %v2114 = vld [vmem:[%s2102 + $0x58] sm:$0xff]
        %v2115 = vld [vmem:[%s2102 + $0x60] sm:$0xff]
        %v2116 = vld [vmem:[%s2102 + $0x68] sm:$0xff]
        %v2117 = vld [vmem:[%s2102 + $0x70] sm:$0xff]
        %v2118 = vld [vmem:[%s2102 + $0x78] sm:$0xff]
        %2120 = vset.pattern.permute.xlu0 0
        %2121 = vperm.xlu0 %2120, %v2103
        %v2122 = vpop.permute.xlu0 %2121
        %2125 = vset.pattern.permute.xlu0 0
        %2126 = vperm.xlu0 %2125, %v2104
        %v2127 = vpop.permute.xlu0 %2126
        %2130 = vset.pattern.permute.xlu0 0
        %2131 = vperm.xlu0 %2130, %v2105
        %v2132 = vpop.permute.xlu0 %2131
        %2135 = vset.pattern.permute.xlu0 0
        %2136 = vperm.xlu0 %2135, %v2106
        %v2137 = vpop.permute.xlu0 %2136
        %2140 = vset.pattern.permute.xlu0 0
        %2141 = vperm.xlu0 %2140, %v2107
        %v2142 = vpop.permute.xlu0 %2141
        %2145 = vset.pattern.permute.xlu0 0
        %2146 = vperm.xlu0 %2145, %v2108
        %v2147 = vpop.permute.xlu0 %2146
        %2150 = vset.pattern.permute.xlu0 0
        %2151 = vperm.xlu0 %2150, %v2109
        %v2152 = vpop.permute.xlu0 %2151
        %2155 = vset.pattern.permute.xlu0 0
        %2156 = vperm.xlu0 %2155, %v2110
        %v2157 = vpop.permute.xlu0 %2156
        %2160 = vset.pattern.permute.xlu0 0
        %2161 = vperm.xlu0 %2160, %v2111
        %v2162 = vpop.permute.xlu0 %2161
        %2165 = vset.pattern.permute.xlu0 0
        %2166 = vperm.xlu0 %2165, %v2112
        %v2167 = vpop.permute.xlu0 %2166
        %2170 = vset.pattern.permute.xlu0 0
        %2171 = vperm.xlu0 %2170, %v2113
        %v2172 = vpop.permute.xlu0 %2171
        %2175 = vset.pattern.permute.xlu0 0
        %2176 = vperm.xlu0 %2175, %v2114
        %v2177 = vpop.permute.xlu0 %2176
        %2180 = vset.pattern.permute.xlu0 0
        %2181 = vperm.xlu0 %2180, %v2115
        %v2182 = vpop.permute.xlu0 %2181
        %2185 = vset.pattern.permute.xlu0 0
        %2186 = vperm.xlu0 %2185, %v2116
        %v2187 = vpop.permute.xlu0 %2186
        %2190 = vset.pattern.permute.xlu0 0
        %2191 = vperm.xlu0 %2190, %v2117
        %v2192 = vpop.permute.xlu0 %2191
        %2195 = vset.pattern.permute.xlu0 0
        %2196 = vperm.xlu0 %2195, %v2118
        %v2197 = vpop.permute.xlu0 %2196
        %v2199 = vmul.f32 %v409, %v2122
        %v2200 = vmul.f32 %v410, %v2127
        %v2201 = vmul.f32 %v411, %v2132
        %v2202 = vmul.f32 %v412, %v2137
        %v2203 = vmul.f32 %v413, %v2142
        %v2204 = vmul.f32 %v414, %v2147
        %v2205 = vmul.f32 %v415, %v2152
        %v2206 = vmul.f32 %v416, %v2157
        %v2207 = vmul.f32 %v417, %v2162
        %v2208 = vmul.f32 %v418, %v2167
        %v2209 = vmul.f32 %v419, %v2172
        %v2210 = vmul.f32 %v420, %v2177
        %v2211 = vmul.f32 %v421, %v2182
        %v2212 = vmul.f32 %v422, %v2187
        %v2213 = vmul.f32 %v423, %v2192
        %v2214 = vmul.f32 %v408, %v2197
        %v2215 = vpack.c.bf16 %v2200, %v2199
        %v2216 = vpack.c.bf16 %v2202, %v2201
        %v2217 = vpack.c.bf16 %v2204, %v2203
        %v2218 = vpack.c.bf16 %v2206, %v2205
        %v2219 = vpack.c.bf16 %v2208, %v2207
        %v2220 = vpack.c.bf16 %v2210, %v2209
        %v2221 = vpack.c.bf16 %v2212, %v2211
        %v2222 = vpack.c.bf16 %v2214, %v2213
        %s2223 = scalar_lea.vmem [#allocation7], 448
        %v2224 = vld [vmem:[%s2223] sm:$0xf]
        %v2225 = vld [vmem:[%s2223 + $0x4] sm:$0xf]
        %v2226 = vld [vmem:[%s2223 + $0x8] sm:$0xf]
        %v2227 = vld [vmem:[%s2223 + $0xc] sm:$0xf]
        %v2228 = vld [vmem:[%s2223 + $0x10] sm:$0xf]
        %v2229 = vld [vmem:[%s2223 + $0x14] sm:$0xf]
        %v2230 = vld [vmem:[%s2223 + $0x18] sm:$0xf]
        %v2231 = vld [vmem:[%s2223 + $0x1c] sm:$0xf]
        %v2232 = vld [vmem:[%s2223 + $0x20] sm:$0xf]
        %v2233 = vld [vmem:[%s2223 + $0x24] sm:$0xf]
        %v2234 = vld [vmem:[%s2223 + $0x28] sm:$0xf]
        %v2235 = vld [vmem:[%s2223 + $0x2c] sm:$0xf]
        %v2236 = vld [vmem:[%s2223 + $0x30] sm:$0xf]
        %v2237 = vld [vmem:[%s2223 + $0x34] sm:$0xf]
        %v2238 = vld [vmem:[%s2223 + $0x38] sm:$0xf]
        %v2239 = vld [vmem:[%s2223 + $0x3c] sm:$0xf]
        %v2256 = vunpack.c.l.b16 %v2224
        %v2257 = vunpack.c.l.b16 %v2225
        %v2258 = vunpack.c.l.b16 %v2226
        %v2259 = vunpack.c.l.b16 %v2227
        %v2260 = vunpack.c.l.b16 %v2228
        %v2261 = vunpack.c.l.b16 %v2229
        %v2262 = vunpack.c.l.b16 %v2230
        %v2263 = vunpack.c.l.b16 %v2231
        %v2264 = vunpack.c.l.b16 %v2232
        %v2265 = vunpack.c.l.b16 %v2233
        %v2266 = vunpack.c.l.b16 %v2234
        %v2267 = vunpack.c.l.b16 %v2235
        %v2268 = vunpack.c.l.b16 %v2236
        %v2269 = vunpack.c.l.b16 %v2237
        %v2270 = vunpack.c.l.b16 %v2238
        %v2271 = vunpack.c.l.b16 %v2239
        %v2272 = vpack.c.b16 %v2257, %v2256
        %v2273 = vpack.c.b16 %v2259, %v2258
        %v2274 = vpack.c.b16 %v2261, %v2260
        %v2275 = vpack.c.b16 %v2263, %v2262
        %v2276 = vpack.c.b16 %v2265, %v2264
        %v2277 = vpack.c.b16 %v2267, %v2266
        %v2278 = vpack.c.b16 %v2269, %v2268
        %v2279 = vpack.c.b16 %v2271, %v2270
        %2288 = vmatpush.bf16.msra.mxu0 %v2279
        %2289 = vmatpush.bf16.msra.mxu0 %v2278
        %2290 = vmatpush.bf16.msra.mxu0 %v2277
        %2291 = vmatpush.bf16.msra.mxu0 %v2276
        %2292 = vmatpush.bf16.msra.mxu0 %v2275
        %2293 = vmatpush.bf16.msra.mxu0 %v2274
        %2294 = vmatpush.bf16.msra.mxu0 %v2273
        %2295 = vmatpush.bf16.msra.mxu0 %v2272
        %2296 = vmatmul.bf16.gmra.mxu0 %v2215
        %v2297 = vpop.f32.mrf.mxu0
        %v2298 = vadd.f32 0.0, %v2297
        %v2299 = vpop.f32.mrf.mxu0
        %v2300 = vadd.f32 0.0, %v2299
        %2301 = vmatmul.bf16.gmra.mxu0 %v2216
        %v2302 = vpop.f32.mrf.mxu0
        %v2303 = vadd.f32 0.0, %v2302
        %v2304 = vpop.f32.mrf.mxu0
        %v2305 = vadd.f32 0.0, %v2304
        %2306 = vmatmul.bf16.gmra.mxu0 %v2217
        %v2307 = vpop.f32.mrf.mxu0
        %v2308 = vadd.f32 0.0, %v2307
        %v2309 = vpop.f32.mrf.mxu0
        %v2310 = vadd.f32 0.0, %v2309
        %2311 = vmatmul.bf16.gmra.mxu0 %v2218
        %v2312 = vpop.f32.mrf.mxu0
        %v2313 = vadd.f32 0.0, %v2312
        %v2314 = vpop.f32.mrf.mxu0
        %v2315 = vadd.f32 0.0, %v2314
        %2316 = vmatmul.bf16.gmra.mxu0 %v2219
        %v2317 = vpop.f32.mrf.mxu0
        %v2318 = vadd.f32 0.0, %v2317
        %v2319 = vpop.f32.mrf.mxu0
        %v2320 = vadd.f32 0.0, %v2319
        %2321 = vmatmul.bf16.gmra.mxu0 %v2220
        %v2322 = vpop.f32.mrf.mxu0
        %v2323 = vadd.f32 0.0, %v2322
        %v2324 = vpop.f32.mrf.mxu0
        %v2325 = vadd.f32 0.0, %v2324
        %2326 = vmatmul.bf16.gmra.mxu0 %v2221
        %v2327 = vpop.f32.mrf.mxu0
        %v2328 = vadd.f32 0.0, %v2327
        %v2329 = vpop.f32.mrf.mxu0
        %v2330 = vadd.f32 0.0, %v2329
        %2331 = vmatmul.bf16.gmra.mxu0 %v2222
        %v2332 = vpop.f32.mrf.mxu0
        %v2333 = vadd.f32 0.0, %v2332
        %v2334 = vpop.f32.mrf.mxu0
        %v2335 = vadd.f32 0.0, %v2334
        %2336 = vdwg.mxu0
        %v2337 = vadd.f32 %v2086, %v2298
        %v2338 = vadd.f32 %v2087, %v2300
        %v2339 = vadd.f32 %v2088, %v2303
        %v2340 = vadd.f32 %v2089, %v2305
        %v2341 = vadd.f32 %v2090, %v2308
        %v2342 = vadd.f32 %v2091, %v2310
        %v2343 = vadd.f32 %v2092, %v2313
        %v2344 = vadd.f32 %v2093, %v2315
        %v2345 = vadd.f32 %v2094, %v2318
        %v2346 = vadd.f32 %v2095, %v2320
        %v2347 = vadd.f32 %v2096, %v2323
        %v2348 = vadd.f32 %v2097, %v2325
        %v2349 = vadd.f32 %v2098, %v2328
        %v2350 = vadd.f32 %v2099, %v2330
        %v2351 = vadd.f32 %v2100, %v2333
        %v2352 = vadd.f32 %v2101, %v2335
        %s2353 = scalar_lea.vmem [#allocation5], 896
        %v2354 = vld [vmem:[%s2353] sm:$0xff]
        %v2355 = vld [vmem:[%s2353 + $0x8] sm:$0xff]
        %v2356 = vld [vmem:[%s2353 + $0x10] sm:$0xff]
        %v2357 = vld [vmem:[%s2353 + $0x18] sm:$0xff]
        %v2358 = vld [vmem:[%s2353 + $0x20] sm:$0xff]
        %v2359 = vld [vmem:[%s2353 + $0x28] sm:$0xff]
        %v2360 = vld [vmem:[%s2353 + $0x30] sm:$0xff]
        %v2361 = vld [vmem:[%s2353 + $0x38] sm:$0xff]
        %v2362 = vld [vmem:[%s2353 + $0x40] sm:$0xff]
        %v2363 = vld [vmem:[%s2353 + $0x48] sm:$0xff]
        %v2364 = vld [vmem:[%s2353 + $0x50] sm:$0xff]
        %v2365 = vld [vmem:[%s2353 + $0x58] sm:$0xff]
        %v2366 = vld [vmem:[%s2353 + $0x60] sm:$0xff]
        %v2367 = vld [vmem:[%s2353 + $0x68] sm:$0xff]
        %v2368 = vld [vmem:[%s2353 + $0x70] sm:$0xff]
        %v2369 = vld [vmem:[%s2353 + $0x78] sm:$0xff]
        %2371 = vset.pattern.permute.xlu0 0
        %2372 = vperm.xlu0 %2371, %v2354
        %v2373 = vpop.permute.xlu0 %2372
        %2376 = vset.pattern.permute.xlu0 0
        %2377 = vperm.xlu0 %2376, %v2355
        %v2378 = vpop.permute.xlu0 %2377
        %2381 = vset.pattern.permute.xlu0 0
        %2382 = vperm.xlu0 %2381, %v2356
        %v2383 = vpop.permute.xlu0 %2382
        %2386 = vset.pattern.permute.xlu0 0
        %2387 = vperm.xlu0 %2386, %v2357
        %v2388 = vpop.permute.xlu0 %2387
        %2391 = vset.pattern.permute.xlu0 0
        %2392 = vperm.xlu0 %2391, %v2358
        %v2393 = vpop.permute.xlu0 %2392
        %2396 = vset.pattern.permute.xlu0 0
        %2397 = vperm.xlu0 %2396, %v2359
        %v2398 = vpop.permute.xlu0 %2397
        %2401 = vset.pattern.permute.xlu0 0
        %2402 = vperm.xlu0 %2401, %v2360
        %v2403 = vpop.permute.xlu0 %2402
        %2406 = vset.pattern.permute.xlu0 0
        %2407 = vperm.xlu0 %2406, %v2361
        %v2408 = vpop.permute.xlu0 %2407
        %2411 = vset.pattern.permute.xlu0 0
        %2412 = vperm.xlu0 %2411, %v2362
        %v2413 = vpop.permute.xlu0 %2412
        %2416 = vset.pattern.permute.xlu0 0
        %2417 = vperm.xlu0 %2416, %v2363
        %v2418 = vpop.permute.xlu0 %2417
        %2421 = vset.pattern.permute.xlu0 0
        %2422 = vperm.xlu0 %2421, %v2364
        %v2423 = vpop.permute.xlu0 %2422
        %2426 = vset.pattern.permute.xlu0 0
        %2427 = vperm.xlu0 %2426, %v2365
        %v2428 = vpop.permute.xlu0 %2427
        %2431 = vset.pattern.permute.xlu0 0
        %2432 = vperm.xlu0 %2431, %v2366
        %v2433 = vpop.permute.xlu0 %2432
        %2436 = vset.pattern.permute.xlu0 0
        %2437 = vperm.xlu0 %2436, %v2367
        %v2438 = vpop.permute.xlu0 %2437
        %2441 = vset.pattern.permute.xlu0 0
        %2442 = vperm.xlu0 %2441, %v2368
        %v2443 = vpop.permute.xlu0 %2442
        %2446 = vset.pattern.permute.xlu0 0
        %2447 = vperm.xlu0 %2446, %v2369
        %v2448 = vpop.permute.xlu0 %2447
        %v2450 = vmul.f32 %v1095, %v2373
        %v2451 = vmul.f32 %v1094, %v2378
        %v2452 = vmul.f32 %v1093, %v2383
        %v2453 = vmul.f32 %v1092, %v2388
        %v2454 = vmul.f32 %v1091, %v2393
        %v2455 = vmul.f32 %v1090, %v2398
        %v2456 = vmul.f32 %v1089, %v2403
        %v2457 = vmul.f32 %v1088, %v2408
        %v2458 = vmul.f32 %v1087, %v2413
        %v2459 = vmul.f32 %v1086, %v2418
        %v2460 = vmul.f32 %v1085, %v2423
        %v2461 = vmul.f32 %v1084, %v2428
        %v2462 = vmul.f32 %v1083, %v2433
        %v2463 = vmul.f32 %v1082, %v2438
        %v2464 = vmul.f32 %v1097, %v2443
        %v2465 = vmul.f32 %v1096, %v2448
        %v2466 = vpack.c.bf16 %v2451, %v2450
        %v2467 = vpack.c.bf16 %v2453, %v2452
        %v2468 = vpack.c.bf16 %v2455, %v2454
        %v2469 = vpack.c.bf16 %v2457, %v2456
        %v2470 = vpack.c.bf16 %v2459, %v2458
        %v2471 = vpack.c.bf16 %v2461, %v2460
        %v2472 = vpack.c.bf16 %v2463, %v2462
        %v2473 = vpack.c.bf16 %v2465, %v2464
        %s2474 = scalar_lea.vmem [#allocation7], 512
        %v2475 = vld [vmem:[%s2474] sm:$0xf]
        %v2476 = vld [vmem:[%s2474 + $0x4] sm:$0xf]
        %v2477 = vld [vmem:[%s2474 + $0x8] sm:$0xf]
        %v2478 = vld [vmem:[%s2474 + $0xc] sm:$0xf]
        %v2479 = vld [vmem:[%s2474 + $0x10] sm:$0xf]
        %v2480 = vld [vmem:[%s2474 + $0x14] sm:$0xf]
        %v2481 = vld [vmem:[%s2474 + $0x18] sm:$0xf]
        %v2482 = vld [vmem:[%s2474 + $0x1c] sm:$0xf]
        %v2483 = vld [vmem:[%s2474 + $0x20] sm:$0xf]
        %v2484 = vld [vmem:[%s2474 + $0x24] sm:$0xf]
        %v2485 = vld [vmem:[%s2474 + $0x28] sm:$0xf]
        %v2486 = vld [vmem:[%s2474 + $0x2c] sm:$0xf]
        %v2487 = vld [vmem:[%s2474 + $0x30] sm:$0xf]
        %v2488 = vld [vmem:[%s2474 + $0x34] sm:$0xf]
        %v2489 = vld [vmem:[%s2474 + $0x38] sm:$0xf]
        %v2490 = vld [vmem:[%s2474 + $0x3c] sm:$0xf]
        %v2507 = vunpack.c.l.b16 %v2475
        %v2508 = vunpack.c.l.b16 %v2476
        %v2509 = vunpack.c.l.b16 %v2477
        %v2510 = vunpack.c.l.b16 %v2478
        %v2511 = vunpack.c.l.b16 %v2479
        %v2512 = vunpack.c.l.b16 %v2480
        %v2513 = vunpack.c.l.b16 %v2481
        %v2514 = vunpack.c.l.b16 %v2482
        %v2515 = vunpack.c.l.b16 %v2483
        %v2516 = vunpack.c.l.b16 %v2484
        %v2517 = vunpack.c.l.b16 %v2485
        %v2518 = vunpack.c.l.b16 %v2486
        %v2519 = vunpack.c.l.b16 %v2487
        %v2520 = vunpack.c.l.b16 %v2488
        %v2521 = vunpack.c.l.b16 %v2489
        %v2522 = vunpack.c.l.b16 %v2490
        %v2523 = vpack.c.b16 %v2508, %v2507
        %v2524 = vpack.c.b16 %v2510, %v2509
        %v2525 = vpack.c.b16 %v2512, %v2511
        %v2526 = vpack.c.b16 %v2514, %v2513
        %v2527 = vpack.c.b16 %v2516, %v2515
        %v2528 = vpack.c.b16 %v2518, %v2517
        %v2529 = vpack.c.b16 %v2520, %v2519
        %v2530 = vpack.c.b16 %v2522, %v2521
        %2539 = vmatpush.bf16.msra.mxu0 %v2530
        %2540 = vmatpush.bf16.msra.mxu0 %v2529
        %2541 = vmatpush.bf16.msra.mxu0 %v2528
        %2542 = vmatpush.bf16.msra.mxu0 %v2527
        %2543 = vmatpush.bf16.msra.mxu0 %v2526
        %2544 = vmatpush.bf16.msra.mxu0 %v2525
        %2545 = vmatpush.bf16.msra.mxu0 %v2524
        %2546 = vmatpush.bf16.msra.mxu0 %v2523
        %2547 = vmatmul.bf16.gmra.mxu0 %v2466
        %v2548 = vpop.f32.mrf.mxu0
        %v2549 = vadd.f32 0.0, %v2548
        %v2550 = vpop.f32.mrf.mxu0
        %v2551 = vadd.f32 0.0, %v2550
        %2552 = vmatmul.bf16.gmra.mxu0 %v2467
        %v2553 = vpop.f32.mrf.mxu0
        %v2554 = vadd.f32 0.0, %v2553
        %v2555 = vpop.f32.mrf.mxu0
        %v2556 = vadd.f32 0.0, %v2555
        %2557 = vmatmul.bf16.gmra.mxu0 %v2468
        %v2558 = vpop.f32.mrf.mxu0
        %v2559 = vadd.f32 0.0, %v2558
        %v2560 = vpop.f32.mrf.mxu0
        %v2561 = vadd.f32 0.0, %v2560
        %2562 = vmatmul.bf16.gmra.mxu0 %v2469
        %v2563 = vpop.f32.mrf.mxu0
        %v2564 = vadd.f32 0.0, %v2563
        %v2565 = vpop.f32.mrf.mxu0
        %v2566 = vadd.f32 0.0, %v2565
        %2567 = vmatmul.bf16.gmra.mxu0 %v2470
        %v2568 = vpop.f32.mrf.mxu0
        %v2569 = vadd.f32 0.0, %v2568
        %v2570 = vpop.f32.mrf.mxu0
        %v2571 = vadd.f32 0.0, %v2570
        %2572 = vmatmul.bf16.gmra.mxu0 %v2471
        %v2573 = vpop.f32.mrf.mxu0
        %v2574 = vadd.f32 0.0, %v2573
        %v2575 = vpop.f32.mrf.mxu0
        %v2576 = vadd.f32 0.0, %v2575
        %2577 = vmatmul.bf16.gmra.mxu0 %v2472
        %v2578 = vpop.f32.mrf.mxu0
        %v2579 = vadd.f32 0.0, %v2578
        %v2580 = vpop.f32.mrf.mxu0
        %v2581 = vadd.f32 0.0, %v2580
        %2582 = vmatmul.bf16.gmra.mxu0 %v2473
        %v2583 = vpop.f32.mrf.mxu0
        %v2584 = vadd.f32 0.0, %v2583
        %v2585 = vpop.f32.mrf.mxu0
        %v2586 = vadd.f32 0.0, %v2585
        %2587 = vdwg.mxu0
        %v2588 = vadd.f32 %v2337, %v2549
        %v2589 = vadd.f32 %v2338, %v2551
        %v2590 = vadd.f32 %v2339, %v2554
        %v2591 = vadd.f32 %v2340, %v2556
        %v2592 = vadd.f32 %v2341, %v2559
        %v2593 = vadd.f32 %v2342, %v2561
        %v2594 = vadd.f32 %v2343, %v2564
        %v2595 = vadd.f32 %v2344, %v2566
        %v2596 = vadd.f32 %v2345, %v2569
        %v2597 = vadd.f32 %v2346, %v2571
        %v2598 = vadd.f32 %v2347, %v2574
        %v2599 = vadd.f32 %v2348, %v2576
        %v2600 = vadd.f32 %v2349, %v2579
        %v2601 = vadd.f32 %v2350, %v2581
        %v2602 = vadd.f32 %v2351, %v2584
        %v2603 = vadd.f32 %v2352, %v2586
        %v2604 = vld [vmem:[%s3] sm:$0x1]
        %v2606 = vperm.slane %v2604, 0
        %v2608 = vmul.f32 %v2588, %v2606
        %v2609 = vmul.f32 %v2589, %v2606
        %v2610 = vmul.f32 %v2590, %v2606
        %v2611 = vmul.f32 %v2591, %v2606
        %v2612 = vmul.f32 %v2592, %v2606
        %v2613 = vmul.f32 %v2593, %v2606
        %v2614 = vmul.f32 %v2594, %v2606
        %v2615 = vmul.f32 %v2595, %v2606
        %v2616 = vmul.f32 %v2596, %v2606
        %v2617 = vmul.f32 %v2597, %v2606
        %v2618 = vmul.f32 %v2598, %v2606
        %v2619 = vmul.f32 %v2599, %v2606
        %v2620 = vmul.f32 %v2600, %v2606
        %v2621 = vmul.f32 %v2601, %v2606
        %v2622 = vmul.f32 %v2602, %v2606
        %v2623 = vmul.f32 %v2603, %v2606
        %v2624 = vld [vmem:[#allocation8] sm:$0x1]
        %v2626 = vperm.slane %v2624, 0
        %v2628 = vadd.f32 %v2608, %v2626
        %v2629 = vadd.f32 %v2609, %v2626
        %v2630 = vadd.f32 %v2610, %v2626
        %v2631 = vadd.f32 %v2611, %v2626
        %v2632 = vadd.f32 %v2612, %v2626
        %v2633 = vadd.f32 %v2613, %v2626
        %v2634 = vadd.f32 %v2614, %v2626
        %v2635 = vadd.f32 %v2615, %v2626
        %v2636 = vadd.f32 %v2616, %v2626
        %v2637 = vadd.f32 %v2617, %v2626
        %v2638 = vadd.f32 %v2618, %v2626
        %v2639 = vadd.f32 %v2619, %v2626
        %v2640 = vadd.f32 %v2620, %v2626
        %v2641 = vadd.f32 %v2621, %v2626
        %v2642 = vadd.f32 %v2622, %v2626
        %v2643 = vadd.f32 %v2623, %v2626
        %v2644 = vmax.f32 %v2628, 0.0
        %v2645 = vmax.f32 %v2629, 0.0
        %v2646 = vmax.f32 %v2630, 0.0
        %v2647 = vmax.f32 %v2631, 0.0
        %v2648 = vmax.f32 %v2632, 0.0
        %v2649 = vmax.f32 %v2633, 0.0
        %v2650 = vmax.f32 %v2634, 0.0
        %v2651 = vmax.f32 %v2635, 0.0
        %v2652 = vmax.f32 %v2636, 0.0
        %v2653 = vmax.f32 %v2637, 0.0
        %v2654 = vmax.f32 %v2638, 0.0
        %v2655 = vmax.f32 %v2639, 0.0
        %v2656 = vmax.f32 %v2640, 0.0
        %v2657 = vmax.f32 %v2641, 0.0
        %v2658 = vmax.f32 %v2642, 0.0
        %v2659 = vmax.f32 %v2643, 0.0
        %v2660 = vpack.c.bf16 %v2645, %v2644
        %v2661 = vpack.c.bf16 %v2647, %v2646
        %v2662 = vpack.c.bf16 %v2649, %v2648
        %v2663 = vpack.c.bf16 %v2651, %v2650
        %v2664 = vpack.c.bf16 %v2653, %v2652
        %v2665 = vpack.c.bf16 %v2655, %v2654
        %v2666 = vpack.c.bf16 %v2657, %v2656
        %v2667 = vpack.c.bf16 %v2659, %v2658
        %s2668 = scalar_lea.vmem [#allocation10], 256
        %v2669 = vld [vmem:[%s2668] sm:$0xf]
        %v2670 = vld [vmem:[%s2668 + $0x4] sm:$0xf]
        %v2671 = vld [vmem:[%s2668 + $0x8] sm:$0xf]
        %v2672 = vld [vmem:[%s2668 + $0xc] sm:$0xf]
        %v2673 = vld [vmem:[%s2668 + $0x10] sm:$0xf]
        %v2674 = vld [vmem:[%s2668 + $0x14] sm:$0xf]
        %v2675 = vld [vmem:[%s2668 + $0x18] sm:$0xf]
        %v2676 = vld [vmem:[%s2668 + $0x1c] sm:$0xf]
        %v2677 = vld [vmem:[%s2668 + $0x20] sm:$0xf]
        %v2678 = vld [vmem:[%s2668 + $0x24] sm:$0xf]
        %v2679 = vld [vmem:[%s2668 + $0x28] sm:$0xf]
        %v2680 = vld [vmem:[%s2668 + $0x2c] sm:$0xf]
        %v2681 = vld [vmem:[%s2668 + $0x30] sm:$0xf]
        %v2682 = vld [vmem:[%s2668 + $0x34] sm:$0xf]
        %v2683 = vld [vmem:[%s2668 + $0x38] sm:$0xf]
        %v2684 = vld [vmem:[%s2668 + $0x3c] sm:$0xf]
        %v2685 = vrot.slane %v2644, 7
        %v2686 = vrot.slane %v2645, 7
        %v2687 = vrot.slane %v2646, 7
        %v2688 = vrot.slane %v2647, 7
        %v2689 = vrot.slane %v2648, 7
        %v2690 = vrot.slane %v2649, 7
        %v2691 = vrot.slane %v2650, 7
        %v2692 = vrot.slane %v2651, 7
        %v2693 = vrot.slane %v2652, 7
        %v2694 = vrot.slane %v2653, 7
        %v2695 = vrot.slane %v2654, 7
        %v2696 = vrot.slane %v2655, 7
        %v2697 = vrot.slane %v2656, 7
        %v2698 = vrot.slane %v2657, 7
        %v2699 = vrot.slane %v2658, 7
        %v2700 = vrot.slane %v2659, 7
        %v2701 = vsel %vm467, %v2699, %v2700
        %v2702 = vsel %vm467, %v2698, %v2699
        %v2703 = vsel %vm467, %v2697, %v2698
        %v2704 = vsel %vm467, %v2696, %v2697
        %v2705 = vsel %vm467, %v2695, %v2696
        %v2706 = vsel %vm467, %v2694, %v2695
        %v2707 = vsel %vm467, %v2693, %v2694
        %v2708 = vsel %vm467, %v2692, %v2693
        %v2709 = vsel %vm467, %v2691, %v2692
        %v2710 = vsel %vm467, %v2690, %v2691
        %v2711 = vsel %vm467, %v2689, %v2690
        %v2712 = vsel %vm467, %v2688, %v2689
        %v2713 = vsel %vm467, %v2687, %v2688
        %v2714 = vsel %vm467, %v2686, %v2687
        %v2715 = vsel %vm467, %v2685, %v2686
        %v2716 = vsel %vm467, %v2700, %v2685
        %v2717 = vmul.f32 %v2701, %v503
        %v2718 = vmul.f32 %v2716, %v508
        %v2719 = vmul.f32 %v2715, %v513
        %v2720 = vmul.f32 %v2714, %v518
        %v2721 = vmul.f32 %v2713, %v523
        %v2722 = vmul.f32 %v2712, %v528
        %v2723 = vmul.f32 %v2711, %v533
        %v2724 = vmul.f32 %v2710, %v538
        %v2725 = vmul.f32 %v2709, %v543
        %v2726 = vmul.f32 %v2708, %v548
        %v2727 = vmul.f32 %v2707, %v553
        %v2728 = vmul.f32 %v2706, %v558
        %v2729 = vmul.f32 %v2705, %v563
        %v2730 = vmul.f32 %v2704, %v568
        %v2731 = vmul.f32 %v2703, %v573
        %v2732 = vmul.f32 %v2702, %v578
        %v2733 = vpack.c.bf16 %v2718, %v2717
        %v2734 = vpack.c.bf16 %v2720, %v2719
        %v2735 = vpack.c.bf16 %v2722, %v2721
        %v2736 = vpack.c.bf16 %v2724, %v2723
        %v2737 = vpack.c.bf16 %v2726, %v2725
        %v2738 = vpack.c.bf16 %v2728, %v2727
        %v2739 = vpack.c.bf16 %v2730, %v2729
        %v2740 = vpack.c.bf16 %v2732, %v2731
        %v2741 = vld [vmem:[#allocation10] sm:$0xf]
        %v2742 = vld [vmem:[#allocation10 + $0x4] sm:$0xf]
        %v2743 = vld [vmem:[#allocation10 + $0x8] sm:$0xf]
        %v2744 = vld [vmem:[#allocation10 + $0xc] sm:$0xf]
        %v2745 = vld [vmem:[#allocation10 + $0x10] sm:$0xf]
        %v2746 = vld [vmem:[#allocation10 + $0x14] sm:$0xf]
        %v2747 = vld [vmem:[#allocation10 + $0x18] sm:$0xf]
        %v2748 = vld [vmem:[#allocation10 + $0x1c] sm:$0xf]
        %v2749 = vld [vmem:[#allocation10 + $0x20] sm:$0xf]
        %v2750 = vld [vmem:[#allocation10 + $0x24] sm:$0xf]
        %v2751 = vld [vmem:[#allocation10 + $0x28] sm:$0xf]
        %v2752 = vld [vmem:[#allocation10 + $0x2c] sm:$0xf]
        %v2753 = vld [vmem:[#allocation10 + $0x30] sm:$0xf]
        %v2754 = vld [vmem:[#allocation10 + $0x34] sm:$0xf]
        %v2755 = vld [vmem:[#allocation10 + $0x38] sm:$0xf]
        %v2756 = vld [vmem:[#allocation10 + $0x3c] sm:$0xf]
        %v2773 = vunpack.c.l.b16 %v2741
        %v2774 = vunpack.c.l.b16 %v2742
        %v2775 = vunpack.c.l.b16 %v2743
        %v2776 = vunpack.c.l.b16 %v2744
        %v2777 = vunpack.c.l.b16 %v2745
        %v2778 = vunpack.c.l.b16 %v2746
        %v2779 = vunpack.c.l.b16 %v2747
        %v2780 = vunpack.c.l.b16 %v2748
        %v2781 = vunpack.c.l.b16 %v2749
        %v2782 = vunpack.c.l.b16 %v2750
        %v2783 = vunpack.c.l.b16 %v2751
        %v2784 = vunpack.c.l.b16 %v2752
        %v2785 = vunpack.c.l.b16 %v2753
        %v2786 = vunpack.c.l.b16 %v2754
        %v2787 = vunpack.c.l.b16 %v2755
        %v2788 = vunpack.c.l.b16 %v2756
        %v2789 = vpack.c.b16 %v2774, %v2773
        %v2790 = vpack.c.b16 %v2776, %v2775
        %v2791 = vpack.c.b16 %v2778, %v2777
        %v2792 = vpack.c.b16 %v2780, %v2779
        %v2793 = vpack.c.b16 %v2782, %v2781
        %v2794 = vpack.c.b16 %v2784, %v2783
        %v2795 = vpack.c.b16 %v2786, %v2785
        %v2796 = vpack.c.b16 %v2788, %v2787
        %2805 = vmatpush.bf16.msra.mxu0 %v2796
        %2806 = vmatpush.bf16.msra.mxu0 %v2795
        %2807 = vmatpush.bf16.msra.mxu0 %v2794
        %2808 = vmatpush.bf16.msra.mxu0 %v2793
        %2809 = vmatpush.bf16.msra.mxu0 %v2792
        %2810 = vmatpush.bf16.msra.mxu0 %v2791
        %2811 = vmatpush.bf16.msra.mxu0 %v2790
        %2812 = vmatpush.bf16.msra.mxu0 %v2789
        %2813 = vmatmul.bf16.gmra.mxu0 %v2733
        %v2814 = vpop.f32.mrf.mxu0
        %v2815 = vadd.f32 0.0, %v2814
        %v2816 = vpop.f32.mrf.mxu0
        %v2817 = vadd.f32 0.0, %v2816
        %2818 = vmatmul.bf16.gmra.mxu0 %v2734
        %v2819 = vpop.f32.mrf.mxu0
        %v2820 = vadd.f32 0.0, %v2819
        %v2821 = vpop.f32.mrf.mxu0
        %v2822 = vadd.f32 0.0, %v2821
        %2823 = vmatmul.bf16.gmra.mxu0 %v2735
        %v2824 = vpop.f32.mrf.mxu0
        %v2825 = vadd.f32 0.0, %v2824
        %v2826 = vpop.f32.mrf.mxu0
        %v2827 = vadd.f32 0.0, %v2826
        %2828 = vmatmul.bf16.gmra.mxu0 %v2736
        %v2829 = vpop.f32.mrf.mxu0
        %v2830 = vadd.f32 0.0, %v2829
        %v2831 = vpop.f32.mrf.mxu0
        %v2832 = vadd.f32 0.0, %v2831
        %2833 = vmatmul.bf16.gmra.mxu0 %v2737
        %v2834 = vpop.f32.mrf.mxu0
        %v2835 = vadd.f32 0.0, %v2834
        %v2836 = vpop.f32.mrf.mxu0
        %v2837 = vadd.f32 0.0, %v2836
        %2838 = vmatmul.bf16.gmra.mxu0 %v2738
        %v2839 = vpop.f32.mrf.mxu0
        %v2840 = vadd.f32 0.0, %v2839
        %v2841 = vpop.f32.mrf.mxu0
        %v2842 = vadd.f32 0.0, %v2841
        %2843 = vmatmul.bf16.gmra.mxu0 %v2739
        %v2844 = vpop.f32.mrf.mxu0
        %v2845 = vadd.f32 0.0, %v2844
        %v2846 = vpop.f32.mrf.mxu0
        %v2847 = vadd.f32 0.0, %v2846
        %2848 = vmatmul.bf16.gmra.mxu0 %v2740
        %v2849 = vpop.f32.mrf.mxu0
        %v2850 = vadd.f32 0.0, %v2849
        %v2851 = vpop.f32.mrf.mxu0
        %v2852 = vadd.f32 0.0, %v2851
        %2853 = vdwg.mxu0
        %v2870 = vunpack.c.l.b16 %v2669
        %v2871 = vunpack.c.l.b16 %v2670
        %v2872 = vunpack.c.l.b16 %v2671
        %v2873 = vunpack.c.l.b16 %v2672
        %v2874 = vunpack.c.l.b16 %v2673
        %v2875 = vunpack.c.l.b16 %v2674
        %v2876 = vunpack.c.l.b16 %v2675
        %v2877 = vunpack.c.l.b16 %v2676
        %v2878 = vunpack.c.l.b16 %v2677
        %v2879 = vunpack.c.l.b16 %v2678
        %v2880 = vunpack.c.l.b16 %v2679
        %v2881 = vunpack.c.l.b16 %v2680
        %v2882 = vunpack.c.l.b16 %v2681
        %v2883 = vunpack.c.l.b16 %v2682
        %v2884 = vunpack.c.l.b16 %v2683
        %v2885 = vunpack.c.l.b16 %v2684
        %v2886 = vpack.c.b16 %v2871, %v2870
        %v2887 = vpack.c.b16 %v2873, %v2872
        %v2888 = vpack.c.b16 %v2875, %v2874
        %v2889 = vpack.c.b16 %v2877, %v2876
        %v2890 = vpack.c.b16 %v2879, %v2878
        %v2891 = vpack.c.b16 %v2881, %v2880
        %v2892 = vpack.c.b16 %v2883, %v2882
        %v2893 = vpack.c.b16 %v2885, %v2884
        %2902 = vmatpush.bf16.msra.mxu0 %v2893
        %2903 = vmatpush.bf16.msra.mxu0 %v2892
        %2904 = vmatpush.bf16.msra.mxu0 %v2891
        %2905 = vmatpush.bf16.msra.mxu0 %v2890
        %2906 = vmatpush.bf16.msra.mxu0 %v2889
        %2907 = vmatpush.bf16.msra.mxu0 %v2888
        %2908 = vmatpush.bf16.msra.mxu0 %v2887
        %2909 = vmatpush.bf16.msra.mxu0 %v2886
        %2910 = vmatmul.bf16.gmra.mxu0 %v2660
        %v2911 = vpop.f32.mrf.mxu0
        %v2912 = vadd.f32 %v2815, %v2911
        %v2913 = vpop.f32.mrf.mxu0
        %v2914 = vadd.f32 %v2817, %v2913
        %2915 = vmatmul.bf16.gmra.mxu0 %v2661
        %v2916 = vpop.f32.mrf.mxu0
        %v2917 = vadd.f32 %v2820, %v2916
        %v2918 = vpop.f32.mrf.mxu0
        %v2919 = vadd.f32 %v2822, %v2918
        %2920 = vmatmul.bf16.gmra.mxu0 %v2662
        %v2921 = vpop.f32.mrf.mxu0
        %v2922 = vadd.f32 %v2825, %v2921
        %v2923 = vpop.f32.mrf.mxu0
        %v2924 = vadd.f32 %v2827, %v2923
        %2925 = vmatmul.bf16.gmra.mxu0 %v2663
        %v2926 = vpop.f32.mrf.mxu0
        %v2927 = vadd.f32 %v2830, %v2926
        %v2928 = vpop.f32.mrf.mxu0
        %v2929 = vadd.f32 %v2832, %v2928
        %2930 = vmatmul.bf16.gmra.mxu0 %v2664
        %v2931 = vpop.f32.mrf.mxu0
        %v2932 = vadd.f32 %v2835, %v2931
        %v2933 = vpop.f32.mrf.mxu0
        %v2934 = vadd.f32 %v2837, %v2933
        %2935 = vmatmul.bf16.gmra.mxu0 %v2665
        %v2936 = vpop.f32.mrf.mxu0
        %v2937 = vadd.f32 %v2840, %v2936
        %v2938 = vpop.f32.mrf.mxu0
        %v2939 = vadd.f32 %v2842, %v2938
        %2940 = vmatmul.bf16.gmra.mxu0 %v2666
        %v2941 = vpop.f32.mrf.mxu0
        %v2942 = vadd.f32 %v2845, %v2941
        %v2943 = vpop.f32.mrf.mxu0
        %v2944 = vadd.f32 %v2847, %v2943
        %2945 = vmatmul.bf16.gmra.mxu0 %v2667
        %v2946 = vpop.f32.mrf.mxu0
        %v2947 = vadd.f32 %v2850, %v2946
        %v2948 = vpop.f32.mrf.mxu0
        %v2949 = vadd.f32 %v2852, %v2948
        %2950 = vdwg.mxu0
        %v2951 = vmul.f32 %v2659, %v834
        %v2952 = vmul.f32 %v2644, %v839
        %v2953 = vmul.f32 %v2645, %v844
        %v2954 = vmul.f32 %v2646, %v849
        %v2955 = vmul.f32 %v2647, %v854
        %v2956 = vmul.f32 %v2648, %v859
        %v2957 = vmul.f32 %v2649, %v864
        %v2958 = vmul.f32 %v2650, %v869
        %v2959 = vmul.f32 %v2651, %v874
        %v2960 = vmul.f32 %v2652, %v879
        %v2961 = vmul.f32 %v2653, %v884
        %v2962 = vmul.f32 %v2654, %v889
        %v2963 = vmul.f32 %v2655, %v894
        %v2964 = vmul.f32 %v2656, %v899
        %v2965 = vmul.f32 %v2657, %v904
        %v2966 = vmul.f32 %v2658, %v909
        %v2967 = vpack.c.bf16 %v2952, %v2951
        %v2968 = vpack.c.bf16 %v2954, %v2953
        %v2969 = vpack.c.bf16 %v2956, %v2955
        %v2970 = vpack.c.bf16 %v2958, %v2957
        %v2971 = vpack.c.bf16 %v2960, %v2959
        %v2972 = vpack.c.bf16 %v2962, %v2961
        %v2973 = vpack.c.bf16 %v2964, %v2963
        %v2974 = vpack.c.bf16 %v2966, %v2965
        %s2975 = scalar_lea.vmem [#allocation10], 64
        %v2976 = vld [vmem:[%s2975] sm:$0xf]
        %v2977 = vld [vmem:[%s2975 + $0x4] sm:$0xf]
        %v2978 = vld [vmem:[%s2975 + $0x8] sm:$0xf]
        %v2979 = vld [vmem:[%s2975 + $0xc] sm:$0xf]
        %v2980 = vld [vmem:[%s2975 + $0x10] sm:$0xf]
        %v2981 = vld [vmem:[%s2975 + $0x14] sm:$0xf]
        %v2982 = vld [vmem:[%s2975 + $0x18] sm:$0xf]
        %v2983 = vld [vmem:[%s2975 + $0x1c] sm:$0xf]
        %v2984 = vld [vmem:[%s2975 + $0x20] sm:$0xf]
        %v2985 = vld [vmem:[%s2975 + $0x24] sm:$0xf]
        %v2986 = vld [vmem:[%s2975 + $0x28] sm:$0xf]
        %v2987 = vld [vmem:[%s2975 + $0x2c] sm:$0xf]
        %v2988 = vld [vmem:[%s2975 + $0x30] sm:$0xf]
        %v2989 = vld [vmem:[%s2975 + $0x34] sm:$0xf]
        %v2990 = vld [vmem:[%s2975 + $0x38] sm:$0xf]
        %v2991 = vld [vmem:[%s2975 + $0x3c] sm:$0xf]
        %v3008 = vunpack.c.l.b16 %v2976
        %v3009 = vunpack.c.l.b16 %v2977
        %v3010 = vunpack.c.l.b16 %v2978
        %v3011 = vunpack.c.l.b16 %v2979
        %v3012 = vunpack.c.l.b16 %v2980
        %v3013 = vunpack.c.l.b16 %v2981
        %v3014 = vunpack.c.l.b16 %v2982
        %v3015 = vunpack.c.l.b16 %v2983
        %v3016 = vunpack.c.l.b16 %v2984
        %v3017 = vunpack.c.l.b16 %v2985
        %v3018 = vunpack.c.l.b16 %v2986
        %v3019 = vunpack.c.l.b16 %v2987
        %v3020 = vunpack.c.l.b16 %v2988
        %v3021 = vunpack.c.l.b16 %v2989
        %v3022 = vunpack.c.l.b16 %v2990
        %v3023 = vunpack.c.l.b16 %v2991
        %v3024 = vpack.c.b16 %v3009, %v3008
        %v3025 = vpack.c.b16 %v3011, %v3010
        %v3026 = vpack.c.b16 %v3013, %v3012
        %v3027 = vpack.c.b16 %v3015, %v3014
        %v3028 = vpack.c.b16 %v3017, %v3016
        %v3029 = vpack.c.b16 %v3019, %v3018
        %v3030 = vpack.c.b16 %v3021, %v3020
        %v3031 = vpack.c.b16 %v3023, %v3022
        %3040 = vmatpush.bf16.msra.mxu0 %v3031
        %3041 = vmatpush.bf16.msra.mxu0 %v3030
        %3042 = vmatpush.bf16.msra.mxu0 %v3029
        %3043 = vmatpush.bf16.msra.mxu0 %v3028
        %3044 = vmatpush.bf16.msra.mxu0 %v3027
        %3045 = vmatpush.bf16.msra.mxu0 %v3026
        %3046 = vmatpush.bf16.msra.mxu0 %v3025
        %3047 = vmatpush.bf16.msra.mxu0 %v3024
        %3048 = vmatmul.bf16.gmra.mxu0 %v2967
        %v3049 = vpop.f32.mrf.mxu0
        %v3050 = vadd.f32 0.0, %v3049
        %v3051 = vpop.f32.mrf.mxu0
        %v3052 = vadd.f32 0.0, %v3051
        %3053 = vmatmul.bf16.gmra.mxu0 %v2968
        %v3054 = vpop.f32.mrf.mxu0
        %v3055 = vadd.f32 0.0, %v3054
        %v3056 = vpop.f32.mrf.mxu0
        %v3057 = vadd.f32 0.0, %v3056
        %3058 = vmatmul.bf16.gmra.mxu0 %v2969
        %v3059 = vpop.f32.mrf.mxu0
        %v3060 = vadd.f32 0.0, %v3059
        %v3061 = vpop.f32.mrf.mxu0
        %v3062 = vadd.f32 0.0, %v3061
        %3063 = vmatmul.bf16.gmra.mxu0 %v2970
        %v3064 = vpop.f32.mrf.mxu0
        %v3065 = vadd.f32 0.0, %v3064
        %v3066 = vpop.f32.mrf.mxu0
        %v3067 = vadd.f32 0.0, %v3066
        %3068 = vmatmul.bf16.gmra.mxu0 %v2971
        %v3069 = vpop.f32.mrf.mxu0
        %v3070 = vadd.f32 0.0, %v3069
        %v3071 = vpop.f32.mrf.mxu0
        %v3072 = vadd.f32 0.0, %v3071
        %3073 = vmatmul.bf16.gmra.mxu0 %v2972
        %v3074 = vpop.f32.mrf.mxu0
        %v3075 = vadd.f32 0.0, %v3074
        %v3076 = vpop.f32.mrf.mxu0
        %v3077 = vadd.f32 0.0, %v3076
        %3078 = vmatmul.bf16.gmra.mxu0 %v2973
        %v3079 = vpop.f32.mrf.mxu0
        %v3080 = vadd.f32 0.0, %v3079
        %v3081 = vpop.f32.mrf.mxu0
        %v3082 = vadd.f32 0.0, %v3081
        %3083 = vmatmul.bf16.gmra.mxu0 %v2974
        %v3084 = vpop.f32.mrf.mxu0
        %v3085 = vadd.f32 0.0, %v3084
        %v3086 = vpop.f32.mrf.mxu0
        %v3087 = vadd.f32 0.0, %v3086
        %3088 = vdwg.mxu0
        %v3089 = vadd.f32 %v2912, %v3050
        %v3090 = vadd.f32 %v2914, %v3052
        %v3091 = vadd.f32 %v2917, %v3055
        %v3092 = vadd.f32 %v2919, %v3057
        %v3093 = vadd.f32 %v2922, %v3060
        %v3094 = vadd.f32 %v2924, %v3062
        %v3095 = vadd.f32 %v2927, %v3065
        %v3096 = vadd.f32 %v2929, %v3067
        %v3097 = vadd.f32 %v2932, %v3070
        %v3098 = vadd.f32 %v2934, %v3072
        %v3099 = vadd.f32 %v2937, %v3075
        %v3100 = vadd.f32 %v2939, %v3077
        %v3101 = vadd.f32 %v2942, %v3080
        %v3102 = vadd.f32 %v2944, %v3082
        %v3103 = vadd.f32 %v2947, %v3085
        %v3104 = vadd.f32 %v2949, %v3087
        %v3105 = vrot.slane %v2644, 1
        %v3106 = vrot.slane %v2645, 1
        %v3107 = vrot.slane %v2646, 1
        %v3108 = vrot.slane %v2647, 1
        %v3109 = vrot.slane %v2648, 1
        %v3110 = vrot.slane %v2649, 1
        %v3111 = vrot.slane %v2650, 1
        %v3112 = vrot.slane %v2651, 1
        %v3113 = vrot.slane %v2652, 1
        %v3114 = vrot.slane %v2653, 1
        %v3115 = vrot.slane %v2654, 1
        %v3116 = vrot.slane %v2655, 1
        %v3117 = vrot.slane %v2656, 1
        %v3118 = vrot.slane %v2657, 1
        %v3119 = vrot.slane %v2658, 1
        %v3120 = vrot.slane %v2659, 1
        %v3121 = vsel %vm1081, %v3119, %v3120
        %v3122 = vsel %vm1081, %v3118, %v3119
        %v3123 = vsel %vm1081, %v3117, %v3118
        %v3124 = vsel %vm1081, %v3116, %v3117
        %v3125 = vsel %vm1081, %v3115, %v3116
        %v3126 = vsel %vm1081, %v3114, %v3115
        %v3127 = vsel %vm1081, %v3113, %v3114
        %v3128 = vsel %vm1081, %v3112, %v3113
        %v3129 = vsel %vm1081, %v3111, %v3112
        %v3130 = vsel %vm1081, %v3110, %v3111
        %v3131 = vsel %vm1081, %v3109, %v3110
        %v3132 = vsel %vm1081, %v3108, %v3109
        %v3133 = vsel %vm1081, %v3107, %v3108
        %v3134 = vsel %vm1081, %v3106, %v3107
        %v3135 = vsel %vm1081, %v3105, %v3106
        %v3136 = vsel %vm1081, %v3120, %v3105
        %v3137 = vmul.f32 %v3136, %v1118
        %v3138 = vmul.f32 %v3135, %v1123
        %v3139 = vmul.f32 %v3134, %v1128
        %v3140 = vmul.f32 %v3133, %v1133
        %v3141 = vmul.f32 %v3132, %v1138
        %v3142 = vmul.f32 %v3131, %v1143
        %v3143 = vmul.f32 %v3130, %v1148
        %v3144 = vmul.f32 %v3129, %v1153
        %v3145 = vmul.f32 %v3128, %v1158
        %v3146 = vmul.f32 %v3127, %v1163
        %v3147 = vmul.f32 %v3126, %v1168
        %v3148 = vmul.f32 %v3125, %v1173
        %v3149 = vmul.f32 %v3124, %v1178
        %v3150 = vmul.f32 %v3123, %v1183
        %v3151 = vmul.f32 %v3122, %v1188
        %v3152 = vmul.f32 %v3121, %v1193
        %v3153 = vpack.c.bf16 %v3138, %v3137
        %v3154 = vpack.c.bf16 %v3140, %v3139
        %v3155 = vpack.c.bf16 %v3142, %v3141
        %v3156 = vpack.c.bf16 %v3144, %v3143
        %v3157 = vpack.c.bf16 %v3146, %v3145
        %v3158 = vpack.c.bf16 %v3148, %v3147
        %v3159 = vpack.c.bf16 %v3150, %v3149
        %v3160 = vpack.c.bf16 %v3152, %v3151
        %s3161 = scalar_lea.vmem [#allocation10], 128
        %v3162 = vld [vmem:[%s3161] sm:$0xf]
        %v3163 = vld [vmem:[%s3161 + $0x4] sm:$0xf]
        %v3164 = vld [vmem:[%s3161 + $0x8] sm:$0xf]
        %v3165 = vld [vmem:[%s3161 + $0xc] sm:$0xf]
        %v3166 = vld [vmem:[%s3161 + $0x10] sm:$0xf]
        %v3167 = vld [vmem:[%s3161 + $0x14] sm:$0xf]
        %v3168 = vld [vmem:[%s3161 + $0x18] sm:$0xf]
        %v3169 = vld [vmem:[%s3161 + $0x1c] sm:$0xf]
        %v3170 = vld [vmem:[%s3161 + $0x20] sm:$0xf]
        %v3171 = vld [vmem:[%s3161 + $0x24] sm:$0xf]
        %v3172 = vld [vmem:[%s3161 + $0x28] sm:$0xf]
        %v3173 = vld [vmem:[%s3161 + $0x2c] sm:$0xf]
        %v3174 = vld [vmem:[%s3161 + $0x30] sm:$0xf]
        %v3175 = vld [vmem:[%s3161 + $0x34] sm:$0xf]
        %v3176 = vld [vmem:[%s3161 + $0x38] sm:$0xf]
        %v3177 = vld [vmem:[%s3161 + $0x3c] sm:$0xf]
        %v3194 = vunpack.c.l.b16 %v3162
        %v3195 = vunpack.c.l.b16 %v3163
        %v3196 = vunpack.c.l.b16 %v3164
        %v3197 = vunpack.c.l.b16 %v3165
        %v3198 = vunpack.c.l.b16 %v3166
        %v3199 = vunpack.c.l.b16 %v3167
        %v3200 = vunpack.c.l.b16 %v3168
        %v3201 = vunpack.c.l.b16 %v3169
        %v3202 = vunpack.c.l.b16 %v3170
        %v3203 = vunpack.c.l.b16 %v3171
        %v3204 = vunpack.c.l.b16 %v3172
        %v3205 = vunpack.c.l.b16 %v3173
        %v3206 = vunpack.c.l.b16 %v3174
        %v3207 = vunpack.c.l.b16 %v3175
        %v3208 = vunpack.c.l.b16 %v3176
        %v3209 = vunpack.c.l.b16 %v3177
        %v3210 = vpack.c.b16 %v3195, %v3194
        %v3211 = vpack.c.b16 %v3197, %v3196
        %v3212 = vpack.c.b16 %v3199, %v3198
        %v3213 = vpack.c.b16 %v3201, %v3200
        %v3214 = vpack.c.b16 %v3203, %v3202
        %v3215 = vpack.c.b16 %v3205, %v3204
        %v3216 = vpack.c.b16 %v3207, %v3206
        %v3217 = vpack.c.b16 %v3209, %v3208
        %3226 = vmatpush.bf16.msra.mxu0 %v3217
        %3227 = vmatpush.bf16.msra.mxu0 %v3216
        %3228 = vmatpush.bf16.msra.mxu0 %v3215
        %3229 = vmatpush.bf16.msra.mxu0 %v3214
        %3230 = vmatpush.bf16.msra.mxu0 %v3213
        %3231 = vmatpush.bf16.msra.mxu0 %v3212
        %3232 = vmatpush.bf16.msra.mxu0 %v3211
        %3233 = vmatpush.bf16.msra.mxu0 %v3210
        %3234 = vmatmul.bf16.gmra.mxu0 %v3153
        %v3235 = vpop.f32.mrf.mxu0
        %v3236 = vadd.f32 0.0, %v3235
        %v3237 = vpop.f32.mrf.mxu0
        %v3238 = vadd.f32 0.0, %v3237
        %3239 = vmatmul.bf16.gmra.mxu0 %v3154
        %v3240 = vpop.f32.mrf.mxu0
        %v3241 = vadd.f32 0.0, %v3240
        %v3242 = vpop.f32.mrf.mxu0
        %v3243 = vadd.f32 0.0, %v3242
        %3244 = vmatmul.bf16.gmra.mxu0 %v3155
        %v3245 = vpop.f32.mrf.mxu0
        %v3246 = vadd.f32 0.0, %v3245
        %v3247 = vpop.f32.mrf.mxu0
        %v3248 = vadd.f32 0.0, %v3247
        %3249 = vmatmul.bf16.gmra.mxu0 %v3156
        %v3250 = vpop.f32.mrf.mxu0
        %v3251 = vadd.f32 0.0, %v3250
        %v3252 = vpop.f32.mrf.mxu0
        %v3253 = vadd.f32 0.0, %v3252
        %3254 = vmatmul.bf16.gmra.mxu0 %v3157
        %v3255 = vpop.f32.mrf.mxu0
        %v3256 = vadd.f32 0.0, %v3255
        %v3257 = vpop.f32.mrf.mxu0
        %v3258 = vadd.f32 0.0, %v3257
        %3259 = vmatmul.bf16.gmra.mxu0 %v3158
        %v3260 = vpop.f32.mrf.mxu0
        %v3261 = vadd.f32 0.0, %v3260
        %v3262 = vpop.f32.mrf.mxu0
        %v3263 = vadd.f32 0.0, %v3262
        %3264 = vmatmul.bf16.gmra.mxu0 %v3159
        %v3265 = vpop.f32.mrf.mxu0
        %v3266 = vadd.f32 0.0, %v3265
        %v3267 = vpop.f32.mrf.mxu0
        %v3268 = vadd.f32 0.0, %v3267
        %3269 = vmatmul.bf16.gmra.mxu0 %v3160
        %v3270 = vpop.f32.mrf.mxu0
        %v3271 = vadd.f32 0.0, %v3270
        %v3272 = vpop.f32.mrf.mxu0
        %v3273 = vadd.f32 0.0, %v3272
        %3274 = vdwg.mxu0
        %v3275 = vadd.f32 %v3089, %v3236
        %v3276 = vadd.f32 %v3090, %v3238
        %v3277 = vadd.f32 %v3091, %v3241
        %v3278 = vadd.f32 %v3092, %v3243
        %v3279 = vadd.f32 %v3093, %v3246
        %v3280 = vadd.f32 %v3094, %v3248
        %v3281 = vadd.f32 %v3095, %v3251
        %v3282 = vadd.f32 %v3096, %v3253
        %v3283 = vadd.f32 %v3097, %v3256
        %v3284 = vadd.f32 %v3098, %v3258
        %v3285 = vadd.f32 %v3099, %v3261
        %v3286 = vadd.f32 %v3100, %v3263
        %v3287 = vadd.f32 %v3101, %v3266
        %v3288 = vadd.f32 %v3102, %v3268
        %v3289 = vadd.f32 %v3103, %v3271
        %v3290 = vadd.f32 %v3104, %v3273
        %v3291 = vmul.f32 %v2716, %v1369
        %v3292 = vmul.f32 %v2715, %v1374
        %v3293 = vmul.f32 %v2714, %v1379
        %v3294 = vmul.f32 %v2713, %v1384
        %v3295 = vmul.f32 %v2712, %v1389
        %v3296 = vmul.f32 %v2711, %v1394
        %v3297 = vmul.f32 %v2710, %v1399
        %v3298 = vmul.f32 %v2709, %v1404
        %v3299 = vmul.f32 %v2708, %v1409
        %v3300 = vmul.f32 %v2707, %v1414
        %v3301 = vmul.f32 %v2706, %v1419
        %v3302 = vmul.f32 %v2705, %v1424
        %v3303 = vmul.f32 %v2704, %v1429
        %v3304 = vmul.f32 %v2703, %v1434
        %v3305 = vmul.f32 %v2702, %v1439
        %v3306 = vmul.f32 %v2701, %v1444
        %v3307 = vpack.c.bf16 %v3292, %v3291
        %v3308 = vpack.c.bf16 %v3294, %v3293
        %v3309 = vpack.c.bf16 %v3296, %v3295
        %v3310 = vpack.c.bf16 %v3298, %v3297
        %v3311 = vpack.c.bf16 %v3300, %v3299
        %v3312 = vpack.c.bf16 %v3302, %v3301
        %v3313 = vpack.c.bf16 %v3304, %v3303
        %v3314 = vpack.c.bf16 %v3306, %v3305
        %s3315 = scalar_lea.vmem [#allocation10], 192
        %v3316 = vld [vmem:[%s3315] sm:$0xf]
        %v3317 = vld [vmem:[%s3315 + $0x4] sm:$0xf]
        %v3318 = vld [vmem:[%s3315 + $0x8] sm:$0xf]
        %v3319 = vld [vmem:[%s3315 + $0xc] sm:$0xf]
        %v3320 = vld [vmem:[%s3315 + $0x10] sm:$0xf]
        %v3321 = vld [vmem:[%s3315 + $0x14] sm:$0xf]
        %v3322 = vld [vmem:[%s3315 + $0x18] sm:$0xf]
        %v3323 = vld [vmem:[%s3315 + $0x1c] sm:$0xf]
        %v3324 = vld [vmem:[%s3315 + $0x20] sm:$0xf]
        %v3325 = vld [vmem:[%s3315 + $0x24] sm:$0xf]
        %v3326 = vld [vmem:[%s3315 + $0x28] sm:$0xf]
        %v3327 = vld [vmem:[%s3315 + $0x2c] sm:$0xf]
        %v3328 = vld [vmem:[%s3315 + $0x30] sm:$0xf]
        %v3329 = vld [vmem:[%s3315 + $0x34] sm:$0xf]
        %v3330 = vld [vmem:[%s3315 + $0x38] sm:$0xf]
        %v3331 = vld [vmem:[%s3315 + $0x3c] sm:$0xf]
        %v3348 = vunpack.c.l.b16 %v3316
        %v3349 = vunpack.c.l.b16 %v3317
        %v3350 = vunpack.c.l.b16 %v3318
        %v3351 = vunpack.c.l.b16 %v3319
        %v3352 = vunpack.c.l.b16 %v3320
        %v3353 = vunpack.c.l.b16 %v3321
        %v3354 = vunpack.c.l.b16 %v3322
        %v3355 = vunpack.c.l.b16 %v3323
        %v3356 = vunpack.c.l.b16 %v3324
        %v3357 = vunpack.c.l.b16 %v3325
        %v3358 = vunpack.c.l.b16 %v3326
        %v3359 = vunpack.c.l.b16 %v3327
        %v3360 = vunpack.c.l.b16 %v3328
        %v3361 = vunpack.c.l.b16 %v3329
        %v3362 = vunpack.c.l.b16 %v3330
        %v3363 = vunpack.c.l.b16 %v3331
        %v3364 = vpack.c.b16 %v3349, %v3348
        %v3365 = vpack.c.b16 %v3351, %v3350
        %v3366 = vpack.c.b16 %v3353, %v3352
        %v3367 = vpack.c.b16 %v3355, %v3354
        %v3368 = vpack.c.b16 %v3357, %v3356
        %v3369 = vpack.c.b16 %v3359, %v3358
        %v3370 = vpack.c.b16 %v3361, %v3360
        %v3371 = vpack.c.b16 %v3363, %v3362
        %3380 = vmatpush.bf16.msra.mxu0 %v3371
        %3381 = vmatpush.bf16.msra.mxu0 %v3370
        %3382 = vmatpush.bf16.msra.mxu0 %v3369
        %3383 = vmatpush.bf16.msra.mxu0 %v3368
        %3384 = vmatpush.bf16.msra.mxu0 %v3367
        %3385 = vmatpush.bf16.msra.mxu0 %v3366
        %3386 = vmatpush.bf16.msra.mxu0 %v3365
        %3387 = vmatpush.bf16.msra.mxu0 %v3364
        %3388 = vmatmul.bf16.gmra.mxu0 %v3307
        %v3389 = vpop.f32.mrf.mxu0
        %v3390 = vadd.f32 0.0, %v3389
        %v3391 = vpop.f32.mrf.mxu0
        %v3392 = vadd.f32 0.0, %v3391
        %3393 = vmatmul.bf16.gmra.mxu0 %v3308
        %v3394 = vpop.f32.mrf.mxu0
        %v3395 = vadd.f32 0.0, %v3394
        %v3396 = vpop.f32.mrf.mxu0
        %v3397 = vadd.f32 0.0, %v3396
        %3398 = vmatmul.bf16.gmra.mxu0 %v3309
        %v3399 = vpop.f32.mrf.mxu0
        %v3400 = vadd.f32 0.0, %v3399
        %v3401 = vpop.f32.mrf.mxu0
        %v3402 = vadd.f32 0.0, %v3401
        %3403 = vmatmul.bf16.gmra.mxu0 %v3310
        %v3404 = vpop.f32.mrf.mxu0
        %v3405 = vadd.f32 0.0, %v3404
        %v3406 = vpop.f32.mrf.mxu0
        %v3407 = vadd.f32 0.0, %v3406
        %3408 = vmatmul.bf16.gmra.mxu0 %v3311
        %v3409 = vpop.f32.mrf.mxu0
        %v3410 = vadd.f32 0.0, %v3409
        %v3411 = vpop.f32.mrf.mxu0
        %v3412 = vadd.f32 0.0, %v3411
        %3413 = vmatmul.bf16.gmra.mxu0 %v3312
        %v3414 = vpop.f32.mrf.mxu0
        %v3415 = vadd.f32 0.0, %v3414
        %v3416 = vpop.f32.mrf.mxu0
        %v3417 = vadd.f32 0.0, %v3416
        %3418 = vmatmul.bf16.gmra.mxu0 %v3313
        %v3419 = vpop.f32.mrf.mxu0
        %v3420 = vadd.f32 0.0, %v3419
        %v3421 = vpop.f32.mrf.mxu0
        %v3422 = vadd.f32 0.0, %v3421
        %3423 = vmatmul.bf16.gmra.mxu0 %v3314
        %v3424 = vpop.f32.mrf.mxu0
        %v3425 = vadd.f32 0.0, %v3424
        %v3426 = vpop.f32.mrf.mxu0
        %v3427 = vadd.f32 0.0, %v3426
        %3428 = vdwg.mxu0
        %v3429 = vadd.f32 %v3275, %v3390
        %v3430 = vadd.f32 %v3276, %v3392
        %v3431 = vadd.f32 %v3277, %v3395
        %v3432 = vadd.f32 %v3278, %v3397
        %v3433 = vadd.f32 %v3279, %v3400
        %v3434 = vadd.f32 %v3280, %v3402
        %v3435 = vadd.f32 %v3281, %v3405
        %v3436 = vadd.f32 %v3282, %v3407
        %v3437 = vadd.f32 %v3283, %v3410
        %v3438 = vadd.f32 %v3284, %v3412
        %v3439 = vadd.f32 %v3285, %v3415
        %v3440 = vadd.f32 %v3286, %v3417
        %v3441 = vadd.f32 %v3287, %v3420
        %v3442 = vadd.f32 %v3288, %v3422
        %v3443 = vadd.f32 %v3289, %v3425
        %v3444 = vadd.f32 %v3290, %v3427
        %v3445 = vmul.f32 %v3135, %v1620
        %v3446 = vmul.f32 %v3134, %v1625
        %v3447 = vmul.f32 %v3133, %v1630
        %v3448 = vmul.f32 %v3132, %v1635
        %v3449 = vmul.f32 %v3131, %v1640
        %v3450 = vmul.f32 %v3130, %v1645
        %v3451 = vmul.f32 %v3129, %v1650
        %v3452 = vmul.f32 %v3128, %v1655
        %v3453 = vmul.f32 %v3127, %v1660
        %v3454 = vmul.f32 %v3126, %v1665
        %v3455 = vmul.f32 %v3125, %v1670
        %v3456 = vmul.f32 %v3124, %v1675
        %v3457 = vmul.f32 %v3123, %v1680
        %v3458 = vmul.f32 %v3122, %v1685
        %v3459 = vmul.f32 %v3121, %v1690
        %v3460 = vmul.f32 %v3136, %v1695
        %v3461 = vpack.c.bf16 %v3446, %v3445
        %v3462 = vpack.c.bf16 %v3448, %v3447
        %v3463 = vpack.c.bf16 %v3450, %v3449
        %v3464 = vpack.c.bf16 %v3452, %v3451
        %v3465 = vpack.c.bf16 %v3454, %v3453
        %v3466 = vpack.c.bf16 %v3456, %v3455
        %v3467 = vpack.c.bf16 %v3458, %v3457
        %v3468 = vpack.c.bf16 %v3460, %v3459
        %s3469 = scalar_lea.vmem [#allocation10], 320
        %v3470 = vld [vmem:[%s3469] sm:$0xf]
        %v3471 = vld [vmem:[%s3469 + $0x4] sm:$0xf]
        %v3472 = vld [vmem:[%s3469 + $0x8] sm:$0xf]
        %v3473 = vld [vmem:[%s3469 + $0xc] sm:$0xf]
        %v3474 = vld [vmem:[%s3469 + $0x10] sm:$0xf]
        %v3475 = vld [vmem:[%s3469 + $0x14] sm:$0xf]
        %v3476 = vld [vmem:[%s3469 + $0x18] sm:$0xf]
        %v3477 = vld [vmem:[%s3469 + $0x1c] sm:$0xf]
        %v3478 = vld [vmem:[%s3469 + $0x20] sm:$0xf]
        %v3479 = vld [vmem:[%s3469 + $0x24] sm:$0xf]
        %v3480 = vld [vmem:[%s3469 + $0x28] sm:$0xf]
        %v3481 = vld [vmem:[%s3469 + $0x2c] sm:$0xf]
        %v3482 = vld [vmem:[%s3469 + $0x30] sm:$0xf]
        %v3483 = vld [vmem:[%s3469 + $0x34] sm:$0xf]
        %v3484 = vld [vmem:[%s3469 + $0x38] sm:$0xf]
        %v3485 = vld [vmem:[%s3469 + $0x3c] sm:$0xf]
        %v3502 = vunpack.c.l.b16 %v3470
        %v3503 = vunpack.c.l.b16 %v3471
        %v3504 = vunpack.c.l.b16 %v3472
        %v3505 = vunpack.c.l.b16 %v3473
        %v3506 = vunpack.c.l.b16 %v3474
        %v3507 = vunpack.c.l.b16 %v3475
        %v3508 = vunpack.c.l.b16 %v3476
        %v3509 = vunpack.c.l.b16 %v3477
        %v3510 = vunpack.c.l.b16 %v3478
        %v3511 = vunpack.c.l.b16 %v3479
        %v3512 = vunpack.c.l.b16 %v3480
        %v3513 = vunpack.c.l.b16 %v3481
        %v3514 = vunpack.c.l.b16 %v3482
        %v3515 = vunpack.c.l.b16 %v3483
        %v3516 = vunpack.c.l.b16 %v3484
        %v3517 = vunpack.c.l.b16 %v3485
        %v3518 = vpack.c.b16 %v3503, %v3502
        %v3519 = vpack.c.b16 %v3505, %v3504
        %v3520 = vpack.c.b16 %v3507, %v3506
        %v3521 = vpack.c.b16 %v3509, %v3508
        %v3522 = vpack.c.b16 %v3511, %v3510
        %v3523 = vpack.c.b16 %v3513, %v3512
        %v3524 = vpack.c.b16 %v3515, %v3514
        %v3525 = vpack.c.b16 %v3517, %v3516
        %3534 = vmatpush.bf16.msra.mxu0 %v3525
        %3535 = vmatpush.bf16.msra.mxu0 %v3524
        %3536 = vmatpush.bf16.msra.mxu0 %v3523
        %3537 = vmatpush.bf16.msra.mxu0 %v3522
        %3538 = vmatpush.bf16.msra.mxu0 %v3521
        %3539 = vmatpush.bf16.msra.mxu0 %v3520
        %3540 = vmatpush.bf16.msra.mxu0 %v3519
        %3541 = vmatpush.bf16.msra.mxu0 %v3518
        %3542 = vmatmul.bf16.gmra.mxu0 %v3461
        %v3543 = vpop.f32.mrf.mxu0
        %v3544 = vadd.f32 0.0, %v3543
        %v3545 = vpop.f32.mrf.mxu0
        %v3546 = vadd.f32 0.0, %v3545
        %3547 = vmatmul.bf16.gmra.mxu0 %v3462
        %v3548 = vpop.f32.mrf.mxu0
        %v3549 = vadd.f32 0.0, %v3548
        %v3550 = vpop.f32.mrf.mxu0
        %v3551 = vadd.f32 0.0, %v3550
        %3552 = vmatmul.bf16.gmra.mxu0 %v3463
        %v3553 = vpop.f32.mrf.mxu0
        %v3554 = vadd.f32 0.0, %v3553
        %v3555 = vpop.f32.mrf.mxu0
        %v3556 = vadd.f32 0.0, %v3555
        %3557 = vmatmul.bf16.gmra.mxu0 %v3464
        %v3558 = vpop.f32.mrf.mxu0
        %v3559 = vadd.f32 0.0, %v3558
        %v3560 = vpop.f32.mrf.mxu0
        %v3561 = vadd.f32 0.0, %v3560
        %3562 = vmatmul.bf16.gmra.mxu0 %v3465
        %v3563 = vpop.f32.mrf.mxu0
        %v3564 = vadd.f32 0.0, %v3563
        %v3565 = vpop.f32.mrf.mxu0
        %v3566 = vadd.f32 0.0, %v3565
        %3567 = vmatmul.bf16.gmra.mxu0 %v3466
        %v3568 = vpop.f32.mrf.mxu0
        %v3569 = vadd.f32 0.0, %v3568
        %v3570 = vpop.f32.mrf.mxu0
        %v3571 = vadd.f32 0.0, %v3570
        %3572 = vmatmul.bf16.gmra.mxu0 %v3467
        %v3573 = vpop.f32.mrf.mxu0
        %v3574 = vadd.f32 0.0, %v3573
        %v3575 = vpop.f32.mrf.mxu0
        %v3576 = vadd.f32 0.0, %v3575
        %3577 = vmatmul.bf16.gmra.mxu0 %v3468
        %v3578 = vpop.f32.mrf.mxu0
        %v3579 = vadd.f32 0.0, %v3578
        %v3580 = vpop.f32.mrf.mxu0
        %v3581 = vadd.f32 0.0, %v3580
        %3582 = vdwg.mxu0
        %v3583 = vadd.f32 %v3429, %v3544
        %v3584 = vadd.f32 %v3430, %v3546
        %v3585 = vadd.f32 %v3431, %v3549
        %v3586 = vadd.f32 %v3432, %v3551
        %v3587 = vadd.f32 %v3433, %v3554
        %v3588 = vadd.f32 %v3434, %v3556
        %v3589 = vadd.f32 %v3435, %v3559
        %v3590 = vadd.f32 %v3436, %v3561
        %v3591 = vadd.f32 %v3437, %v3564
        %v3592 = vadd.f32 %v3438, %v3566
        %v3593 = vadd.f32 %v3439, %v3569
        %v3594 = vadd.f32 %v3440, %v3571
        %v3595 = vadd.f32 %v3441, %v3574
        %v3596 = vadd.f32 %v3442, %v3576
        %v3597 = vadd.f32 %v3443, %v3579
        %v3598 = vadd.f32 %v3444, %v3581
        %v3599 = vmul.f32 %v2715, %v1871
        %v3600 = vmul.f32 %v2714, %v1876
        %v3601 = vmul.f32 %v2713, %v1881
        %v3602 = vmul.f32 %v2712, %v1886
        %v3603 = vmul.f32 %v2711, %v1891
        %v3604 = vmul.f32 %v2710, %v1896
        %v3605 = vmul.f32 %v2709, %v1901
        %v3606 = vmul.f32 %v2708, %v1906
        %v3607 = vmul.f32 %v2707, %v1911
        %v3608 = vmul.f32 %v2706, %v1916
        %v3609 = vmul.f32 %v2705, %v1921
        %v3610 = vmul.f32 %v2704, %v1926
        %v3611 = vmul.f32 %v2703, %v1931
        %v3612 = vmul.f32 %v2702, %v1936
        %v3613 = vmul.f32 %v2701, %v1941
        %v3614 = vmul.f32 %v2716, %v1946
        %v3615 = vpack.c.bf16 %v3600, %v3599
        %v3616 = vpack.c.bf16 %v3602, %v3601
        %v3617 = vpack.c.bf16 %v3604, %v3603
        %v3618 = vpack.c.bf16 %v3606, %v3605
        %v3619 = vpack.c.bf16 %v3608, %v3607
        %v3620 = vpack.c.bf16 %v3610, %v3609
        %v3621 = vpack.c.bf16 %v3612, %v3611
        %v3622 = vpack.c.bf16 %v3614, %v3613
        %s3623 = scalar_lea.vmem [#allocation10], 384
        %v3624 = vld [vmem:[%s3623] sm:$0xf]
        %v3625 = vld [vmem:[%s3623 + $0x4] sm:$0xf]
        %v3626 = vld [vmem:[%s3623 + $0x8] sm:$0xf]
        %v3627 = vld [vmem:[%s3623 + $0xc] sm:$0xf]
        %v3628 = vld [vmem:[%s3623 + $0x10] sm:$0xf]
        %v3629 = vld [vmem:[%s3623 + $0x14] sm:$0xf]
        %v3630 = vld [vmem:[%s3623 + $0x18] sm:$0xf]
        %v3631 = vld [vmem:[%s3623 + $0x1c] sm:$0xf]
        %v3632 = vld [vmem:[%s3623 + $0x20] sm:$0xf]
        %v3633 = vld [vmem:[%s3623 + $0x24] sm:$0xf]
        %v3634 = vld [vmem:[%s3623 + $0x28] sm:$0xf]
        %v3635 = vld [vmem:[%s3623 + $0x2c] sm:$0xf]
        %v3636 = vld [vmem:[%s3623 + $0x30] sm:$0xf]
        %v3637 = vld [vmem:[%s3623 + $0x34] sm:$0xf]
        %v3638 = vld [vmem:[%s3623 + $0x38] sm:$0xf]
        %v3639 = vld [vmem:[%s3623 + $0x3c] sm:$0xf]
        %v3656 = vunpack.c.l.b16 %v3624
        %v3657 = vunpack.c.l.b16 %v3625
        %v3658 = vunpack.c.l.b16 %v3626
        %v3659 = vunpack.c.l.b16 %v3627
        %v3660 = vunpack.c.l.b16 %v3628
        %v3661 = vunpack.c.l.b16 %v3629
        %v3662 = vunpack.c.l.b16 %v3630
        %v3663 = vunpack.c.l.b16 %v3631
        %v3664 = vunpack.c.l.b16 %v3632
        %v3665 = vunpack.c.l.b16 %v3633
        %v3666 = vunpack.c.l.b16 %v3634
        %v3667 = vunpack.c.l.b16 %v3635
        %v3668 = vunpack.c.l.b16 %v3636
        %v3669 = vunpack.c.l.b16 %v3637
        %v3670 = vunpack.c.l.b16 %v3638
        %v3671 = vunpack.c.l.b16 %v3639
        %v3672 = vpack.c.b16 %v3657, %v3656
        %v3673 = vpack.c.b16 %v3659, %v3658
        %v3674 = vpack.c.b16 %v3661, %v3660
        %v3675 = vpack.c.b16 %v3663, %v3662
        %v3676 = vpack.c.b16 %v3665, %v3664
        %v3677 = vpack.c.b16 %v3667, %v3666
        %v3678 = vpack.c.b16 %v3669, %v3668
        %v3679 = vpack.c.b16 %v3671, %v3670
        %3688 = vmatpush.bf16.msra.mxu0 %v3679
        %3689 = vmatpush.bf16.msra.mxu0 %v3678
        %3690 = vmatpush.bf16.msra.mxu0 %v3677
        %3691 = vmatpush.bf16.msra.mxu0 %v3676
        %3692 = vmatpush.bf16.msra.mxu0 %v3675
        %3693 = vmatpush.bf16.msra.mxu0 %v3674
        %3694 = vmatpush.bf16.msra.mxu0 %v3673
        %3695 = vmatpush.bf16.msra.mxu0 %v3672
        %3696 = vmatmul.bf16.gmra.mxu0 %v3615
        %v3697 = vpop.f32.mrf.mxu0
        %v3698 = vadd.f32 0.0, %v3697
        %v3699 = vpop.f32.mrf.mxu0
        %v3700 = vadd.f32 0.0, %v3699
        %3701 = vmatmul.bf16.gmra.mxu0 %v3616
        %v3702 = vpop.f32.mrf.mxu0
        %v3703 = vadd.f32 0.0, %v3702
        %v3704 = vpop.f32.mrf.mxu0
        %v3705 = vadd.f32 0.0, %v3704
        %3706 = vmatmul.bf16.gmra.mxu0 %v3617
        %v3707 = vpop.f32.mrf.mxu0
        %v3708 = vadd.f32 0.0, %v3707
        %v3709 = vpop.f32.mrf.mxu0
        %v3710 = vadd.f32 0.0, %v3709
        %3711 = vmatmul.bf16.gmra.mxu0 %v3618
        %v3712 = vpop.f32.mrf.mxu0
        %v3713 = vadd.f32 0.0, %v3712
        %v3714 = vpop.f32.mrf.mxu0
        %v3715 = vadd.f32 0.0, %v3714
        %3716 = vmatmul.bf16.gmra.mxu0 %v3619
        %v3717 = vpop.f32.mrf.mxu0
        %v3718 = vadd.f32 0.0, %v3717
        %v3719 = vpop.f32.mrf.mxu0
        %v3720 = vadd.f32 0.0, %v3719
        %3721 = vmatmul.bf16.gmra.mxu0 %v3620
        %v3722 = vpop.f32.mrf.mxu0
        %v3723 = vadd.f32 0.0, %v3722
        %v3724 = vpop.f32.mrf.mxu0
        %v3725 = vadd.f32 0.0, %v3724
        %3726 = vmatmul.bf16.gmra.mxu0 %v3621
        %v3727 = vpop.f32.mrf.mxu0
        %v3728 = vadd.f32 0.0, %v3727
        %v3729 = vpop.f32.mrf.mxu0
        %v3730 = vadd.f32 0.0, %v3729
        %3731 = vmatmul.bf16.gmra.mxu0 %v3622
        %v3732 = vpop.f32.mrf.mxu0
        %v3733 = vadd.f32 0.0, %v3732
        %v3734 = vpop.f32.mrf.mxu0
        %v3735 = vadd.f32 0.0, %v3734
        %3736 = vdwg.mxu0
        %v3737 = vadd.f32 %v3583, %v3698
        %v3738 = vadd.f32 %v3584, %v3700
        %v3739 = vadd.f32 %v3585, %v3703
        %v3740 = vadd.f32 %v3586, %v3705
        %v3741 = vadd.f32 %v3587, %v3708
        %v3742 = vadd.f32 %v3588, %v3710
        %v3743 = vadd.f32 %v3589, %v3713
        %v3744 = vadd.f32 %v3590, %v3715
        %v3745 = vadd.f32 %v3591, %v3718
        %v3746 = vadd.f32 %v3592, %v3720
        %v3747 = vadd.f32 %v3593, %v3723
        %v3748 = vadd.f32 %v3594, %v3725
        %v3749 = vadd.f32 %v3595, %v3728
        %v3750 = vadd.f32 %v3596, %v3730
        %v3751 = vadd.f32 %v3597, %v3733
        %v3752 = vadd.f32 %v3598, %v3735
        %v3753 = vmul.f32 %v2645, %v2122
        %v3754 = vmul.f32 %v2646, %v2127
        %v3755 = vmul.f32 %v2647, %v2132
        %v3756 = vmul.f32 %v2648, %v2137
        %v3757 = vmul.f32 %v2649, %v2142
        %v3758 = vmul.f32 %v2650, %v2147
        %v3759 = vmul.f32 %v2651, %v2152
        %v3760 = vmul.f32 %v2652, %v2157
        %v3761 = vmul.f32 %v2653, %v2162
        %v3762 = vmul.f32 %v2654, %v2167
        %v3763 = vmul.f32 %v2655, %v2172
        %v3764 = vmul.f32 %v2656, %v2177
        %v3765 = vmul.f32 %v2657, %v2182
        %v3766 = vmul.f32 %v2658, %v2187
        %v3767 = vmul.f32 %v2659, %v2192
        %v3768 = vmul.f32 %v2644, %v2197
        %v3769 = vpack.c.bf16 %v3754, %v3753
        %v3770 = vpack.c.bf16 %v3756, %v3755
        %v3771 = vpack.c.bf16 %v3758, %v3757
        %v3772 = vpack.c.bf16 %v3760, %v3759
        %v3773 = vpack.c.bf16 %v3762, %v3761
        %v3774 = vpack.c.bf16 %v3764, %v3763
        %v3775 = vpack.c.bf16 %v3766, %v3765
        %v3776 = vpack.c.bf16 %v3768, %v3767
        %s3777 = scalar_lea.vmem [#allocation10], 448
        %v3778 = vld [vmem:[%s3777] sm:$0xf]
        %v3779 = vld [vmem:[%s3777 + $0x4] sm:$0xf]
        %v3780 = vld [vmem:[%s3777 + $0x8] sm:$0xf]
        %v3781 = vld [vmem:[%s3777 + $0xc] sm:$0xf]
        %v3782 = vld [vmem:[%s3777 + $0x10] sm:$0xf]
        %v3783 = vld [vmem:[%s3777 + $0x14] sm:$0xf]
        %v3784 = vld [vmem:[%s3777 + $0x18] sm:$0xf]
        %v3785 = vld [vmem:[%s3777 + $0x1c] sm:$0xf]
        %v3786 = vld [vmem:[%s3777 + $0x20] sm:$0xf]
        %v3787 = vld [vmem:[%s3777 + $0x24] sm:$0xf]
        %v3788 = vld [vmem:[%s3777 + $0x28] sm:$0xf]
        %v3789 = vld [vmem:[%s3777 + $0x2c] sm:$0xf]
        %v3790 = vld [vmem:[%s3777 + $0x30] sm:$0xf]
        %v3791 = vld [vmem:[%s3777 + $0x34] sm:$0xf]
        %v3792 = vld [vmem:[%s3777 + $0x38] sm:$0xf]
        %v3793 = vld [vmem:[%s3777 + $0x3c] sm:$0xf]
        %v3810 = vunpack.c.l.b16 %v3778
        %v3811 = vunpack.c.l.b16 %v3779
        %v3812 = vunpack.c.l.b16 %v3780
        %v3813 = vunpack.c.l.b16 %v3781
        %v3814 = vunpack.c.l.b16 %v3782
        %v3815 = vunpack.c.l.b16 %v3783
        %v3816 = vunpack.c.l.b16 %v3784
        %v3817 = vunpack.c.l.b16 %v3785
        %v3818 = vunpack.c.l.b16 %v3786
        %v3819 = vunpack.c.l.b16 %v3787
        %v3820 = vunpack.c.l.b16 %v3788
        %v3821 = vunpack.c.l.b16 %v3789
        %v3822 = vunpack.c.l.b16 %v3790
        %v3823 = vunpack.c.l.b16 %v3791
        %v3824 = vunpack.c.l.b16 %v3792
        %v3825 = vunpack.c.l.b16 %v3793
        %v3826 = vpack.c.b16 %v3811, %v3810
        %v3827 = vpack.c.b16 %v3813, %v3812
        %v3828 = vpack.c.b16 %v3815, %v3814
        %v3829 = vpack.c.b16 %v3817, %v3816
        %v3830 = vpack.c.b16 %v3819, %v3818
        %v3831 = vpack.c.b16 %v3821, %v3820
        %v3832 = vpack.c.b16 %v3823, %v3822
        %v3833 = vpack.c.b16 %v3825, %v3824
        %3842 = vmatpush.bf16.msra.mxu0 %v3833
        %3843 = vmatpush.bf16.msra.mxu0 %v3832
        %3844 = vmatpush.bf16.msra.mxu0 %v3831
        %3845 = vmatpush.bf16.msra.mxu0 %v3830
        %3846 = vmatpush.bf16.msra.mxu0 %v3829
        %3847 = vmatpush.bf16.msra.mxu0 %v3828
        %3848 = vmatpush.bf16.msra.mxu0 %v3827
        %3849 = vmatpush.bf16.msra.mxu0 %v3826
        %3850 = vmatmul.bf16.gmra.mxu0 %v3769
        %v3851 = vpop.f32.mrf.mxu0
        %v3852 = vadd.f32 0.0, %v3851
        %v3853 = vpop.f32.mrf.mxu0
        %v3854 = vadd.f32 0.0, %v3853
        %3855 = vmatmul.bf16.gmra.mxu0 %v3770
        %v3856 = vpop.f32.mrf.mxu0
        %v3857 = vadd.f32 0.0, %v3856
        %v3858 = vpop.f32.mrf.mxu0
        %v3859 = vadd.f32 0.0, %v3858
        %3860 = vmatmul.bf16.gmra.mxu0 %v3771
        %v3861 = vpop.f32.mrf.mxu0
        %v3862 = vadd.f32 0.0, %v3861
        %v3863 = vpop.f32.mrf.mxu0
        %v3864 = vadd.f32 0.0, %v3863
        %3865 = vmatmul.bf16.gmra.mxu0 %v3772
        %v3866 = vpop.f32.mrf.mxu0
        %v3867 = vadd.f32 0.0, %v3866
        %v3868 = vpop.f32.mrf.mxu0
        %v3869 = vadd.f32 0.0, %v3868
        %3870 = vmatmul.bf16.gmra.mxu0 %v3773
        %v3871 = vpop.f32.mrf.mxu0
        %v3872 = vadd.f32 0.0, %v3871
        %v3873 = vpop.f32.mrf.mxu0
        %v3874 = vadd.f32 0.0, %v3873
        %3875 = vmatmul.bf16.gmra.mxu0 %v3774
        %v3876 = vpop.f32.mrf.mxu0
        %v3877 = vadd.f32 0.0, %v3876
        %v3878 = vpop.f32.mrf.mxu0
        %v3879 = vadd.f32 0.0, %v3878
        %3880 = vmatmul.bf16.gmra.mxu0 %v3775
        %v3881 = vpop.f32.mrf.mxu0
        %v3882 = vadd.f32 0.0, %v3881
        %v3883 = vpop.f32.mrf.mxu0
        %v3884 = vadd.f32 0.0, %v3883
        %3885 = vmatmul.bf16.gmra.mxu0 %v3776
        %v3886 = vpop.f32.mrf.mxu0
        %v3887 = vadd.f32 0.0, %v3886
        %v3888 = vpop.f32.mrf.mxu0
        %v3889 = vadd.f32 0.0, %v3888
        %3890 = vdwg.mxu0
        %v3891 = vadd.f32 %v3737, %v3852
        %v3892 = vadd.f32 %v3738, %v3854
        %v3893 = vadd.f32 %v3739, %v3857
        %v3894 = vadd.f32 %v3740, %v3859
        %v3895 = vadd.f32 %v3741, %v3862
        %v3896 = vadd.f32 %v3742, %v3864
        %v3897 = vadd.f32 %v3743, %v3867
        %v3898 = vadd.f32 %v3744, %v3869
        %v3899 = vadd.f32 %v3745, %v3872
        %v3900 = vadd.f32 %v3746, %v3874
        %v3901 = vadd.f32 %v3747, %v3877
        %v3902 = vadd.f32 %v3748, %v3879
        %v3903 = vadd.f32 %v3749, %v3882
        %v3904 = vadd.f32 %v3750, %v3884
        %v3905 = vadd.f32 %v3751, %v3887
        %v3906 = vadd.f32 %v3752, %v3889
        %v3907 = vmul.f32 %v3134, %v2373
        %v3908 = vmul.f32 %v3133, %v2378
        %v3909 = vmul.f32 %v3132, %v2383
        %v3910 = vmul.f32 %v3131, %v2388
        %v3911 = vmul.f32 %v3130, %v2393
        %v3912 = vmul.f32 %v3129, %v2398
        %v3913 = vmul.f32 %v3128, %v2403
        %v3914 = vmul.f32 %v3127, %v2408
        %v3915 = vmul.f32 %v3126, %v2413
        %v3916 = vmul.f32 %v3125, %v2418
        %v3917 = vmul.f32 %v3124, %v2423
        %v3918 = vmul.f32 %v3123, %v2428
        %v3919 = vmul.f32 %v3122, %v2433
        %v3920 = vmul.f32 %v3121, %v2438
        %v3921 = vmul.f32 %v3136, %v2443
        %v3922 = vmul.f32 %v3135, %v2448
        %v3923 = vpack.c.bf16 %v3908, %v3907
        %v3924 = vpack.c.bf16 %v3910, %v3909
        %v3925 = vpack.c.bf16 %v3912, %v3911
        %v3926 = vpack.c.bf16 %v3914, %v3913
        %v3927 = vpack.c.bf16 %v3916, %v3915
        %v3928 = vpack.c.bf16 %v3918, %v3917
        %v3929 = vpack.c.bf16 %v3920, %v3919
        %v3930 = vpack.c.bf16 %v3922, %v3921
        %s3931 = scalar_lea.vmem [#allocation10], 512
        %v3932 = vld [vmem:[%s3931] sm:$0xf]
        %v3933 = vld [vmem:[%s3931 + $0x4] sm:$0xf]
        %v3934 = vld [vmem:[%s3931 + $0x8] sm:$0xf]
        %v3935 = vld [vmem:[%s3931 + $0xc] sm:$0xf]
        %v3936 = vld [vmem:[%s3931 + $0x10] sm:$0xf]
        %v3937 = vld [vmem:[%s3931 + $0x14] sm:$0xf]
        %v3938 = vld [vmem:[%s3931 + $0x18] sm:$0xf]
        %v3939 = vld [vmem:[%s3931 + $0x1c] sm:$0xf]
        %v3940 = vld [vmem:[%s3931 + $0x20] sm:$0xf]
        %v3941 = vld [vmem:[%s3931 + $0x24] sm:$0xf]
        %v3942 = vld [vmem:[%s3931 + $0x28] sm:$0xf]
        %v3943 = vld [vmem:[%s3931 + $0x2c] sm:$0xf]
        %v3944 = vld [vmem:[%s3931 + $0x30] sm:$0xf]
        %v3945 = vld [vmem:[%s3931 + $0x34] sm:$0xf]
        %v3946 = vld [vmem:[%s3931 + $0x38] sm:$0xf]
        %v3947 = vld [vmem:[%s3931 + $0x3c] sm:$0xf]
        %v3964 = vunpack.c.l.b16 %v3932
        %v3965 = vunpack.c.l.b16 %v3933
        %v3966 = vunpack.c.l.b16 %v3934
        %v3967 = vunpack.c.l.b16 %v3935
        %v3968 = vunpack.c.l.b16 %v3936
        %v3969 = vunpack.c.l.b16 %v3937
        %v3970 = vunpack.c.l.b16 %v3938
        %v3971 = vunpack.c.l.b16 %v3939
        %v3972 = vunpack.c.l.b16 %v3940
        %v3973 = vunpack.c.l.b16 %v3941
        %v3974 = vunpack.c.l.b16 %v3942
        %v3975 = vunpack.c.l.b16 %v3943
        %v3976 = vunpack.c.l.b16 %v3944
        %v3977 = vunpack.c.l.b16 %v3945
        %v3978 = vunpack.c.l.b16 %v3946
        %v3979 = vunpack.c.l.b16 %v3947
        %v3980 = vpack.c.b16 %v3965, %v3964
        %v3981 = vpack.c.b16 %v3967, %v3966
        %v3982 = vpack.c.b16 %v3969, %v3968
        %v3983 = vpack.c.b16 %v3971, %v3970
        %v3984 = vpack.c.b16 %v3973, %v3972
        %v3985 = vpack.c.b16 %v3975, %v3974
        %v3986 = vpack.c.b16 %v3977, %v3976
        %v3987 = vpack.c.b16 %v3979, %v3978
        %3996 = vmatpush.bf16.msra.mxu0 %v3987
        %3997 = vmatpush.bf16.msra.mxu0 %v3986
        %3998 = vmatpush.bf16.msra.mxu0 %v3985
        %3999 = vmatpush.bf16.msra.mxu0 %v3984
        %4000 = vmatpush.bf16.msra.mxu0 %v3983
        %4001 = vmatpush.bf16.msra.mxu0 %v3982
        %4002 = vmatpush.bf16.msra.mxu0 %v3981
        %4003 = vmatpush.bf16.msra.mxu0 %v3980
        %4004 = vmatmul.bf16.gmra.mxu0 %v3923
        %v4005 = vpop.f32.mrf.mxu0
        %v4006 = vadd.f32 0.0, %v4005
        %v4007 = vpop.f32.mrf.mxu0
        %v4008 = vadd.f32 0.0, %v4007
        %4009 = vmatmul.bf16.gmra.mxu0 %v3924
        %v4010 = vpop.f32.mrf.mxu0
        %v4011 = vadd.f32 0.0, %v4010
        %v4012 = vpop.f32.mrf.mxu0
        %v4013 = vadd.f32 0.0, %v4012
        %4014 = vmatmul.bf16.gmra.mxu0 %v3925
        %v4015 = vpop.f32.mrf.mxu0
        %v4016 = vadd.f32 0.0, %v4015
        %v4017 = vpop.f32.mrf.mxu0
        %v4018 = vadd.f32 0.0, %v4017
        %4019 = vmatmul.bf16.gmra.mxu0 %v3926
        %v4020 = vpop.f32.mrf.mxu0
        %v4021 = vadd.f32 0.0, %v4020
        %v4022 = vpop.f32.mrf.mxu0
        %v4023 = vadd.f32 0.0, %v4022
        %4024 = vmatmul.bf16.gmra.mxu0 %v3927
        %v4025 = vpop.f32.mrf.mxu0
        %v4026 = vadd.f32 0.0, %v4025
        %v4027 = vpop.f32.mrf.mxu0
        %v4028 = vadd.f32 0.0, %v4027
        %4029 = vmatmul.bf16.gmra.mxu0 %v3928
        %v4030 = vpop.f32.mrf.mxu0
        %v4031 = vadd.f32 0.0, %v4030
        %v4032 = vpop.f32.mrf.mxu0
        %v4033 = vadd.f32 0.0, %v4032
        %4034 = vmatmul.bf16.gmra.mxu0 %v3929
        %v4035 = vpop.f32.mrf.mxu0
        %v4036 = vadd.f32 0.0, %v4035
        %v4037 = vpop.f32.mrf.mxu0
        %v4038 = vadd.f32 0.0, %v4037
        %4039 = vmatmul.bf16.gmra.mxu0 %v3930
        %v4040 = vpop.f32.mrf.mxu0
        %v4041 = vadd.f32 0.0, %v4040
        %v4042 = vpop.f32.mrf.mxu0
        %v4043 = vadd.f32 0.0, %v4042
        %4044 = vdwg.mxu0
        %v4045 = vadd.f32 %v3891, %v4006
        %v4046 = vadd.f32 %v3892, %v4008
        %v4047 = vadd.f32 %v3893, %v4011
        %v4048 = vadd.f32 %v3894, %v4013
        %v4049 = vadd.f32 %v3895, %v4016
        %v4050 = vadd.f32 %v3896, %v4018
        %v4051 = vadd.f32 %v3897, %v4021
        %v4052 = vadd.f32 %v3898, %v4023
        %v4053 = vadd.f32 %v3899, %v4026
        %v4054 = vadd.f32 %v3900, %v4028
        %v4055 = vadd.f32 %v3901, %v4031
        %v4056 = vadd.f32 %v3902, %v4033
        %v4057 = vadd.f32 %v3903, %v4036
        %v4058 = vadd.f32 %v3904, %v4038
        %v4059 = vadd.f32 %v3905, %v4041
        %v4060 = vadd.f32 %v3906, %v4043
        %v4061 = vld [vmem:[%s6] sm:$0x1]
        %v4063 = vperm.slane %v4061, 0
        %v4065 = vmul.f32 %v4045, %v4063
        %v4066 = vmul.f32 %v4046, %v4063
        %v4067 = vmul.f32 %v4047, %v4063
        %v4068 = vmul.f32 %v4048, %v4063
        %v4069 = vmul.f32 %v4049, %v4063
        %v4070 = vmul.f32 %v4050, %v4063
        %v4071 = vmul.f32 %v4051, %v4063
        %v4072 = vmul.f32 %v4052, %v4063
        %v4073 = vmul.f32 %v4053, %v4063
        %v4074 = vmul.f32 %v4054, %v4063
        %v4075 = vmul.f32 %v4055, %v4063
        %v4076 = vmul.f32 %v4056, %v4063
        %v4077 = vmul.f32 %v4057, %v4063
        %v4078 = vmul.f32 %v4058, %v4063
        %v4079 = vmul.f32 %v4059, %v4063
        %v4080 = vmul.f32 %v4060, %v4063
        %v4081 = vld [vmem:[#allocation11] sm:$0x1]
        %v4083 = vperm.slane %v4081, 0
        %v4085 = vadd.f32 %v4065, %v4083
        %v4086 = vadd.f32 %v4066, %v4083
        %v4087 = vadd.f32 %v4067, %v4083
        %v4088 = vadd.f32 %v4068, %v4083
        %v4089 = vadd.f32 %v4069, %v4083
        %v4090 = vadd.f32 %v4070, %v4083
        %v4091 = vadd.f32 %v4071, %v4083
        %v4092 = vadd.f32 %v4072, %v4083
        %v4093 = vadd.f32 %v4073, %v4083
        %v4094 = vadd.f32 %v4074, %v4083
        %v4095 = vadd.f32 %v4075, %v4083
        %v4096 = vadd.f32 %v4076, %v4083
        %v4097 = vadd.f32 %v4077, %v4083
        %v4098 = vadd.f32 %v4078, %v4083
        %v4099 = vadd.f32 %v4079, %v4083
        %v4100 = vadd.f32 %v4080, %v4083
        %v4101 = vadd.f32 %v4085, %v408
        %v4102 = vadd.f32 %v4086, %v409
        %v4103 = vadd.f32 %v4087, %v410
        %v4104 = vadd.f32 %v4088, %v411
        %v4105 = vadd.f32 %v4089, %v412
        %v4106 = vadd.f32 %v4090, %v413
        %v4107 = vadd.f32 %v4091, %v414
        %v4108 = vadd.f32 %v4092, %v415
        %v4109 = vadd.f32 %v4093, %v416
        %v4110 = vadd.f32 %v4094, %v417
        %v4111 = vadd.f32 %v4095, %v418
        %v4112 = vadd.f32 %v4096, %v419
        %v4113 = vadd.f32 %v4097, %v420
        %v4114 = vadd.f32 %v4098, %v421
        %v4115 = vadd.f32 %v4099, %v422
        %v4116 = vadd.f32 %v4100, %v423
        %v4117 = vmax.f32 %v4101, 0.0
        %v4118 = vmax.f32 %v4102, 0.0
        %v4119 = vmax.f32 %v4103, 0.0
        %v4120 = vmax.f32 %v4104, 0.0
        %v4121 = vmax.f32 %v4105, 0.0
        %v4122 = vmax.f32 %v4106, 0.0
        %v4123 = vmax.f32 %v4107, 0.0
        %v4124 = vmax.f32 %v4108, 0.0
        %v4125 = vmax.f32 %v4109, 0.0
        %v4126 = vmax.f32 %v4110, 0.0
        %v4127 = vmax.f32 %v4111, 0.0
        %v4128 = vmax.f32 %v4112, 0.0
        %v4129 = vmax.f32 %v4113, 0.0
        %v4130 = vmax.f32 %v4114, 0.0
        %v4131 = vmax.f32 %v4115, 0.0
        %v4132 = vmax.f32 %v4116, 0.0
        %4133 = vst [vmem:[%s405] sm:$0xff] %v4117
        %4134 = vst [vmem:[%s405 + $0x8] sm:$0xff] %v4118
        %4135 = vst [vmem:[%s405 + $0x10] sm:$0xff] %v4119
        %4136 = vst [vmem:[%s405 + $0x18] sm:$0xff] %v4120
        %4137 = vst [vmem:[%s405 + $0x20] sm:$0xff] %v4121
        %4138 = vst [vmem:[%s405 + $0x28] sm:$0xff] %v4122
        %4139 = vst [vmem:[%s405 + $0x30] sm:$0xff] %v4123
        %4140 = vst [vmem:[%s405 + $0x38] sm:$0xff] %v4124
        %4141 = vst [vmem:[%s405 + $0x40] sm:$0xff] %v4125
        %4142 = vst [vmem:[%s405 + $0x48] sm:$0xff] %v4126
        %4143 = vst [vmem:[%s405 + $0x50] sm:$0xff] %v4127
        %4144 = vst [vmem:[%s405 + $0x58] sm:$0xff] %v4128
        %4145 = vst [vmem:[%s405 + $0x60] sm:$0xff] %v4129
        %4146 = vst [vmem:[%s405 + $0x68] sm:$0xff] %v4130
        %4147 = vst [vmem:[%s405 + $0x70] sm:$0xff] %v4131
        %4148 = vst [vmem:[%s405 + $0x78] sm:$0xff] %v4132
        %s4149 = sand.u32 %s209, 1
        %s4150 = scalar_lea.sflag [#allocation4], %s4149
        %s4151 = sand.u32 %s209, 1
        %s4152 = smul.addr %s4151, 128
        %s4153 = scalar_lea.vmem [#allocation13], %s4152
        // Predicated region
        $region77: #{resblock_forward.1} parent=51 // pred_check
          %p4154 = pneg %p219
        $region78: #{resblock_forward.1} parent=51 // pred_check_branch
          %4156 = sbr.rel (%p4154) target = $region80
        $region79: #{resblock_forward.1} parent=51 // pred_region
          %s4157 = smul.u32 2, %s28
          %4159 = vsyncadd %s4150, 0
          %s4160 = smul.addr %s4157, 8
          %s4161 = smul.addr %s4160, 8
          %s4162 = scalar_lea.hbm %s8, %s4161
          %s4163 = sshll.u32 %s4153, 4
          %s4164 = int_to_ptr.vmem [resolvable:$true] %s4163
          %s4165 = sshll.u32 %s4162, 4
          %s4166 = int_to_ptr.hbm [resolvable:$true] %s4165
          %4171 = dma.vmem_to_hbm [thread:$0]  %s4164, 2048, %s4166, %s4150, 128, 128, 8
        $region80: #{resblock_forward.1} parent=51 // pred_fallthru
          _
      $region52: #{resblock_forward.1} parent=5 // pred_fallthru
        _
      %p4172 = scmp.le.s32.totalorder 2, %s23
      // Predicated region
      $region81: #{resblock_forward.1} parent=5 // pred_check
        %p4173 = pneg %p4172
      $region82: #{resblock_forward.1} parent=5 // pred_check_branch
        %4175 = sbr.rel (%p4173) target = $region84
      $region83: #{resblock_forward.1} parent=5 // pred_region
        %s4176 = ssub.s32 %s23, 2
        // Predicated region
        $region85: #{resblock_forward.1} parent=83 // pred_check
          %p4177 = pneg %p225
        $region86: #{resblock_forward.1} parent=83 // pred_check_branch
          %4179 = sbr.rel (%p4177) target = $region88
        $region87: #{resblock_forward.1} parent=83 // pred_region
          %s4180 = sand.u32 %s210, 1
          %s4181 = scalar_lea.sflag [#allocation4], %s4180
          %s4182 = sand.u32 %s210, 1
          %s4183 = smul.addr %s4182, 128
          %s4184 = scalar_lea.vmem [#allocation13], %s4183
          %4186 = dma.done %s4181, 2048
        $region88: #{resblock_forward.1} parent=83 // pred_fallthru
          _
      $region84: #{resblock_forward.1} parent=5 // pred_fallthru
        _
    $region6: #{resblock_forward.1} parent=1 // loop_footer
      %s27 = sadd.s32 1, %s23
    $region7: #{resblock_forward.1} parent=1 // loop_footer_branch
      %22 = sbr.rel target = $region3
    $region8: #{resblock_forward.1} parent=1 // loop_exit
      _
    %4187 = vsyncpa [#allocation3], 1
    %s4188 = scalar_lea.sflag [#allocation3], 1
    %4189 = vsyncpa %s4188, 1
    %4190 = vsyncpa [#allocation6], 1
    %4191 = vsyncpa [#allocation9], 1
    %4192 = vsyncpa [#allocation12], 1
    %4193 = vsyncpa [#allocation4], 1
    %s4194 = scalar_lea.sflag [#allocation4], 1
    %4195 = vsyncpa %s4194, 1

</llo_original>
